<compile_context>
chip_gen: v6e
topology: v6e:2x2x1
jax: 0.10.0
libtpu: 0.0.40
codegen_flags: <defaults>
</compile_context>

<pallas_src>
import functools
import math

import jax
import jax.numpy as jnp
from jax.experimental import pallas as pl
from jax.experimental.pallas import tpu as pltpu


def _layernorm(x, gamma, beta, eps=1e-5):
    mean = jnp.mean(x, axis=-1, keepdims=True)
    var = jnp.mean((x - mean) ** 2, axis=-1, keepdims=True)
    return (x - mean) * jax.lax.rsqrt(var + eps) * gamma + beta


def _encoder_layer_kernel(x_ref, mask_ref,
                          wqkv_ref, bqkv_ref, wo_ref,
                          bo_ref, g1_ref, be1_ref,
                          w1_ref, b1_ref, w2_ref, b2_ref,
                          g2_ref, be2_ref,
                          o_ref,
                          acc_ref, xbf_ref, ablk_ref,
                          *, kh, hd):
    """grid = (batch_tiles, n_head_blocks); the head-block axis accumulates into acc_ref."""
    hk = pl.program_id(1)
    nhb = pl.num_programs(1)
    bt, s, d = x_ref.shape
    m = bt * s
    khd = kh * hd

    @pl.when(hk == 0)
    def _init():
        acc_ref[...] = jnp.zeros_like(acc_ref)
        # hoist the f32 -> bf16 activation cast (reused by every head block)
        xbf_ref[...] = x_ref[...].reshape(m, d).astype(jnp.bfloat16)

    # fused q|k|v projection for this head block: one (m, d) @ (d, 3*kh*hd) matmul
    qkv = jnp.dot(xbf_ref[...], wqkv_ref[...],
                  preferred_element_type=jnp.float32) + bqkv_ref[...]

    attend = mask_ref[...] != 0          # (bt, s, s) bool, computed once per step
    scale = 1.0 / math.sqrt(hd)

    for j in range(kh):                  # static, short loop over the packed heads
        q = (qkv[:, j * hd:(j + 1) * hd] * scale).reshape(bt, s, hd).astype(jnp.bfloat16)
        k = qkv[:, khd + j * hd:khd + (j + 1) * hd].reshape(bt, s, hd).astype(jnp.bfloat16)
        v = qkv[:, 2 * khd + j * hd:2 * khd + (j + 1) * hd].reshape(bt, s, hd).astype(jnp.bfloat16)

        scores = jnp.einsum('bqd,bkd->bqk', q, k, preferred_element_type=jnp.float32)
        scores = jnp.where(attend, scores, -1e9)      # fused mask select, no bias tensor
        smax = jnp.max(scores, axis=-1, keepdims=True)
        p = jnp.exp(scores - smax)
        p = p * pl.reciprocal(jnp.sum(p, axis=-1, keepdims=True), approx=True)

        attn_j = jnp.einsum('bqk,bkd->bqd', p.astype(jnp.bfloat16), v,
                            preferred_element_type=jnp.float32)        # (bt, s, hd)
        ablk_ref[:, j * hd:(j + 1) * hd] = attn_j.reshape(m, hd).astype(jnp.bfloat16)

    # single accumulated matmul per head block (K = kh*hd, columns ordered as
    # the PyTorch concat-over-heads), block-matrix identity == concat(heads) @ Wo
    acc_ref[...] += jnp.dot(ablk_ref[...], wo_ref[...],
                            preferred_element_type=jnp.float32)

    # ---- epilogue once per batch tile: residual+LN, FFN, residual+LN ----
    @pl.when(hk == nhb - 1)
    def _finalize():
        x2d = x_ref[...].reshape(m, d)                 # f32 residual
        attn = acc_ref[...] + bo_ref[...]
        # TODO(synk): dropout1/dropout2 are identity (eval mode); kan=True FFN not implemented.
        x1 = _layernorm(attn + x2d, g1_ref[...], be1_ref[...])

        h1 = jnp.dot(x1.astype(jnp.bfloat16), w1_ref[...],
                     preferred_element_type=jnp.float32) + b1_ref[...]
        h1 = jnp.maximum(h1, 0.0)
        ffn = jnp.dot(h1.astype(jnp.bfloat16), w2_ref[...],
                      preferred_element_type=jnp.float32) + b2_ref[...]

        x2 = _layernorm(ffn + x1, g2_ref[...], be2_ref[...])
        o_ref[...] = x2.reshape(bt, s, d).astype(o_ref.dtype)


# ----------------------------------------------------------------------------
# host-side helpers (packing is intended to run ONCE at parameter-load time)
# ----------------------------------------------------------------------------

def _pick_heads_per_block(n_head, hd, target=256):
    """Largest divisor of n_head with kh*hd <= max(target, hd)."""
    best = 1
    for kh in range(1, n_head + 1):
        if n_head % kh == 0 and kh * hd <= max(target, hd):
            best = kh
    return best


def _pick_block_b(batch, seq, target_rows):
    best = 1
    for bt in range(1, batch + 1):
        if batch % bt == 0 and bt * seq <= target_rows:
            best = bt
    if best == batch and batch >= 2:
        # keep >= 2 steps on the (megacore-parallel) batch axis when possible
        for bt in range(best - 1, 0, -1):
            if batch % bt == 0:
                best = bt
                break
    return best


def _vmem_estimate(block_b, S, D, F, khd):
    """Bytes live in VMEM for one grid step (conservative)."""
    m = block_b * S
    byt = 0
    byt += 2 * (m * D * 4) * 2                         # x in + out tiles (double buffered, f32)
    byt += 2 * (block_b * S * S)                       # int8 mask tiles
    byt += 2 * (D * 3 * khd * 2 + 3 * khd * 4 + khd * D * 2)   # per-head-block qkv / wo
    byt += 2 * (D * F * 2 + F * D * 2)                 # FFN weights (worst case: double buffered)
    byt += 2 * (8 * D + 2 * F) * 4                     # biases / LN params
    byt += m * D * 4 + m * D * 2 + m * khd * 2         # acc (f32) + xbf + attn-block scratches
    byt += m * F * 6 + 2 * m * D * 4                   # epilogue FFN intermediates
    byt += 3 * block_b * S * S * 4                     # attention score temporaries
    return byt


def pack_params(params, n_head, *, heads_per_block=None):
    """Repack weights once (bf16 MXU operands, per-head-block qkv/wo layout)."""
    D = params['wq'].shape[0]
    assert D % n_head == 0
    hd = D // n_head
    F = params['w1'].shape[1]
    kh = heads_per_block or _pick_heads_per_block(n_head, hd)
    assert n_head % kh == 0
    nhb = n_head // kh
    khd = kh * hd
    f32, bf16 = jnp.float32, jnp.bfloat16

    def blk_cols(w):                     # (D, D) -> (nhb, D, khd)
        return w.reshape(D, nhb, khd).transpose(1, 0, 2)

    def blk_bias(b):                     # (1, D) -> (nhb, 1, khd)
        return b.reshape(nhb, 1, khd)

    wqkv = jnp.concatenate([blk_cols(params['wq']),
                            blk_cols(params['wk']),
                            blk_cols(params['wv'])], axis=-1).astype(bf16)   # (nhb, D, 3*khd)
    bqkv = jnp.concatenate([blk_bias(params['bq']),
                            blk_bias(params['bk']),
                            blk_bias(params['bv'])], axis=-1).astype(f32)    # (nhb, 1, 3*khd)
    wo = params['wo'].reshape(nhb, khd, D).astype(bf16)                      # (nhb, khd, D)

    packed = dict(
        wqkv=wqkv, bqkv=bqkv, wo=wo,
        w1=params['w1'].astype(bf16), w2=params['w2'].astype(bf16),
        bo=params['bo'].astype(f32), b1=params['b1'].astype(f32), b2=params['b2'].astype(f32),
        g1=params['g1'].astype(f32), be1=params['be1'].astype(f32),
        g2=params['g2'].astype(f32), be2=params['be2'].astype(f32),
    )
    meta = dict(n_head=n_head, kh=kh, hd=hd, d_model=D, ffn_hidden=F)
    return packed, meta


def encoder_layer_packed(x, mask_i8, packed, meta, *, block_b=None):
    B, S, D = x.shape
    kh, hd, F = meta['kh'], meta['hd'], meta['ffn_hidden']
    nhb = meta['n_head'] // kh
    khd = kh * hd

    # generation-aware VMEM budget (never request more than the chip has)
    try:
        vmem_cap = int(pltpu.get_tpu_info().vmem_capacity_bytes)
    except Exception:
        vmem_cap = 64 * 1024 * 1024
    budget = max(vmem_cap - (8 << 20), 16 << 20)       # headroom for internal scratch

    if block_b is None:
        target_rows = 512 if vmem_cap >= (100 << 20) else 256
        block_b = _pick_block_b(B, S, target_rows)
        while block_b > 1 and _vmem_estimate(block_b, S, D, F, khd) > 0.75 * budget:
            block_b = max(d for d in range(1, block_b) if B % d == 0)
    assert B % block_b == 0
    nb = B // block_b

    est = _vmem_estimate(block_b, S, D, F, khd)
    vmem_limit = int(min(budget, max(2 * est, 32 << 20)))

    x_spec = pl.BlockSpec((block_b, S, D), lambda i, h: (i, 0, 0))
    mask_spec = pl.BlockSpec((block_b, S, S), lambda i, h: (i, 0, 0))
    out_spec = pl.BlockSpec((block_b, S, D), lambda i, h: (i, 0, 0))

    def per_block(a):                    # head-block indexed operands
        return pl.BlockSpec((None,) + a.shape[1:], lambda i, h: (h, 0, 0))

    def build_specs(use_buffered):
        def invariant(a):
            n = a.ndim
            if use_buffered:
                # grid-invariant: single-buffered, fetched once (saves VMEM)
                return pl.BlockSpec(a.shape, lambda i, h, n=n: (0,) * n,
                                    pipeline_mode=pl.Buffered(1))
            return pl.BlockSpec(a.shape, lambda i, h, n=n: (0,) * n)
        return [
            x_spec, mask_spec,
            per_block(packed['wqkv']), per_block(packed['bqkv']), per_block(packed['wo']),
            invariant(packed['bo']), invariant(packed['g1']), invariant(packed['be1']),
            invariant(packed['w1']), invariant(packed['b1']),
            invariant(packed['w2']), invariant(packed['b2']),
            invariant(packed['g2']), invariant(packed['be2']),
        ]

    kernel_fn = functools.partial(_encoder_layer_kernel, kh=kh, hd=hd)
    args = (x, mask_i8,
            packed['wqkv'], packed['bqkv'], packed['wo'],
            packed['bo'], packed['g1'], packed['be1'],
            packed['w1'], packed['b1'], packed['w2'], packed['b2'],
            packed['g2'], packed['be2'])

    def run(use_buffered):
        call = pl.pallas_call(
            kernel_fn,
            out_shape=jax.ShapeDtypeStruct((B, S, D), x.dtype),
            grid_spec=pltpu.PrefetchScalarGridSpec(
                num_scalar_prefetch=0,
                grid=(nb, nhb),                       # head-block (reduction) axis last
                in_specs=build_specs(use_buffered),
                out_specs=out_spec,
                scratch_shapes=[
                    pltpu.VMEM((block_b * S, D), jnp.float32),     # attn-out accumulator
                    pltpu.VMEM((block_b * S, D), jnp.bfloat16),    # hoisted bf16 activations
                    pltpu.VMEM((block_b * S, khd), jnp.bfloat16),  # per-block head concat
                ],
            ),
            compiler_params=pltpu.CompilerParams(
                dimension_semantics=("parallel", "arbitrary"),
                vmem_limit_bytes=vmem_limit,
            ),
        )
        return call(*args)

    try:
        return run(True)
    except Exception:
        # fallback if this runtime rejects pipeline_mode=pl.Buffered(1)
        return run(False)


def encoder_layer(x, mask, params, n_head, *, block_b=None):
    """Convenience wrapper. For a real model call pack_params() once and reuse."""
    packed, meta = pack_params(params, n_head)
    mask_i8 = (mask > 0).astype(jnp.int8)
    return encoder_layer_packed(x, mask_i8, packed, meta, block_b=block_b)


def encoder_layer_reference(x, mask, params, n_head):
    """Pure-JAX f32 reference mirroring the PyTorch module (eval mode)."""
    B, S, D = x.shape
    hd = D // n_head

    def lin(v, w, b):
        return jnp.einsum('bsd,de->bse', v, w) + b

    def split(t):
        return t.reshape(B, S, n_head, hd).transpose(0, 2, 1, 3)

    q, k, v = (split(lin(x, params[w], params[b]))
               for w, b in (('wq', 'bq'), ('wk', 'bk'), ('wv', 'bv')))
    s = jnp.einsum('bhqd,bhkd->bhqk', q, k) / math.sqrt(hd)
    s = jnp.where(mask[:, None] > 0, s, -1e9)
    p = jax.nn.softmax(s, axis=-1)
    o = jnp.einsum('bhqk,bhkd->bhqd', p, v)
    o = o.transpose(0, 2, 1, 3).reshape(B, S, D)
    attn = jnp.einsum('bsd,de->bse', o, params['wo']) + params['bo']

    def ln(t, g, b):
        mu = t.mean(-1, keepdims=True)
        var = ((t - mu) ** 2).mean(-1, keepdims=True)
        return (t - mu) * jax.lax.rsqrt(var + 1e-5) * g + b

    x1 = ln(attn + x, params['g1'], params['be1'])
    h1 = jnp.maximum(jnp.einsum('bsd,de->bse', x1, params['w1']) + params['b1'], 0.0)
    f = jnp.einsum('bsd,de->bse', h1, params['w2']) + params['b2']
    return ln(f + x1, params['g2'], params['be2'])


if __name__ == "__main__":
    B, S, D, H, FFN = 4, 8, 32, 4, 64

    key = jax.random.PRNGKey(0)
    keys = jax.random.split(key, 16)

    def lin(k, din, dout):
        return jax.random.normal(k, (din, dout), jnp.float32) / math.sqrt(din)

    def vec(k, dim, scale=0.1):
        return scale * jax.random.normal(k, (1, dim), jnp.float32)

    params = {
        'wq': lin(keys[0], D, D), 'bq': vec(keys[1], D),
        'wk': lin(keys[2], D, D), 'bk': vec(keys[3], D),
        'wv': lin(keys[4], D, D), 'bv': vec(keys[5], D),
        'wo': lin(keys[6], D, D), 'bo': vec(keys[7], D),
        'g1': jnp.ones((1, D), jnp.float32), 'be1': jnp.zeros((1, D), jnp.float32),
        'w1': lin(keys[8], D, FFN), 'b1': vec(keys[9], FFN),
        'w2': lin(keys[10], FFN, D), 'b2': vec(keys[11], D),
        'g2': jnp.ones((1, D), jnp.float32), 'be2': jnp.zeros((1, D), jnp.float32),
    }

    x = jax.random.normal(keys[12], (B, S, D), jnp.float32)
    # example mask: causal (1.0 = attend, 0.0 = masked)
    mask = jnp.tril(jnp.ones((S, S), jnp.float32))[None].repeat(B, axis=0)

    # pack once (as a model would at parameter-load time), then run the kernel
    packed, meta = pack_params(params, n_head=H)
    mask_i8 = (mask > 0).astype(jnp.int8)
    out = encoder_layer_packed(x, mask_i8, packed, meta)
    jax.block_until_ready(out)

    assert out.shape == (B, S, D)
    assert bool(jnp.all(jnp.isfinite(out)))

    ref = encoder_layer_reference(x, mask, params, H)
    err = float(jnp.max(jnp.abs(out - ref)))
    assert err < 0.25, f"max abs error vs f32 reference too large: {err}"

    print("KERNEL_OK")
</pallas_src>

<mosaic_0001>
module attributes {stable_mosaic.version = 11 : i64} {
  func.func @_encoder_layer_kernel(%arg0: i32, %arg1: i32, %arg2: memref<2x8x32xf32, #tpu.memory_space<vmem>>, %arg3: memref<2x8x8xi8, #tpu.memory_space<vmem>>, %arg4: memref<1x32x96xbf16, #tpu.memory_space<vmem>>, %arg5: memref<1x1x96xf32, #tpu.memory_space<vmem>>, %arg6: memref<1x32x32xbf16, #tpu.memory_space<vmem>>, %arg7: memref<1x32xf32, #tpu.memory_space<vmem>>, %arg8: memref<1x32xf32, #tpu.memory_space<vmem>>, %arg9: memref<1x32xf32, #tpu.memory_space<vmem>>, %arg10: memref<32x64xbf16, #tpu.memory_space<vmem>>, %arg11: memref<1x64xf32, #tpu.memory_space<vmem>>, %arg12: memref<64x32xbf16, #tpu.memory_space<vmem>>, %arg13: memref<1x32xf32, #tpu.memory_space<vmem>>, %arg14: memref<1x32xf32, #tpu.memory_space<vmem>>, %arg15: memref<1x32xf32, #tpu.memory_space<vmem>>, %arg16: memref<2x8x32xf32, #tpu.memory_space<vmem>>, %arg17: memref<16x32xf32, #tpu.memory_space<vmem>>, %arg18: memref<16x32xbf16, #tpu.memory_space<vmem>>, %arg19: memref<16x32xbf16, #tpu.memory_space<vmem>>) attributes {dimension_semantics = [#tpu.dimension_semantics<parallel>, #tpu.dimension_semantics<arbitrary>], iteration_bounds = array<i64: 2, 1>, scalar_prefetch = 0 : i64, scratch_operands = 3 : i64, tpu.core_type = #tpu.core_type<tc>, window_params = [{transform_indices = @transform_0, window_bounds = array<i64: 2, 8, 32>}, {transform_indices = @transform_1, window_bounds = array<i64: 2, 8, 8>}, {transform_indices = @transform_2, window_bounds = array<i64: 1, 32, 96>}, {transform_indices = @transform_3, window_bounds = array<i64: 1, 1, 96>}, {transform_indices = @transform_4, window_bounds = array<i64: 1, 32, 32>}, {pipeline_mode = #tpu.pipeline_mode<synchronous>, transform_indices = @transform_5, window_bounds = array<i64: 1, 32>}, {pipeline_mode = #tpu.pipeline_mode<synchronous>, transform_indices = @transform_6, window_bounds = array<i64: 1, 32>}, {pipeline_mode = #tpu.pipeline_mode<synchronous>, transform_indices = @transform_7, window_bounds = array<i64: 1, 32>}, {pipeline_mode = #tpu.pipeline_mode<synchronous>, transform_indices = @transform_8, window_bounds = array<i64: 32, 64>}, {pipeline_mode = #tpu.pipeline_mode<synchronous>, transform_indices = @transform_9, window_bounds = array<i64: 1, 64>}, {pipeline_mode = #tpu.pipeline_mode<synchronous>, transform_indices = @transform_10, window_bounds = array<i64: 64, 32>}, {pipeline_mode = #tpu.pipeline_mode<synchronous>, transform_indices = @transform_11, window_bounds = array<i64: 1, 32>}, {pipeline_mode = #tpu.pipeline_mode<synchronous>, transform_indices = @transform_12, window_bounds = array<i64: 1, 32>}, {pipeline_mode = #tpu.pipeline_mode<synchronous>, transform_indices = @transform_13, window_bounds = array<i64: 1, 32>}, {transform_indices = @transform_14, window_bounds = array<i64: 2, 8, 32>}]} {
    %c0_i32 = arith.constant 0 : i32
    %0 = arith.cmpi eq, %arg1, %c0_i32 : i32
    %1 = arith.extui %0 : i1 to i32
    %c0_i32_0 = arith.constant 0 : i32
    %2 = arith.cmpi ne, %1, %c0_i32_0 : i32
    scf.if %2 {
      %cst_52 = arith.constant 0.000000e+00 : f32
      %140 = vector.broadcast %cst_52 : f32 to vector<16x32xf32>
      %c0_53 = arith.constant 0 : index
      %c0_54 = arith.constant 0 : index
      %141 = vector.load %arg17[%c0_53, %c0_54] : memref<16x32xf32, #tpu.memory_space<vmem>>, vector<16x32xf32>
      tpu.vector_store %arg17[%c0_53, %c0_54], %140 {strides = array<i32>} : memref<16x32xf32, #tpu.memory_space<vmem>>, vector<16x32xf32>,
      %c0_55 = arith.constant 0 : index
      %c0_56 = arith.constant 0 : index
      %c0_57 = arith.constant 0 : index
      %142 = vector.load %arg2[%c0_55, %c0_56, %c0_57] : memref<2x8x32xf32, #tpu.memory_space<vmem>>, vector<2x8x32xf32>
      %143 = vector.shape_cast %142 : vector<2x8x32xf32> to vector<16x32xf32>
      %144 = arith.truncf %143 : vector<16x32xf32> to vector<16x32xbf16>
      %c0_58 = arith.constant 0 : index
      %c0_59 = arith.constant 0 : index
      %145 = vector.load %arg18[%c0_58, %c0_59] : memref<16x32xbf16, #tpu.memory_space<vmem>>, vector<16x32xbf16>
      tpu.vector_store %arg18[%c0_58, %c0_59], %144 {strides = array<i32>} : memref<16x32xbf16, #tpu.memory_space<vmem>>, vector<16x32xbf16>,
    } else {
    }
    %c0 = arith.constant 0 : index
    %c0_1 = arith.constant 0 : index
    %3 = vector.load %arg18[%c0, %c0_1] : memref<16x32xbf16, #tpu.memory_space<vmem>>, vector<16x32xbf16>
    %c0_2 = arith.constant 0 : index
    %c0_3 = arith.constant 0 : index
    %c0_4 = arith.constant 0 : index
    %4 = vector.load %arg4[%c0_2, %c0_3, %c0_4] : memref<1x32x96xbf16, #tpu.memory_space<vmem>>, vector<1x32x96xbf16>
    %5 = vector.shape_cast %4 : vector<1x32x96xbf16> to vector<32x96xbf16>
    %cst = arith.constant dense<0.000000e+00> : vector<16x96xf32>
    %6 = tpu.matmul %3, %5, %cst {dimension_numbers = #tpu.dot_dimension_numbers<[1], [0], [0], [1], [0, 0, 1, 1], [], []>} : vector<16x32xbf16>, vector<32x96xbf16>, vector<16x96xf32> -> vector<16x96xf32>
    %c0_5 = arith.constant 0 : index
    %c0_6 = arith.constant 0 : index
    %c0_7 = arith.constant 0 : index
    %7 = vector.load %arg5[%c0_5, %c0_6, %c0_7] : memref<1x1x96xf32, #tpu.memory_space<vmem>>, vector<1x1x96xf32>
    %8 = vector.shape_cast %7 : vector<1x1x96xf32> to vector<1x96xf32>
    %9 = vector.broadcast %8 : vector<1x96xf32> to vector<16x96xf32>
    %10 = arith.addf %6, %9 : vector<16x96xf32>
    %c0_8 = arith.constant 0 : index
    %c0_9 = arith.constant 0 : index
    %c0_10 = arith.constant 0 : index
    %11 = vector.load %arg3[%c0_8, %c0_9, %c0_10] : memref<2x8x8xi8, #tpu.memory_space<vmem>>, vector<2x8x8xi8>
    %c0_i8 = arith.constant 0 : i8
    %12 = vector.broadcast %c0_i8 : i8 to vector<2x8x8xi8>
    %13 = arith.cmpi ne, %11, %12 : vector<2x8x8xi8>
    %14 = vector.extract_strided_slice %10 {offsets = [0, 0], sizes = [16, 8], strides = [1, 1]} : vector<16x96xf32> to vector<16x8xf32>
    %cst_11 = arith.constant 0.353553385 : f32
    %15 = vector.broadcast %cst_11 : f32 to vector<16x8xf32>
    %16 = arith.mulf %14, %15 : vector<16x8xf32>
    %17 = vector.shape_cast %16 : vector<16x8xf32> to vector<2x8x8xf32>
    %18 = arith.truncf %17 : vector<2x8x8xf32> to vector<2x8x8xbf16>
    %19 = vector.extract_strided_slice %10 {offsets = [0, 32], sizes = [16, 8], strides = [1, 1]} : vector<16x96xf32> to vector<16x8xf32>
    %20 = vector.shape_cast %19 : vector<16x8xf32> to vector<2x8x8xf32>
    %21 = arith.truncf %20 : vector<2x8x8xf32> to vector<2x8x8xbf16>
    %22 = vector.extract_strided_slice %10 {offsets = [0, 64], sizes = [16, 8], strides = [1, 1]} : vector<16x96xf32> to vector<16x8xf32>
    %23 = vector.shape_cast %22 : vector<16x8xf32> to vector<2x8x8xf32>
    %24 = arith.truncf %23 : vector<2x8x8xf32> to vector<2x8x8xbf16>
    "tpu.trace_start"() <{level = 10 : i32, message = "bqd,bkd->bqk"}> : () -> ()
    %cst_12 = arith.constant dense<0.000000e+00> : vector<2x8x8xf32>
    %25 = tpu.matmul %18, %21, %cst_12 {dimension_numbers = #tpu.dot_dimension_numbers<[2], [2], [1], [1], [0, 0, 0, 1, 1, 1], [0], [0]>} : vector<2x8x8xbf16>, vector<2x8x8xbf16>, vector<2x8x8xf32> -> vector<2x8x8xf32>
    %cst_13 = arith.constant -1.000000e+09 : f32
    "tpu.trace_stop"() : () -> ()
    %26 = vector.broadcast %cst_13 : f32 to vector<2x8x8xf32>
    %27 = arith.select %13, %25, %26 : vector<2x8x8xi1>, vector<2x8x8xf32>
    %cst_14 = arith.constant dense<0xFF800000> : vector<2x8xf32>
    %28 = vector.multi_reduction <maximumf>, %27, %cst_14 [2] : vector<2x8x8xf32> to vector<2x8xf32>
    %29 = vector.shape_cast %28 : vector<2x8xf32> to vector<2x8x1xf32>
    %30 = vector.broadcast %29 : vector<2x8x1xf32> to vector<2x8x8xf32>
    %31 = arith.subf %27, %30 : vector<2x8x8xf32>
    %32 = math.exp %31 : vector<2x8x8xf32>
    %cst_15 = arith.constant dense<0.000000e+00> : vector<2x8xf32>
    %33 = vector.multi_reduction <add>, %32, %cst_15 [2] : vector<2x8x8xf32> to vector<2x8xf32>
    %34 = vector.shape_cast %33 : vector<2x8xf32> to vector<2x8x1xf32>
    %35 = tpu.reciprocal %34 {approx = true} : vector<2x8x1xf32> -> vector<2x8x1xf32>
    %36 = vector.broadcast %35 : vector<2x8x1xf32> to vector<2x8x8xf32>
    %37 = arith.mulf %32, %36 : vector<2x8x8xf32>
    %38 = arith.truncf %37 : vector<2x8x8xf32> to vector<2x8x8xbf16>
    "tpu.trace_start"() <{level = 10 : i32, message = "bqk,bkd->bqd"}> : () -> ()
    %cst_16 = arith.constant dense<0.000000e+00> : vector<2x8x8xf32>
    %39 = tpu.matmul %38, %24, %cst_16 {dimension_numbers = #tpu.dot_dimension_numbers<[2], [1], [1], [2], [0, 0, 0, 1, 1, 2], [0], [0]>} : vector<2x8x8xbf16>, vector<2x8x8xbf16>, vector<2x8x8xf32> -> vector<2x8x8xf32>
    "tpu.trace_stop"() : () -> ()
    %40 = vector.shape_cast %39 : vector<2x8x8xf32> to vector<16x8xf32>
    %41 = arith.truncf %40 : vector<16x8xf32> to vector<16x8xbf16>
    %c0_17 = arith.constant 0 : index
    %c0_18 = arith.constant 0 : index
    %42 = vector.load %arg19[%c0_17, %c0_18] : memref<16x32xbf16, #tpu.memory_space<vmem>>, vector<16x8xbf16>
    tpu.vector_store %arg19[%c0_17, %c0_18], %41 {strides = array<i32>} : memref<16x32xbf16, #tpu.memory_space<vmem>>, vector<16x8xbf16>,
    %43 = vector.extract_strided_slice %10 {offsets = [0, 8], sizes = [16, 8], strides = [1, 1]} : vector<16x96xf32> to vector<16x8xf32>
    %cst_19 = arith.constant 0.353553385 : f32
    %44 = vector.broadcast %cst_19 : f32 to vector<16x8xf32>
    %45 = arith.mulf %43, %44 : vector<16x8xf32>
    %46 = vector.shape_cast %45 : vector<16x8xf32> to vector<2x8x8xf32>
    %47 = arith.truncf %46 : vector<2x8x8xf32> to vector<2x8x8xbf16>
    %48 = vector.extract_strided_slice %10 {offsets = [0, 40], sizes = [16, 8], strides = [1, 1]} : vector<16x96xf32> to vector<16x8xf32>
    %49 = vector.shape_cast %48 : vector<16x8xf32> to vector<2x8x8xf32>
    %50 = arith.truncf %49 : vector<2x8x8xf32> to vector<2x8x8xbf16>
    %51 = vector.extract_strided_slice %10 {offsets = [0, 72], sizes = [16, 8], strides = [1, 1]} : vector<16x96xf32> to vector<16x8xf32>
    %52 = vector.shape_cast %51 : vector<16x8xf32> to vector<2x8x8xf32>
    %53 = arith.truncf %52 : vector<2x8x8xf32> to vector<2x8x8xbf16>
    "tpu.trace_start"() <{level = 10 : i32, message = "bqd,bkd->bqk"}> : () -> ()
    %cst_20 = arith.constant dense<0.000000e+00> : vector<2x8x8xf32>
    %54 = tpu.matmul %47, %50, %cst_20 {dimension_numbers = #tpu.dot_dimension_numbers<[2], [2], [1], [1], [0, 0, 0, 1, 1, 1], [0], [0]>} : vector<2x8x8xbf16>, vector<2x8x8xbf16>, vector<2x8x8xf32> -> vector<2x8x8xf32>
    %cst_21 = arith.constant -1.000000e+09 : f32
    "tpu.trace_stop"() : () -> ()
    %55 = vector.broadcast %cst_21 : f32 to vector<2x8x8xf32>
    %56 = arith.select %13, %54, %55 : vector<2x8x8xi1>, vector<2x8x8xf32>
    %cst_22 = arith.constant dense<0xFF800000> : vector<2x8xf32>
    %57 = vector.multi_reduction <maximumf>, %56, %cst_22 [2] : vector<2x8x8xf32> to vector<2x8xf32>
    %58 = vector.shape_cast %57 : vector<2x8xf32> to vector<2x8x1xf32>
    %59 = vector.broadcast %58 : vector<2x8x1xf32> to vector<2x8x8xf32>
    %60 = arith.subf %56, %59 : vector<2x8x8xf32>
    %61 = math.exp %60 : vector<2x8x8xf32>
    %cst_23 = arith.constant dense<0.000000e+00> : vector<2x8xf32>
    %62 = vector.multi_reduction <add>, %61, %cst_23 [2] : vector<2x8x8xf32> to vector<2x8xf32>
    %63 = vector.shape_cast %62 : vector<2x8xf32> to vector<2x8x1xf32>
    %64 = tpu.reciprocal %63 {approx = true} : vector<2x8x1xf32> -> vector<2x8x1xf32>
    %65 = vector.broadcast %64 : vector<2x8x1xf32> to vector<2x8x8xf32>
    %66 = arith.mulf %61, %65 : vector<2x8x8xf32>
    %67 = arith.truncf %66 : vector<2x8x8xf32> to vector<2x8x8xbf16>
    "tpu.trace_start"() <{level = 10 : i32, message = "bqk,bkd->bqd"}> : () -> ()
    %cst_24 = arith.constant dense<0.000000e+00> : vector<2x8x8xf32>
    %68 = tpu.matmul %67, %53, %cst_24 {dimension_numbers = #tpu.dot_dimension_numbers<[2], [1], [1], [2], [0, 0, 0, 1, 1, 2], [0], [0]>} : vector<2x8x8xbf16>, vector<2x8x8xbf16>, vector<2x8x8xf32> -> vector<2x8x8xf32>
    "tpu.trace_stop"() : () -> ()
    %69 = vector.shape_cast %68 : vector<2x8x8xf32> to vector<16x8xf32>
    %70 = arith.truncf %69 : vector<16x8xf32> to vector<16x8xbf16>
    %c0_25 = arith.constant 0 : index
    %c8 = arith.constant 8 : index
    %71 = vector.load %arg19[%c0_25, %c8] : memref<16x32xbf16, #tpu.memory_space<vmem>>, vector<16x8xbf16>
    tpu.vector_store %arg19[%c0_25, %c8], %70 {strides = array<i32>} : memref<16x32xbf16, #tpu.memory_space<vmem>>, vector<16x8xbf16>,
    %72 = vector.extract_strided_slice %10 {offsets = [0, 16], sizes = [16, 8], strides = [1, 1]} : vector<16x96xf32> to vector<16x8xf32>
    %cst_26 = arith.constant 0.353553385 : f32
    %73 = vector.broadcast %cst_26 : f32 to vector<16x8xf32>
    %74 = arith.mulf %72, %73 : vector<16x8xf32>
    %75 = vector.shape_cast %74 : vector<16x8xf32> to vector<2x8x8xf32>
    %76 = arith.truncf %75 : vector<2x8x8xf32> to vector<2x8x8xbf16>
    %77 = vector.extract_strided_slice %10 {offsets = [0, 48], sizes = [16, 8], strides = [1, 1]} : vector<16x96xf32> to vector<16x8xf32>
    %78 = vector.shape_cast %77 : vector<16x8xf32> to vector<2x8x8xf32>
    %79 = arith.truncf %78 : vector<2x8x8xf32> to vector<2x8x8xbf16>
    %80 = vector.extract_strided_slice %10 {offsets = [0, 80], sizes = [16, 8], strides = [1, 1]} : vector<16x96xf32> to vector<16x8xf32>
    %81 = vector.shape_cast %80 : vector<16x8xf32> to vector<2x8x8xf32>
    %82 = arith.truncf %81 : vector<2x8x8xf32> to vector<2x8x8xbf16>
    "tpu.trace_start"() <{level = 10 : i32, message = "bqd,bkd->bqk"}> : () -> ()
    %cst_27 = arith.constant dense<0.000000e+00> : vector<2x8x8xf32>
    %83 = tpu.matmul %76, %79, %cst_27 {dimension_numbers = #tpu.dot_dimension_numbers<[2], [2], [1], [1], [0, 0, 0, 1, 1, 1], [0], [0]>} : vector<2x8x8xbf16>, vector<2x8x8xbf16>, vector<2x8x8xf32> -> vector<2x8x8xf32>
    %cst_28 = arith.constant -1.000000e+09 : f32
    "tpu.trace_stop"() : () -> ()
    %84 = vector.broadcast %cst_28 : f32 to vector<2x8x8xf32>
    %85 = arith.select %13, %83, %84 : vector<2x8x8xi1>, vector<2x8x8xf32>
    %cst_29 = arith.constant dense<0xFF800000> : vector<2x8xf32>
    %86 = vector.multi_reduction <maximumf>, %85, %cst_29 [2] : vector<2x8x8xf32> to vector<2x8xf32>
    %87 = vector.shape_cast %86 : vector<2x8xf32> to vector<2x8x1xf32>
    %88 = vector.broadcast %87 : vector<2x8x1xf32> to vector<2x8x8xf32>
    %89 = arith.subf %85, %88 : vector<2x8x8xf32>
    %90 = math.exp %89 : vector<2x8x8xf32>
    %cst_30 = arith.constant dense<0.000000e+00> : vector<2x8xf32>
    %91 = vector.multi_reduction <add>, %90, %cst_30 [2] : vector<2x8x8xf32> to vector<2x8xf32>
    %92 = vector.shape_cast %91 : vector<2x8xf32> to vector<2x8x1xf32>
    %93 = tpu.reciprocal %92 {approx = true} : vector<2x8x1xf32> -> vector<2x8x1xf32>
    %94 = vector.broadcast %93 : vector<2x8x1xf32> to vector<2x8x8xf32>
    %95 = arith.mulf %90, %94 : vector<2x8x8xf32>
    %96 = arith.truncf %95 : vector<2x8x8xf32> to vector<2x8x8xbf16>
    "tpu.trace_start"() <{level = 10 : i32, message = "bqk,bkd->bqd"}> : () -> ()
    %cst_31 = arith.constant dense<0.000000e+00> : vector<2x8x8xf32>
    %97 = tpu.matmul %96, %82, %cst_31 {dimension_numbers = #tpu.dot_dimension_numbers<[2], [1], [1], [2], [0, 0, 0, 1, 1, 2], [0], [0]>} : vector<2x8x8xbf16>, vector<2x8x8xbf16>, vector<2x8x8xf32> -> vector<2x8x8xf32>
    "tpu.trace_stop"() : () -> ()
    %98 = vector.shape_cast %97 : vector<2x8x8xf32> to vector<16x8xf32>
    %99 = arith.truncf %98 : vector<16x8xf32> to vector<16x8xbf16>
    %c0_32 = arith.constant 0 : index
    %c16 = arith.constant 16 : index
    %100 = vector.load %arg19[%c0_32, %c16] : memref<16x32xbf16, #tpu.memory_space<vmem>>, vector<16x8xbf16>
    tpu.vector_store %arg19[%c0_32, %c16], %99 {strides = array<i32>} : memref<16x32xbf16, #tpu.memory_space<vmem>>, vector<16x8xbf16>,
    %101 = vector.extract_strided_slice %10 {offsets = [0, 24], sizes = [16, 8], strides = [1, 1]} : vector<16x96xf32> to vector<16x8xf32>
    %cst_33 = arith.constant 0.353553385 : f32
    %102 = vector.broadcast %cst_33 : f32 to vector<16x8xf32>
    %103 = arith.mulf %101, %102 : vector<16x8xf32>
    %104 = vector.shape_cast %103 : vector<16x8xf32> to vector<2x8x8xf32>
    %105 = arith.truncf %104 : vector<2x8x8xf32> to vector<2x8x8xbf16>
    %106 = vector.extract_strided_slice %10 {offsets = [0, 56], sizes = [16, 8], strides = [1, 1]} : vector<16x96xf32> to vector<16x8xf32>
    %107 = vector.shape_cast %106 : vector<16x8xf32> to vector<2x8x8xf32>
    %108 = arith.truncf %107 : vector<2x8x8xf32> to vector<2x8x8xbf16>
    %109 = vector.extract_strided_slice %10 {offsets = [0, 88], sizes = [16, 8], strides = [1, 1]} : vector<16x96xf32> to vector<16x8xf32>
    %110 = vector.shape_cast %109 : vector<16x8xf32> to vector<2x8x8xf32>
    %111 = arith.truncf %110 : vector<2x8x8xf32> to vector<2x8x8xbf16>
    "tpu.trace_start"() <{level = 10 : i32, message = "bqd,bkd->bqk"}> : () -> ()
    %cst_34 = arith.constant dense<0.000000e+00> : vector<2x8x8xf32>
    %112 = tpu.matmul %105, %108, %cst_34 {dimension_numbers = #tpu.dot_dimension_numbers<[2], [2], [1], [1], [0, 0, 0, 1, 1, 1], [0], [0]>} : vector<2x8x8xbf16>, vector<2x8x8xbf16>, vector<2x8x8xf32> -> vector<2x8x8xf32>
    %cst_35 = arith.constant -1.000000e+09 : f32
    "tpu.trace_stop"() : () -> ()
    %113 = vector.broadcast %cst_35 : f32 to vector<2x8x8xf32>
    %114 = arith.select %13, %112, %113 : vector<2x8x8xi1>, vector<2x8x8xf32>
    %cst_36 = arith.constant dense<0xFF800000> : vector<2x8xf32>
    %115 = vector.multi_reduction <maximumf>, %114, %cst_36 [2] : vector<2x8x8xf32> to vector<2x8xf32>
    %116 = vector.shape_cast %115 : vector<2x8xf32> to vector<2x8x1xf32>
    %117 = vector.broadcast %116 : vector<2x8x1xf32> to vector<2x8x8xf32>
    %118 = arith.subf %114, %117 : vector<2x8x8xf32>
    %119 = math.exp %118 : vector<2x8x8xf32>
    %cst_37 = arith.constant dense<0.000000e+00> : vector<2x8xf32>
    %120 = vector.multi_reduction <add>, %119, %cst_37 [2] : vector<2x8x8xf32> to vector<2x8xf32>
    %121 = vector.shape_cast %120 : vector<2x8xf32> to vector<2x8x1xf32>
    %122 = tpu.reciprocal %121 {approx = true} : vector<2x8x1xf32> -> vector<2x8x1xf32>
    %123 = vector.broadcast %122 : vector<2x8x1xf32> to vector<2x8x8xf32>
    %124 = arith.mulf %119, %123 : vector<2x8x8xf32>
    %125 = arith.truncf %124 : vector<2x8x8xf32> to vector<2x8x8xbf16>
    "tpu.trace_start"() <{level = 10 : i32, message = "bqk,bkd->bqd"}> : () -> ()
    %cst_38 = arith.constant dense<0.000000e+00> : vector<2x8x8xf32>
    %126 = tpu.matmul %125, %111, %cst_38 {dimension_numbers = #tpu.dot_dimension_numbers<[2], [1], [1], [2], [0, 0, 0, 1, 1, 2], [0], [0]>} : vector<2x8x8xbf16>, vector<2x8x8xbf16>, vector<2x8x8xf32> -> vector<2x8x8xf32>
    "tpu.trace_stop"() : () -> ()
    %127 = vector.shape_cast %126 : vector<2x8x8xf32> to vector<16x8xf32>
    %128 = arith.truncf %127 : vector<16x8xf32> to vector<16x8xbf16>
    %c0_39 = arith.constant 0 : index
    %c24 = arith.constant 24 : index
    %129 = vector.load %arg19[%c0_39, %c24] : memref<16x32xbf16, #tpu.memory_space<vmem>>, vector<16x8xbf16>
    tpu.vector_store %arg19[%c0_39, %c24], %128 {strides = array<i32>} : memref<16x32xbf16, #tpu.memory_space<vmem>>, vector<16x8xbf16>,
    %c0_40 = arith.constant 0 : index
    %c0_41 = arith.constant 0 : index
    %130 = vector.load %arg17[%c0_40, %c0_41] : memref<16x32xf32, #tpu.memory_space<vmem>>, vector<16x32xf32>
    %c0_42 = arith.constant 0 : index
    %c0_43 = arith.constant 0 : index
    %131 = vector.load %arg19[%c0_42, %c0_43] : memref<16x32xbf16, #tpu.memory_space<vmem>>, vector<16x32xbf16>
    %c0_44 = arith.constant 0 : index
    %c0_45 = arith.constant 0 : index
    %c0_46 = arith.constant 0 : index
    %132 = vector.load %arg6[%c0_44, %c0_45, %c0_46] : memref<1x32x32xbf16, #tpu.memory_space<vmem>>, vector<1x32x32xbf16>
    %133 = vector.shape_cast %132 : vector<1x32x32xbf16> to vector<32x32xbf16>
    %cst_47 = arith.constant dense<0.000000e+00> : vector<16x32xf32>
    %134 = tpu.matmul %131, %133, %cst_47 {dimension_numbers = #tpu.dot_dimension_numbers<[1], [0], [0], [1], [0, 0, 1, 1], [], []>} : vector<16x32xbf16>, vector<32x32xbf16>, vector<16x32xf32> -> vector<16x32xf32>
    %135 = arith.addf %130, %134 : vector<16x32xf32>
    %c0_48 = arith.constant 0 : index
    %c0_49 = arith.constant 0 : index
    %136 = vector.load %arg17[%c0_48, %c0_49] : memref<16x32xf32, #tpu.memory_space<vmem>>, vector<16x32xf32>
    tpu.vector_store %arg17[%c0_48, %c0_49], %135 {strides = array<i32>} : memref<16x32xf32, #tpu.memory_space<vmem>>, vector<16x32xf32>,
    %c0_i32_50 = arith.constant 0 : i32
    %137 = arith.cmpi eq, %arg1, %c0_i32_50 : i32
    %138 = arith.extui %137 : i1 to i32
    %c0_i32_51 = arith.constant 0 : i32
    %139 = arith.cmpi ne, %138, %c0_i32_51 : i32
    scf.if %139 {
      %c0_52 = arith.constant 0 : index
      %c0_53 = arith.constant 0 : index
      %c0_54 = arith.constant 0 : index
      %140 = vector.load %arg2[%c0_52, %c0_53, %c0_54] : memref<2x8x32xf32, #tpu.memory_space<vmem>>, vector<2x8x32xf32>
      %141 = vector.shape_cast %140 : vector<2x8x32xf32> to vector<16x32xf32>
      %c0_55 = arith.constant 0 : index
      %c0_56 = arith.constant 0 : index
      %142 = vector.load %arg17[%c0_55, %c0_56] : memref<16x32xf32, #tpu.memory_space<vmem>>, vector<16x32xf32>
      %c0_57 = arith.constant 0 : index
      %c0_58 = arith.constant 0 : index
      %143 = vector.load %arg7[%c0_57, %c0_58] : memref<1x32xf32, #tpu.memory_space<vmem>>, vector<1x32xf32>
      %144 = vector.broadcast %143 : vector<1x32xf32> to vector<16x32xf32>
      %145 = arith.addf %142, %144 : vector<16x32xf32>
      %146 = arith.addf %145, %141 : vector<16x32xf32>
      %c0_59 = arith.constant 0 : index
      %c0_60 = arith.constant 0 : index
      %147 = vector.load %arg8[%c0_59, %c0_60] : memref<1x32xf32, #tpu.memory_space<vmem>>, vector<1x32xf32>
      %c0_61 = arith.constant 0 : index
      %c0_62 = arith.constant 0 : index
      %148 = vector.load %arg9[%c0_61, %c0_62] : memref<1x32xf32, #tpu.memory_space<vmem>>, vector<1x32xf32>
      %cst_63 = arith.constant dense<0.000000e+00> : vector<16xf32>
      %149 = vector.multi_reduction <add>, %146, %cst_63 [1] : vector<16x32xf32> to vector<16xf32>
      %150 = vector.shape_cast %149 : vector<16xf32> to vector<16x1xf32>
      %cst_64 = arith.constant 3.200000e+01 : f32
      %151 = vector.broadcast %cst_64 : f32 to vector<16x1xf32>
      %152 = arith.divf %150, %151 : vector<16x1xf32>
      %153 = vector.broadcast %152 : vector<16x1xf32> to vector<16x32xf32>
      %154 = arith.subf %146, %153 : vector<16x32xf32>
      %155 = arith.mulf %154, %154 : vector<16x32xf32>
      %cst_65 = arith.constant dense<0.000000e+00> : vector<16xf32>
      %156 = vector.multi_reduction <add>, %155, %cst_65 [1] : vector<16x32xf32> to vector<16xf32>
      %157 = vector.shape_cast %156 : vector<16xf32> to vector<16x1xf32>
      %cst_66 = arith.constant 3.200000e+01 : f32
      %158 = vector.broadcast %cst_66 : f32 to vector<16x1xf32>
      %159 = arith.divf %157, %158 : vector<16x1xf32>
      %160 = vector.broadcast %152 : vector<16x1xf32> to vector<16x32xf32>
      %161 = arith.subf %146, %160 : vector<16x32xf32>
      %cst_67 = arith.constant 9.99999974E-6 : f32
      %162 = vector.broadcast %cst_67 : f32 to vector<16x1xf32>
      %163 = arith.addf %159, %162 : vector<16x1xf32>
      %164 = math.rsqrt %163 : vector<16x1xf32>
      %165 = vector.broadcast %164 : vector<16x1xf32> to vector<16x32xf32>
      %166 = arith.mulf %161, %165 : vector<16x32xf32>
      %167 = vector.broadcast %147 : vector<1x32xf32> to vector<16x32xf32>
      %168 = arith.mulf %166, %167 : vector<16x32xf32>
      %169 = vector.broadcast %148 : vector<1x32xf32> to vector<16x32xf32>
      %170 = arith.addf %168, %169 : vector<16x32xf32>
      %171 = arith.truncf %170 : vector<16x32xf32> to vector<16x32xbf16>
      %c0_68 = arith.constant 0 : index
      %c0_69 = arith.constant 0 : index
      %172 = vector.load %arg10[%c0_68, %c0_69] : memref<32x64xbf16, #tpu.memory_space<vmem>>, vector<32x64xbf16>
      %cst_70 = arith.constant dense<0.000000e+00> : vector<16x64xf32>
      %173 = tpu.matmul %171, %172, %cst_70 {dimension_numbers = #tpu.dot_dimension_numbers<[1], [0], [0], [1], [0, 0, 1, 1], [], []>} : vector<16x32xbf16>, vector<32x64xbf16>, vector<16x64xf32> -> vector<16x64xf32>
      %c0_71 = arith.constant 0 : index
      %c0_72 = arith.constant 0 : index
      %174 = vector.load %arg11[%c0_71, %c0_72] : memref<1x64xf32, #tpu.memory_space<vmem>>, vector<1x64xf32>
      %175 = vector.broadcast %174 : vector<1x64xf32> to vector<16x64xf32>
      %176 = arith.addf %173, %175 : vector<16x64xf32>
      %cst_73 = arith.constant 0.000000e+00 : f32
      %177 = vector.broadcast %cst_73 : f32 to vector<16x64xf32>
      %178 = arith.maximumf %176, %177 : vector<16x64xf32>
      %179 = arith.truncf %178 : vector<16x64xf32> to vector<16x64xbf16>
      %c0_74 = arith.constant 0 : index
      %c0_75 = arith.constant 0 : index
      %180 = vector.load %arg12[%c0_74, %c0_75] : memref<64x32xbf16, #tpu.memory_space<vmem>>, vector<64x32xbf16>
      %cst_76 = arith.constant dense<0.000000e+00> : vector<16x32xf32>
      %181 = tpu.matmul %179, %180, %cst_76 {dimension_numbers = #tpu.dot_dimension_numbers<[1], [0], [0], [1], [0, 0, 1, 1], [], []>} : vector<16x64xbf16>, vector<64x32xbf16>, vector<16x32xf32> -> vector<16x32xf32>
      %c0_77 = arith.constant 0 : index
      %c0_78 = arith.constant 0 : index
      %182 = vector.load %arg13[%c0_77, %c0_78] : memref<1x32xf32, #tpu.memory_space<vmem>>, vector<1x32xf32>
      %183 = vector.broadcast %182 : vector<1x32xf32> to vector<16x32xf32>
      %184 = arith.addf %181, %183 : vector<16x32xf32>
      %185 = arith.addf %184, %170 : vector<16x32xf32>
      %c0_79 = arith.constant 0 : index
      %c0_80 = arith.constant 0 : index
      %186 = vector.load %arg14[%c0_79, %c0_80] : memref<1x32xf32, #tpu.memory_space<vmem>>, vector<1x32xf32>
      %c0_81 = arith.constant 0 : index
      %c0_82 = arith.constant 0 : index
      %187 = vector.load %arg15[%c0_81, %c0_82] : memref<1x32xf32, #tpu.memory_space<vmem>>, vector<1x32xf32>
      %cst_83 = arith.constant dense<0.000000e+00> : vector<16xf32>
      %188 = vector.multi_reduction <add>, %185, %cst_83 [1] : vector<16x32xf32> to vector<16xf32>
      %189 = vector.shape_cast %188 : vector<16xf32> to vector<16x1xf32>
      %cst_84 = arith.constant 3.200000e+01 : f32
      %190 = vector.broadcast %cst_84 : f32 to vector<16x1xf32>
      %191 = arith.divf %189, %190 : vector<16x1xf32>
      %192 = vector.broadcast %191 : vector<16x1xf32> to vector<16x32xf32>
      %193 = arith.subf %185, %192 : vector<16x32xf32>
      %194 = arith.mulf %193, %193 : vector<16x32xf32>
      %cst_85 = arith.constant dense<0.000000e+00> : vector<16xf32>
      %195 = vector.multi_reduction <add>, %194, %cst_85 [1] : vector<16x32xf32> to vector<16xf32>
      %196 = vector.shape_cast %195 : vector<16xf32> to vector<16x1xf32>
      %cst_86 = arith.constant 3.200000e+01 : f32
      %197 = vector.broadcast %cst_86 : f32 to vector<16x1xf32>
      %198 = arith.divf %196, %197 : vector<16x1xf32>
      %199 = vector.broadcast %191 : vector<16x1xf32> to vector<16x32xf32>
      %200 = arith.subf %185, %199 : vector<16x32xf32>
      %cst_87 = arith.constant 9.99999974E-6 : f32
      %201 = vector.broadcast %cst_87 : f32 to vector<16x1xf32>
      %202 = arith.addf %198, %201 : vector<16x1xf32>
      %203 = math.rsqrt %202 : vector<16x1xf32>
      %204 = vector.broadcast %203 : vector<16x1xf32> to vector<16x32xf32>
      %205 = arith.mulf %200, %204 : vector<16x32xf32>
      %206 = vector.broadcast %186 : vector<1x32xf32> to vector<16x32xf32>
      %207 = arith.mulf %205, %206 : vector<16x32xf32>
      %208 = vector.broadcast %187 : vector<1x32xf32> to vector<16x32xf32>
      %209 = arith.addf %207, %208 : vector<16x32xf32>
      %210 = vector.shape_cast %209 : vector<16x32xf32> to vector<2x8x32xf32>
      %c0_88 = arith.constant 0 : index
      %c0_89 = arith.constant 0 : index
      %c0_90 = arith.constant 0 : index
      %211 = vector.load %arg16[%c0_88, %c0_89, %c0_90] : memref<2x8x32xf32, #tpu.memory_space<vmem>>, vector<2x8x32xf32>
      tpu.vector_store %arg16[%c0_88, %c0_89, %c0_90], %210 {strides = array<i32>} : memref<2x8x32xf32, #tpu.memory_space<vmem>>, vector<2x8x32xf32>,
    } else {
    }
    return
  }
  func.func @transform_0(%arg0: i32, %arg1: i32) -> (i32, i32, i32) {
    %c0_i32 = arith.constant 0 : i32
    %c0_i32_0 = arith.constant 0 : i32
    %c0_i32_1 = arith.constant 0 : i32
    return %arg0, %c0_i32, %c0_i32_0 : i32, i32, i32
  }
  func.func @transform_1(%arg0: i32, %arg1: i32) -> (i32, i32, i32) {
    %c0_i32 = arith.constant 0 : i32
    %c0_i32_0 = arith.constant 0 : i32
    %c0_i32_1 = arith.constant 0 : i32
    return %arg0, %c0_i32, %c0_i32_0 : i32, i32, i32
  }
  func.func @transform_2(%arg0: i32, %arg1: i32) -> (i32, i32, i32) {
    %c0_i32 = arith.constant 0 : i32
    %c0_i32_0 = arith.constant 0 : i32
    %c0_i32_1 = arith.constant 0 : i32
    return %arg1, %c0_i32, %c0_i32_0 : i32, i32, i32
  }
  func.func @transform_3(%arg0: i32, %arg1: i32) -> (i32, i32, i32) {
    %c0_i32 = arith.constant 0 : i32
    %c0_i32_0 = arith.constant 0 : i32
    %c0_i32_1 = arith.constant 0 : i32
    return %arg1, %c0_i32, %c0_i32_0 : i32, i32, i32
  }
  func.func @transform_4(%arg0: i32, %arg1: i32) -> (i32, i32, i32) {
    %c0_i32 = arith.constant 0 : i32
    %c0_i32_0 = arith.constant 0 : i32
    %c0_i32_1 = arith.constant 0 : i32
    return %arg1, %c0_i32, %c0_i32_0 : i32, i32, i32
  }
  func.func @transform_5(%arg0: i32, %arg1: i32) -> (i32, i32) {
    %c0_i32 = arith.constant 0 : i32
    %c0_i32_0 = arith.constant 0 : i32
    %c0_i32_1 = arith.constant 0 : i32
    return %c0_i32, %c0_i32_0 : i32, i32
  }
  func.func @transform_6(%arg0: i32, %arg1: i32) -> (i32, i32) {
    %c0_i32 = arith.constant 0 : i32
    %c0_i32_0 = arith.constant 0 : i32
    %c0_i32_1 = arith.constant 0 : i32
    return %c0_i32, %c0_i32_0 : i32, i32
  }
  func.func @transform_7(%arg0: i32, %arg1: i32) -> (i32, i32) {
    %c0_i32 = arith.constant 0 : i32
    %c0_i32_0 = arith.constant 0 : i32
    %c0_i32_1 = arith.constant 0 : i32
    return %c0_i32, %c0_i32_0 : i32, i32
  }
  func.func @transform_8(%arg0: i32, %arg1: i32) -> (i32, i32) {
    %c0_i32 = arith.constant 0 : i32
    %c0_i32_0 = arith.constant 0 : i32
    %c0_i32_1 = arith.constant 0 : i32
    return %c0_i32, %c0_i32_0 : i32, i32
  }
  func.func @transform_9(%arg0: i32, %arg1: i32) -> (i32, i32) {
    %c0_i32 = arith.constant 0 : i32
    %c0_i32_0 = arith.constant 0 : i32
    %c0_i32_1 = arith.constant 0 : i32
    return %c0_i32, %c0_i32_0 : i32, i32
  }
  func.func @transform_10(%arg0: i32, %arg1: i32) -> (i32, i32) {
    %c0_i32 = arith.constant 0 : i32
    %c0_i32_0 = arith.constant 0 : i32
    %c0_i32_1 = arith.constant 0 : i32
    return %c0_i32, %c0_i32_0 : i32, i32
  }
  func.func @transform_11(%arg0: i32, %arg1: i32) -> (i32, i32) {
    %c0_i32 = arith.constant 0 : i32
    %c0_i32_0 = arith.constant 0 : i32
    %c0_i32_1 = arith.constant 0 : i32
    return %c0_i32, %c0_i32_0 : i32, i32
  }
  func.func @transform_12(%arg0: i32, %arg1: i32) -> (i32, i32) {
    %c0_i32 = arith.constant 0 : i32
    %c0_i32_0 = arith.constant 0 : i32
    %c0_i32_1 = arith.constant 0 : i32
    return %c0_i32, %c0_i32_0 : i32, i32
  }
  func.func @transform_13(%arg0: i32, %arg1: i32) -> (i32, i32) {
    %c0_i32 = arith.constant 0 : i32
    %c0_i32_0 = arith.constant 0 : i32
    %c0_i32_1 = arith.constant 0 : i32
    return %c0_i32, %c0_i32_0 : i32, i32
  }
  func.func @transform_14(%arg0: i32, %arg1: i32) -> (i32, i32, i32) {
    %c0_i32 = arith.constant 0 : i32
    %c0_i32_0 = arith.constant 0 : i32
    %c0_i32_1 = arith.constant 0 : i32
    return %arg0, %c0_i32, %c0_i32_0 : i32, i32, i32
  }
}

module attributes {stable_mosaic.version = 11 : i64} {
  func.func @_encoder_layer_kernel(%arg0: i32, %arg1: i32, %arg2: memref<2x8x32xf32, #tpu.memory_space<vmem>>, %arg3: memref<2x8x8xi8, #tpu.memory_space<vmem>>, %arg4: memref<1x32x96xbf16, #tpu.memory_space<vmem>>, %arg5: memref<1x1x96xf32, #tpu.memory_space<vmem>>, %arg6: memref<1x32x32xbf16, #tpu.memory_space<vmem>>, %arg7: memref<1x32xf32, #tpu.memory_space<vmem>>, %arg8: memref<1x32xf32, #tpu.memory_space<vmem>>, %arg9: memref<1x32xf32, #tpu.memory_space<vmem>>, %arg10: memref<32x64xbf16, #tpu.memory_space<vmem>>, %arg11: memref<1x64xf32, #tpu.memory_space<vmem>>, %arg12: memref<64x32xbf16, #tpu.memory_space<vmem>>, %arg13: memref<1x32xf32, #tpu.memory_space<vmem>>, %arg14: memref<1x32xf32, #tpu.memory_space<vmem>>, %arg15: memref<1x32xf32, #tpu.memory_space<vmem>>, %arg16: memref<2x8x32xf32, #tpu.memory_space<vmem>>, %arg17: memref<16x32xf32, #tpu.memory_space<vmem>>, %arg18: memref<16x32xbf16, #tpu.memory_space<vmem>>, %arg19: memref<16x32xbf16, #tpu.memory_space<vmem>>) attributes {dimension_semantics = [#tpu.dimension_semantics<parallel>, #tpu.dimension_semantics<arbitrary>], iteration_bounds = array<i64: 2, 1>, scalar_prefetch = 0 : i64, scratch_operands = 3 : i64, tpu.core_type = #tpu.core_type<tc>, window_params = [{transform_indices = @transform_0, window_bounds = array<i64: 2, 8, 32>}, {transform_indices = @transform_1, window_bounds = array<i64: 2, 8, 8>}, {transform_indices = @transform_2, window_bounds = array<i64: 1, 32, 96>}, {transform_indices = @transform_3, window_bounds = array<i64: 1, 1, 96>}, {transform_indices = @transform_4, window_bounds = array<i64: 1, 32, 32>}, {pipeline_mode = #tpu.pipeline_mode<synchronous>, transform_indices = @transform_5, window_bounds = array<i64: 1, 32>}, {pipeline_mode = #tpu.pipeline_mode<synchronous>, transform_indices = @transform_6, window_bounds = array<i64: 1, 32>}, {pipeline_mode = #tpu.pipeline_mode<synchronous>, transform_indices = @transform_7, window_bounds = array<i64: 1, 32>}, {pipeline_mode = #tpu.pipeline_mode<synchronous>, transform_indices = @transform_8, window_bounds = array<i64: 32, 64>}, {pipeline_mode = #tpu.pipeline_mode<synchronous>, transform_indices = @transform_9, window_bounds = array<i64: 1, 64>}, {pipeline_mode = #tpu.pipeline_mode<synchronous>, transform_indices = @transform_10, window_bounds = array<i64: 64, 32>}, {pipeline_mode = #tpu.pipeline_mode<synchronous>, transform_indices = @transform_11, window_bounds = array<i64: 1, 32>}, {pipeline_mode = #tpu.pipeline_mode<synchronous>, transform_indices = @transform_12, window_bounds = array<i64: 1, 32>}, {pipeline_mode = #tpu.pipeline_mode<synchronous>, transform_indices = @transform_13, window_bounds = array<i64: 1, 32>}, {transform_indices = @transform_14, window_bounds = array<i64: 2, 8, 32>}]} {
    %c0_i32 = arith.constant 0 : i32
    %0 = arith.cmpi eq, %arg1, %c0_i32 : i32
    %1 = arith.extui %0 : i1 to i32
    %c0_i32_0 = arith.constant 0 : i32
    %2 = arith.cmpi ne, %1, %c0_i32_0 : i32
    scf.if %2 {
      %cst_52 = arith.constant 0.000000e+00 : f32
      %140 = vector.broadcast %cst_52 : f32 to vector<16x32xf32>
      %c0_53 = arith.constant 0 : index
      %c0_54 = arith.constant 0 : index
      %141 = vector.load %arg17[%c0_53, %c0_54] : memref<16x32xf32, #tpu.memory_space<vmem>>, vector<16x32xf32>
      tpu.vector_store %arg17[%c0_53, %c0_54], %140 {strides = array<i32>} : memref<16x32xf32, #tpu.memory_space<vmem>>, vector<16x32xf32>,
      %c0_55 = arith.constant 0 : index
      %c0_56 = arith.constant 0 : index
      %c0_57 = arith.constant 0 : index
      %142 = vector.load %arg2[%c0_55, %c0_56, %c0_57] : memref<2x8x32xf32, #tpu.memory_space<vmem>>, vector<2x8x32xf32>
      %143 = vector.shape_cast %142 : vector<2x8x32xf32> to vector<16x32xf32>
      %144 = arith.truncf %143 : vector<16x32xf32> to vector<16x32xbf16>
      %c0_58 = arith.constant 0 : index
      %c0_59 = arith.constant 0 : index
      %145 = vector.load %arg18[%c0_58, %c0_59] : memref<16x32xbf16, #tpu.memory_space<vmem>>, vector<16x32xbf16>
      tpu.vector_store %arg18[%c0_58, %c0_59], %144 {strides = array<i32>} : memref<16x32xbf16, #tpu.memory_space<vmem>>, vector<16x32xbf16>,
    } else {
    }
    %c0 = arith.constant 0 : index
    %c0_1 = arith.constant 0 : index
    %3 = vector.load %arg18[%c0, %c0_1] : memref<16x32xbf16, #tpu.memory_space<vmem>>, vector<16x32xbf16>
    %c0_2 = arith.constant 0 : index
    %c0_3 = arith.constant 0 : index
    %c0_4 = arith.constant 0 : index
    %4 = vector.load %arg4[%c0_2, %c0_3, %c0_4] : memref<1x32x96xbf16, #tpu.memory_space<vmem>>, vector<1x32x96xbf16>
    %5 = vector.shape_cast %4 : vector<1x32x96xbf16> to vector<32x96xbf16>
    %cst = arith.constant dense<0.000000e+00> : vector<16x96xf32>
    %6 = tpu.matmul %3, %5, %cst {dimension_numbers = #tpu.dot_dimension_numbers<[1], [0], [0], [1], [0, 0, 1, 1], [], []>} : vector<16x32xbf16>, vector<32x96xbf16>, vector<16x96xf32> -> vector<16x96xf32>
    %c0_5 = arith.constant 0 : index
    %c0_6 = arith.constant 0 : index
    %c0_7 = arith.constant 0 : index
    %7 = vector.load %arg5[%c0_5, %c0_6, %c0_7] : memref<1x1x96xf32, #tpu.memory_space<vmem>>, vector<1x1x96xf32>
    %8 = vector.shape_cast %7 : vector<1x1x96xf32> to vector<1x96xf32>
    %9 = vector.broadcast %8 : vector<1x96xf32> to vector<16x96xf32>
    %10 = arith.addf %6, %9 : vector<16x96xf32>
    %c0_8 = arith.constant 0 : index
    %c0_9 = arith.constant 0 : index
    %c0_10 = arith.constant 0 : index
    %11 = vector.load %arg3[%c0_8, %c0_9, %c0_10] : memref<2x8x8xi8, #tpu.memory_space<vmem>>, vector<2x8x8xi8>
    %c0_i8 = arith.constant 0 : i8
    %12 = vector.broadcast %c0_i8 : i8 to vector<2x8x8xi8>
    %13 = arith.cmpi ne, %11, %12 : vector<2x8x8xi8>
    %14 = vector.extract_strided_slice %10 {offsets = [0, 0], sizes = [16, 8], strides = [1, 1]} : vector<16x96xf32> to vector<16x8xf32>
    %cst_11 = arith.constant 0.353553385 : f32
    %15 = vector.broadcast %cst_11 : f32 to vector<16x8xf32>
    %16 = arith.mulf %14, %15 : vector<16x8xf32>
    %17 = vector.shape_cast %16 : vector<16x8xf32> to vector<2x8x8xf32>
    %18 = arith.truncf %17 : vector<2x8x8xf32> to vector<2x8x8xbf16>
    %19 = vector.extract_strided_slice %10 {offsets = [0, 32], sizes = [16, 8], strides = [1, 1]} : vector<16x96xf32> to vector<16x8xf32>
    %20 = vector.shape_cast %19 : vector<16x8xf32> to vector<2x8x8xf32>
    %21 = arith.truncf %20 : vector<2x8x8xf32> to vector<2x8x8xbf16>
    %22 = vector.extract_strided_slice %10 {offsets = [0, 64], sizes = [16, 8], strides = [1, 1]} : vector<16x96xf32> to vector<16x8xf32>
    %23 = vector.shape_cast %22 : vector<16x8xf32> to vector<2x8x8xf32>
    %24 = arith.truncf %23 : vector<2x8x8xf32> to vector<2x8x8xbf16>
    "tpu.trace_start"() <{level = 10 : i32, message = "bqd,bkd->bqk"}> : () -> ()
    %cst_12 = arith.constant dense<0.000000e+00> : vector<2x8x8xf32>
    %25 = tpu.matmul %18, %21, %cst_12 {dimension_numbers = #tpu.dot_dimension_numbers<[2], [2], [1], [1], [0, 0, 0, 1, 1, 1], [0], [0]>} : vector<2x8x8xbf16>, vector<2x8x8xbf16>, vector<2x8x8xf32> -> vector<2x8x8xf32>
    %cst_13 = arith.constant -1.000000e+09 : f32
    "tpu.trace_stop"() : () -> ()
    %26 = vector.broadcast %cst_13 : f32 to vector<2x8x8xf32>
    %27 = arith.select %13, %25, %26 : vector<2x8x8xi1>, vector<2x8x8xf32>
    %cst_14 = arith.constant dense<0xFF800000> : vector<2x8xf32>
    %28 = vector.multi_reduction <maximumf>, %27, %cst_14 [2] : vector<2x8x8xf32> to vector<2x8xf32>
    %29 = vector.shape_cast %28 : vector<2x8xf32> to vector<2x8x1xf32>
    %30 = vector.broadcast %29 : vector<2x8x1xf32> to vector<2x8x8xf32>
    %31 = arith.subf %27, %30 : vector<2x8x8xf32>
    %32 = math.exp %31 : vector<2x8x8xf32>
    %cst_15 = arith.constant dense<0.000000e+00> : vector<2x8xf32>
    %33 = vector.multi_reduction <add>, %32, %cst_15 [2] : vector<2x8x8xf32> to vector<2x8xf32>
    %34 = vector.shape_cast %33 : vector<2x8xf32> to vector<2x8x1xf32>
    %35 = tpu.reciprocal %34 {approx = true} : vector<2x8x1xf32> -> vector<2x8x1xf32>
    %36 = vector.broadcast %35 : vector<2x8x1xf32> to vector<2x8x8xf32>
    %37 = arith.mulf %32, %36 : vector<2x8x8xf32>
    %38 = arith.truncf %37 : vector<2x8x8xf32> to vector<2x8x8xbf16>
    "tpu.trace_start"() <{level = 10 : i32, message = "bqk,bkd->bqd"}> : () -> ()
    %cst_16 = arith.constant dense<0.000000e+00> : vector<2x8x8xf32>
    %39 = tpu.matmul %38, %24, %cst_16 {dimension_numbers = #tpu.dot_dimension_numbers<[2], [1], [1], [2], [0, 0, 0, 1, 1, 2], [0], [0]>} : vector<2x8x8xbf16>, vector<2x8x8xbf16>, vector<2x8x8xf32> -> vector<2x8x8xf32>
    "tpu.trace_stop"() : () -> ()
    %40 = vector.shape_cast %39 : vector<2x8x8xf32> to vector<16x8xf32>
    %41 = arith.truncf %40 : vector<16x8xf32> to vector<16x8xbf16>
    %c0_17 = arith.constant 0 : index
    %c0_18 = arith.constant 0 : index
    %42 = vector.load %arg19[%c0_17, %c0_18] : memref<16x32xbf16, #tpu.memory_space<vmem>>, vector<16x8xbf16>
    tpu.vector_store %arg19[%c0_17, %c0_18], %41 {strides = array<i32>} : memref<16x32xbf16, #tpu.memory_space<vmem>>, vector<16x8xbf16>,
    %43 = vector.extract_strided_slice %10 {offsets = [0, 8], sizes = [16, 8], strides = [1, 1]} : vector<16x96xf32> to vector<16x8xf32>
    %cst_19 = arith.constant 0.353553385 : f32
    %44 = vector.broadcast %cst_19 : f32 to vector<16x8xf32>
    %45 = arith.mulf %43, %44 : vector<16x8xf32>
    %46 = vector.shape_cast %45 : vector<16x8xf32> to vector<2x8x8xf32>
    %47 = arith.truncf %46 : vector<2x8x8xf32> to vector<2x8x8xbf16>
    %48 = vector.extract_strided_slice %10 {offsets = [0, 40], sizes = [16, 8], strides = [1, 1]} : vector<16x96xf32> to vector<16x8xf32>
    %49 = vector.shape_cast %48 : vector<16x8xf32> to vector<2x8x8xf32>
    %50 = arith.truncf %49 : vector<2x8x8xf32> to vector<2x8x8xbf16>
    %51 = vector.extract_strided_slice %10 {offsets = [0, 72], sizes = [16, 8], strides = [1, 1]} : vector<16x96xf32> to vector<16x8xf32>
    %52 = vector.shape_cast %51 : vector<16x8xf32> to vector<2x8x8xf32>
    %53 = arith.truncf %52 : vector<2x8x8xf32> to vector<2x8x8xbf16>
    "tpu.trace_start"() <{level = 10 : i32, message = "bqd,bkd->bqk"}> : () -> ()
    %cst_20 = arith.constant dense<0.000000e+00> : vector<2x8x8xf32>
    %54 = tpu.matmul %47, %50, %cst_20 {dimension_numbers = #tpu.dot_dimension_numbers<[2], [2], [1], [1], [0, 0, 0, 1, 1, 1], [0], [0]>} : vector<2x8x8xbf16>, vector<2x8x8xbf16>, vector<2x8x8xf32> -> vector<2x8x8xf32>
    %cst_21 = arith.constant -1.000000e+09 : f32
    "tpu.trace_stop"() : () -> ()
    %55 = vector.broadcast %cst_21 : f32 to vector<2x8x8xf32>
    %56 = arith.select %13, %54, %55 : vector<2x8x8xi1>, vector<2x8x8xf32>
    %cst_22 = arith.constant dense<0xFF800000> : vector<2x8xf32>
    %57 = vector.multi_reduction <maximumf>, %56, %cst_22 [2] : vector<2x8x8xf32> to vector<2x8xf32>
    %58 = vector.shape_cast %57 : vector<2x8xf32> to vector<2x8x1xf32>
    %59 = vector.broadcast %58 : vector<2x8x1xf32> to vector<2x8x8xf32>
    %60 = arith.subf %56, %59 : vector<2x8x8xf32>
    %61 = math.exp %60 : vector<2x8x8xf32>
    %cst_23 = arith.constant dense<0.000000e+00> : vector<2x8xf32>
    %62 = vector.multi_reduction <add>, %61, %cst_23 [2] : vector<2x8x8xf32> to vector<2x8xf32>
    %63 = vector.shape_cast %62 : vector<2x8xf32> to vector<2x8x1xf32>
    %64 = tpu.reciprocal %63 {approx = true} : vector<2x8x1xf32> -> vector<2x8x1xf32>
    %65 = vector.broadcast %64 : vector<2x8x1xf32> to vector<2x8x8xf32>
    %66 = arith.mulf %61, %65 : vector<2x8x8xf32>
    %67 = arith.truncf %66 : vector<2x8x8xf32> to vector<2x8x8xbf16>
    "tpu.trace_start"() <{level = 10 : i32, message = "bqk,bkd->bqd"}> : () -> ()
    %cst_24 = arith.constant dense<0.000000e+00> : vector<2x8x8xf32>
    %68 = tpu.matmul %67, %53, %cst_24 {dimension_numbers = #tpu.dot_dimension_numbers<[2], [1], [1], [2], [0, 0, 0, 1, 1, 2], [0], [0]>} : vector<2x8x8xbf16>, vector<2x8x8xbf16>, vector<2x8x8xf32> -> vector<2x8x8xf32>
    "tpu.trace_stop"() : () -> ()
    %69 = vector.shape_cast %68 : vector<2x8x8xf32> to vector<16x8xf32>
    %70 = arith.truncf %69 : vector<16x8xf32> to vector<16x8xbf16>
    %c0_25 = arith.constant 0 : index
    %c8 = arith.constant 8 : index
    %71 = vector.load %arg19[%c0_25, %c8] : memref<16x32xbf16, #tpu.memory_space<vmem>>, vector<16x8xbf16>
    tpu.vector_store %arg19[%c0_25, %c8], %70 {strides = array<i32>} : memref<16x32xbf16, #tpu.memory_space<vmem>>, vector<16x8xbf16>,
    %72 = vector.extract_strided_slice %10 {offsets = [0, 16], sizes = [16, 8], strides = [1, 1]} : vector<16x96xf32> to vector<16x8xf32>
    %cst_26 = arith.constant 0.353553385 : f32
    %73 = vector.broadcast %cst_26 : f32 to vector<16x8xf32>
    %74 = arith.mulf %72, %73 : vector<16x8xf32>
    %75 = vector.shape_cast %74 : vector<16x8xf32> to vector<2x8x8xf32>
    %76 = arith.truncf %75 : vector<2x8x8xf32> to vector<2x8x8xbf16>
    %77 = vector.extract_strided_slice %10 {offsets = [0, 48], sizes = [16, 8], strides = [1, 1]} : vector<16x96xf32> to vector<16x8xf32>
    %78 = vector.shape_cast %77 : vector<16x8xf32> to vector<2x8x8xf32>
    %79 = arith.truncf %78 : vector<2x8x8xf32> to vector<2x8x8xbf16>
    %80 = vector.extract_strided_slice %10 {offsets = [0, 80], sizes = [16, 8], strides = [1, 1]} : vector<16x96xf32> to vector<16x8xf32>
    %81 = vector.shape_cast %80 : vector<16x8xf32> to vector<2x8x8xf32>
    %82 = arith.truncf %81 : vector<2x8x8xf32> to vector<2x8x8xbf16>
    "tpu.trace_start"() <{level = 10 : i32, message = "bqd,bkd->bqk"}> : () -> ()
    %cst_27 = arith.constant dense<0.000000e+00> : vector<2x8x8xf32>
    %83 = tpu.matmul %76, %79, %cst_27 {dimension_numbers = #tpu.dot_dimension_numbers<[2], [2], [1], [1], [0, 0, 0, 1, 1, 1], [0], [0]>} : vector<2x8x8xbf16>, vector<2x8x8xbf16>, vector<2x8x8xf32> -> vector<2x8x8xf32>
    %cst_28 = arith.constant -1.000000e+09 : f32
    "tpu.trace_stop"() : () -> ()
    %84 = vector.broadcast %cst_28 : f32 to vector<2x8x8xf32>
    %85 = arith.select %13, %83, %84 : vector<2x8x8xi1>, vector<2x8x8xf32>
    %cst_29 = arith.constant dense<0xFF800000> : vector<2x8xf32>
    %86 = vector.multi_reduction <maximumf>, %85, %cst_29 [2] : vector<2x8x8xf32> to vector<2x8xf32>
    %87 = vector.shape_cast %86 : vector<2x8xf32> to vector<2x8x1xf32>
    %88 = vector.broadcast %87 : vector<2x8x1xf32> to vector<2x8x8xf32>
    %89 = arith.subf %85, %88 : vector<2x8x8xf32>
    %90 = math.exp %89 : vector<2x8x8xf32>
    %cst_30 = arith.constant dense<0.000000e+00> : vector<2x8xf32>
    %91 = vector.multi_reduction <add>, %90, %cst_30 [2] : vector<2x8x8xf32> to vector<2x8xf32>
    %92 = vector.shape_cast %91 : vector<2x8xf32> to vector<2x8x1xf32>
    %93 = tpu.reciprocal %92 {approx = true} : vector<2x8x1xf32> -> vector<2x8x1xf32>
    %94 = vector.broadcast %93 : vector<2x8x1xf32> to vector<2x8x8xf32>
    %95 = arith.mulf %90, %94 : vector<2x8x8xf32>
    %96 = arith.truncf %95 : vector<2x8x8xf32> to vector<2x8x8xbf16>
    "tpu.trace_start"() <{level = 10 : i32, message = "bqk,bkd->bqd"}> : () -> ()
    %cst_31 = arith.constant dense<0.000000e+00> : vector<2x8x8xf32>
    %97 = tpu.matmul %96, %82, %cst_31 {dimension_numbers = #tpu.dot_dimension_numbers<[2], [1], [1], [2], [0, 0, 0, 1, 1, 2], [0], [0]>} : vector<2x8x8xbf16>, vector<2x8x8xbf16>, vector<2x8x8xf32> -> vector<2x8x8xf32>
    "tpu.trace_stop"() : () -> ()
    %98 = vector.shape_cast %97 : vector<2x8x8xf32> to vector<16x8xf32>
    %99 = arith.truncf %98 : vector<16x8xf32> to vector<16x8xbf16>
    %c0_32 = arith.constant 0 : index
    %c16 = arith.constant 16 : index
    %100 = vector.load %arg19[%c0_32, %c16] : memref<16x32xbf16, #tpu.memory_space<vmem>>, vector<16x8xbf16>
    tpu.vector_store %arg19[%c0_32, %c16], %99 {strides = array<i32>} : memref<16x32xbf16, #tpu.memory_space<vmem>>, vector<16x8xbf16>,
    %101 = vector.extract_strided_slice %10 {offsets = [0, 24], sizes = [16, 8], strides = [1, 1]} : vector<16x96xf32> to vector<16x8xf32>
    %cst_33 = arith.constant 0.353553385 : f32
    %102 = vector.broadcast %cst_33 : f32 to vector<16x8xf32>
    %103 = arith.mulf %101, %102 : vector<16x8xf32>
    %104 = vector.shape_cast %103 : vector<16x8xf32> to vector<2x8x8xf32>
    %105 = arith.truncf %104 : vector<2x8x8xf32> to vector<2x8x8xbf16>
    %106 = vector.extract_strided_slice %10 {offsets = [0, 56], sizes = [16, 8], strides = [1, 1]} : vector<16x96xf32> to vector<16x8xf32>
    %107 = vector.shape_cast %106 : vector<16x8xf32> to vector<2x8x8xf32>
    %108 = arith.truncf %107 : vector<2x8x8xf32> to vector<2x8x8xbf16>
    %109 = vector.extract_strided_slice %10 {offsets = [0, 88], sizes = [16, 8], strides = [1, 1]} : vector<16x96xf32> to vector<16x8xf32>
    %110 = vector.shape_cast %109 : vector<16x8xf32> to vector<2x8x8xf32>
    %111 = arith.truncf %110 : vector<2x8x8xf32> to vector<2x8x8xbf16>
    "tpu.trace_start"() <{level = 10 : i32, message = "bqd,bkd->bqk"}> : () -> ()
    %cst_34 = arith.constant dense<0.000000e+00> : vector<2x8x8xf32>
    %112 = tpu.matmul %105, %108, %cst_34 {dimension_numbers = #tpu.dot_dimension_numbers<[2], [2], [1], [1], [0, 0, 0, 1, 1, 1], [0], [0]>} : vector<2x8x8xbf16>, vector<2x8x8xbf16>, vector<2x8x8xf32> -> vector<2x8x8xf32>
    %cst_35 = arith.constant -1.000000e+09 : f32
    "tpu.trace_stop"() : () -> ()
    %113 = vector.broadcast %cst_35 : f32 to vector<2x8x8xf32>
    %114 = arith.select %13, %112, %113 : vector<2x8x8xi1>, vector<2x8x8xf32>
    %cst_36 = arith.constant dense<0xFF800000> : vector<2x8xf32>
    %115 = vector.multi_reduction <maximumf>, %114, %cst_36 [2] : vector<2x8x8xf32> to vector<2x8xf32>
    %116 = vector.shape_cast %115 : vector<2x8xf32> to vector<2x8x1xf32>
    %117 = vector.broadcast %116 : vector<2x8x1xf32> to vector<2x8x8xf32>
    %118 = arith.subf %114, %117 : vector<2x8x8xf32>
    %119 = math.exp %118 : vector<2x8x8xf32>
    %cst_37 = arith.constant dense<0.000000e+00> : vector<2x8xf32>
    %120 = vector.multi_reduction <add>, %119, %cst_37 [2] : vector<2x8x8xf32> to vector<2x8xf32>
    %121 = vector.shape_cast %120 : vector<2x8xf32> to vector<2x8x1xf32>
    %122 = tpu.reciprocal %121 {approx = true} : vector<2x8x1xf32> -> vector<2x8x1xf32>
    %123 = vector.broadcast %122 : vector<2x8x1xf32> to vector<2x8x8xf32>
    %124 = arith.mulf %119, %123 : vector<2x8x8xf32>
    %125 = arith.truncf %124 : vector<2x8x8xf32> to vector<2x8x8xbf16>
    "tpu.trace_start"() <{level = 10 : i32, message = "bqk,bkd->bqd"}> : () -> ()
    %cst_38 = arith.constant dense<0.000000e+00> : vector<2x8x8xf32>
    %126 = tpu.matmul %125, %111, %cst_38 {dimension_numbers = #tpu.dot_dimension_numbers<[2], [1], [1], [2], [0, 0, 0, 1, 1, 2], [0], [0]>} : vector<2x8x8xbf16>, vector<2x8x8xbf16>, vector<2x8x8xf32> -> vector<2x8x8xf32>
    "tpu.trace_stop"() : () -> ()
    %127 = vector.shape_cast %126 : vector<2x8x8xf32> to vector<16x8xf32>
    %128 = arith.truncf %127 : vector<16x8xf32> to vector<16x8xbf16>
    %c0_39 = arith.constant 0 : index
    %c24 = arith.constant 24 : index
    %129 = vector.load %arg19[%c0_39, %c24] : memref<16x32xbf16, #tpu.memory_space<vmem>>, vector<16x8xbf16>
    tpu.vector_store %arg19[%c0_39, %c24], %128 {strides = array<i32>} : memref<16x32xbf16, #tpu.memory_space<vmem>>, vector<16x8xbf16>,
    %c0_40 = arith.constant 0 : index
    %c0_41 = arith.constant 0 : index
    %130 = vector.load %arg17[%c0_40, %c0_41] : memref<16x32xf32, #tpu.memory_space<vmem>>, vector<16x32xf32>
    %c0_42 = arith.constant 0 : index
    %c0_43 = arith.constant 0 : index
    %131 = vector.load %arg19[%c0_42, %c0_43] : memref<16x32xbf16, #tpu.memory_space<vmem>>, vector<16x32xbf16>
    %c0_44 = arith.constant 0 : index
    %c0_45 = arith.constant 0 : index
    %c0_46 = arith.constant 0 : index
    %132 = vector.load %arg6[%c0_44, %c0_45, %c0_46] : memref<1x32x32xbf16, #tpu.memory_space<vmem>>, vector<1x32x32xbf16>
    %133 = vector.shape_cast %132 : vector<1x32x32xbf16> to vector<32x32xbf16>
    %cst_47 = arith.constant dense<0.000000e+00> : vector<16x32xf32>
    %134 = tpu.matmul %131, %133, %cst_47 {dimension_numbers = #tpu.dot_dimension_numbers<[1], [0], [0], [1], [0, 0, 1, 1], [], []>} : vector<16x32xbf16>, vector<32x32xbf16>, vector<16x32xf32> -> vector<16x32xf32>
    %135 = arith.addf %130, %134 : vector<16x32xf32>
    %c0_48 = arith.constant 0 : index
    %c0_49 = arith.constant 0 : index
    %136 = vector.load %arg17[%c0_48, %c0_49] : memref<16x32xf32, #tpu.memory_space<vmem>>, vector<16x32xf32>
    tpu.vector_store %arg17[%c0_48, %c0_49], %135 {strides = array<i32>} : memref<16x32xf32, #tpu.memory_space<vmem>>, vector<16x32xf32>,
    %c0_i32_50 = arith.constant 0 : i32
    %137 = arith.cmpi eq, %arg1, %c0_i32_50 : i32
    %138 = arith.extui %137 : i1 to i32
    %c0_i32_51 = arith.constant 0 : i32
    %139 = arith.cmpi ne, %138, %c0_i32_51 : i32
    scf.if %139 {
      %c0_52 = arith.constant 0 : index
      %c0_53 = arith.constant 0 : index
      %c0_54 = arith.constant 0 : index
      %140 = vector.load %arg2[%c0_52, %c0_53, %c0_54] : memref<2x8x32xf32, #tpu.memory_space<vmem>>, vector<2x8x32xf32>
      %141 = vector.shape_cast %140 : vector<2x8x32xf32> to vector<16x32xf32>
      %c0_55 = arith.constant 0 : index
      %c0_56 = arith.constant 0 : index
      %142 = vector.load %arg17[%c0_55, %c0_56] : memref<16x32xf32, #tpu.memory_space<vmem>>, vector<16x32xf32>
      %c0_57 = arith.constant 0 : index
      %c0_58 = arith.constant 0 : index
      %143 = vector.load %arg7[%c0_57, %c0_58] : memref<1x32xf32, #tpu.memory_space<vmem>>, vector<1x32xf32>
      %144 = vector.broadcast %143 : vector<1x32xf32> to vector<16x32xf32>
      %145 = arith.addf %142, %144 : vector<16x32xf32>
      %146 = arith.addf %145, %141 : vector<16x32xf32>
      %c0_59 = arith.constant 0 : index
      %c0_60 = arith.constant 0 : index
      %147 = vector.load %arg8[%c0_59, %c0_60] : memref<1x32xf32, #tpu.memory_space<vmem>>, vector<1x32xf32>
      %c0_61 = arith.constant 0 : index
      %c0_62 = arith.constant 0 : index
      %148 = vector.load %arg9[%c0_61, %c0_62] : memref<1x32xf32, #tpu.memory_space<vmem>>, vector<1x32xf32>
      %cst_63 = arith.constant dense<0.000000e+00> : vector<16xf32>
      %149 = vector.multi_reduction <add>, %146, %cst_63 [1] : vector<16x32xf32> to vector<16xf32>
      %150 = vector.shape_cast %149 : vector<16xf32> to vector<16x1xf32>
      %cst_64 = arith.constant 3.200000e+01 : f32
      %151 = vector.broadcast %cst_64 : f32 to vector<16x1xf32>
      %152 = arith.divf %150, %151 : vector<16x1xf32>
      %153 = vector.broadcast %152 : vector<16x1xf32> to vector<16x32xf32>
      %154 = arith.subf %146, %153 : vector<16x32xf32>
      %155 = arith.mulf %154, %154 : vector<16x32xf32>
      %cst_65 = arith.constant dense<0.000000e+00> : vector<16xf32>
      %156 = vector.multi_reduction <add>, %155, %cst_65 [1] : vector<16x32xf32> to vector<16xf32>
      %157 = vector.shape_cast %156 : vector<16xf32> to vector<16x1xf32>
      %cst_66 = arith.constant 3.200000e+01 : f32
      %158 = vector.broadcast %cst_66 : f32 to vector<16x1xf32>
      %159 = arith.divf %157, %158 : vector<16x1xf32>
      %160 = vector.broadcast %152 : vector<16x1xf32> to vector<16x32xf32>
      %161 = arith.subf %146, %160 : vector<16x32xf32>
      %cst_67 = arith.constant 9.99999974E-6 : f32
      %162 = vector.broadcast %cst_67 : f32 to vector<16x1xf32>
      %163 = arith.addf %159, %162 : vector<16x1xf32>
      %164 = math.rsqrt %163 : vector<16x1xf32>
      %165 = vector.broadcast %164 : vector<16x1xf32> to vector<16x32xf32>
      %166 = arith.mulf %161, %165 : vector<16x32xf32>
      %167 = vector.broadcast %147 : vector<1x32xf32> to vector<16x32xf32>
      %168 = arith.mulf %166, %167 : vector<16x32xf32>
      %169 = vector.broadcast %148 : vector<1x32xf32> to vector<16x32xf32>
      %170 = arith.addf %168, %169 : vector<16x32xf32>
      %171 = arith.truncf %170 : vector<16x32xf32> to vector<16x32xbf16>
      %c0_68 = arith.constant 0 : index
      %c0_69 = arith.constant 0 : index
      %172 = vector.load %arg10[%c0_68, %c0_69] : memref<32x64xbf16, #tpu.memory_space<vmem>>, vector<32x64xbf16>
      %cst_70 = arith.constant dense<0.000000e+00> : vector<16x64xf32>
      %173 = tpu.matmul %171, %172, %cst_70 {dimension_numbers = #tpu.dot_dimension_numbers<[1], [0], [0], [1], [0, 0, 1, 1], [], []>} : vector<16x32xbf16>, vector<32x64xbf16>, vector<16x64xf32> -> vector<16x64xf32>
      %c0_71 = arith.constant 0 : index
      %c0_72 = arith.constant 0 : index
      %174 = vector.load %arg11[%c0_71, %c0_72] : memref<1x64xf32, #tpu.memory_space<vmem>>, vector<1x64xf32>
      %175 = vector.broadcast %174 : vector<1x64xf32> to vector<16x64xf32>
      %176 = arith.addf %173, %175 : vector<16x64xf32>
      %cst_73 = arith.constant 0.000000e+00 : f32
      %177 = vector.broadcast %cst_73 : f32 to vector<16x64xf32>
      %178 = arith.maximumf %176, %177 : vector<16x64xf32>
      %179 = arith.truncf %178 : vector<16x64xf32> to vector<16x64xbf16>
      %c0_74 = arith.constant 0 : index
      %c0_75 = arith.constant 0 : index
      %180 = vector.load %arg12[%c0_74, %c0_75] : memref<64x32xbf16, #tpu.memory_space<vmem>>, vector<64x32xbf16>
      %cst_76 = arith.constant dense<0.000000e+00> : vector<16x32xf32>
      %181 = tpu.matmul %179, %180, %cst_76 {dimension_numbers = #tpu.dot_dimension_numbers<[1], [0], [0], [1], [0, 0, 1, 1], [], []>} : vector<16x64xbf16>, vector<64x32xbf16>, vector<16x32xf32> -> vector<16x32xf32>
      %c0_77 = arith.constant 0 : index
      %c0_78 = arith.constant 0 : index
      %182 = vector.load %arg13[%c0_77, %c0_78] : memref<1x32xf32, #tpu.memory_space<vmem>>, vector<1x32xf32>
      %183 = vector.broadcast %182 : vector<1x32xf32> to vector<16x32xf32>
      %184 = arith.addf %181, %183 : vector<16x32xf32>
      %185 = arith.addf %184, %170 : vector<16x32xf32>
      %c0_79 = arith.constant 0 : index
      %c0_80 = arith.constant 0 : index
      %186 = vector.load %arg14[%c0_79, %c0_80] : memref<1x32xf32, #tpu.memory_space<vmem>>, vector<1x32xf32>
      %c0_81 = arith.constant 0 : index
      %c0_82 = arith.constant 0 : index
      %187 = vector.load %arg15[%c0_81, %c0_82] : memref<1x32xf32, #tpu.memory_space<vmem>>, vector<1x32xf32>
      %cst_83 = arith.constant dense<0.000000e+00> : vector<16xf32>
      %188 = vector.multi_reduction <add>, %185, %cst_83 [1] : vector<16x32xf32> to vector<16xf32>
      %189 = vector.shape_cast %188 : vector<16xf32> to vector<16x1xf32>
      %cst_84 = arith.constant 3.200000e+01 : f32
      %190 = vector.broadcast %cst_84 : f32 to vector<16x1xf32>
      %191 = arith.divf %189, %190 : vector<16x1xf32>
      %192 = vector.broadcast %191 : vector<16x1xf32> to vector<16x32xf32>
      %193 = arith.subf %185, %192 : vector<16x32xf32>
      %194 = arith.mulf %193, %193 : vector<16x32xf32>
      %cst_85 = arith.constant dense<0.000000e+00> : vector<16xf32>
      %195 = vector.multi_reduction <add>, %194, %cst_85 [1] : vector<16x32xf32> to vector<16xf32>
      %196 = vector.shape_cast %195 : vector<16xf32> to vector<16x1xf32>
      %cst_86 = arith.constant 3.200000e+01 : f32
      %197 = vector.broadcast %cst_86 : f32 to vector<16x1xf32>
      %198 = arith.divf %196, %197 : vector<16x1xf32>
      %199 = vector.broadcast %191 : vector<16x1xf32> to vector<16x32xf32>
      %200 = arith.subf %185, %199 : vector<16x32xf32>
      %cst_87 = arith.constant 9.99999974E-6 : f32
      %201 = vector.broadcast %cst_87 : f32 to vector<16x1xf32>
      %202 = arith.addf %198, %201 : vector<16x1xf32>
      %203 = math.rsqrt %202 : vector<16x1xf32>
      %204 = vector.broadcast %203 : vector<16x1xf32> to vector<16x32xf32>
      %205 = arith.mulf %200, %204 : vector<16x32xf32>
      %206 = vector.broadcast %186 : vector<1x32xf32> to vector<16x32xf32>
      %207 = arith.mulf %205, %206 : vector<16x32xf32>
      %208 = vector.broadcast %187 : vector<1x32xf32> to vector<16x32xf32>
      %209 = arith.addf %207, %208 : vector<16x32xf32>
      %210 = vector.shape_cast %209 : vector<16x32xf32> to vector<2x8x32xf32>
      %c0_88 = arith.constant 0 : index
      %c0_89 = arith.constant 0 : index
      %c0_90 = arith.constant 0 : index
      %211 = vector.load %arg16[%c0_88, %c0_89, %c0_90] : memref<2x8x32xf32, #tpu.memory_space<vmem>>, vector<2x8x32xf32>
      tpu.vector_store %arg16[%c0_88, %c0_89, %c0_90], %210 {strides = array<i32>} : memref<2x8x32xf32, #tpu.memory_space<vmem>>, vector<2x8x32xf32>,
    } else {
    }
    return
  }
  func.func @transform_0(%arg0: i32, %arg1: i32) -> (i32, i32, i32) {
    %c0_i32 = arith.constant 0 : i32
    %c0_i32_0 = arith.constant 0 : i32
    %c0_i32_1 = arith.constant 0 : i32
    return %arg0, %c0_i32, %c0_i32_0 : i32, i32, i32
  }
  func.func @transform_1(%arg0: i32, %arg1: i32) -> (i32, i32, i32) {
    %c0_i32 = arith.constant 0 : i32
    %c0_i32_0 = arith.constant 0 : i32
    %c0_i32_1 = arith.constant 0 : i32
    return %arg0, %c0_i32, %c0_i32_0 : i32, i32, i32
  }
  func.func @transform_2(%arg0: i32, %arg1: i32) -> (i32, i32, i32) {
    %c0_i32 = arith.constant 0 : i32
    %c0_i32_0 = arith.constant 0 : i32
    %c0_i32_1 = arith.constant 0 : i32
    return %arg1, %c0_i32, %c0_i32_0 : i32, i32, i32
  }
  func.func @transform_3(%arg0: i32, %arg1: i32) -> (i32, i32, i32) {
    %c0_i32 = arith.constant 0 : i32
    %c0_i32_0 = arith.constant 0 : i32
    %c0_i32_1 = arith.constant 0 : i32
    return %arg1, %c0_i32, %c0_i32_0 : i32, i32, i32
  }
  func.func @transform_4(%arg0: i32, %arg1: i32) -> (i32, i32, i32) {
    %c0_i32 = arith.constant 0 : i32
    %c0_i32_0 = arith.constant 0 : i32
    %c0_i32_1 = arith.constant 0 : i32
    return %arg1, %c0_i32, %c0_i32_0 : i32, i32, i32
  }
  func.func @transform_5(%arg0: i32, %arg1: i32) -> (i32, i32) {
    %c0_i32 = arith.constant 0 : i32
    %c0_i32_0 = arith.constant 0 : i32
    %c0_i32_1 = arith.constant 0 : i32
    return %c0_i32, %c0_i32_0 : i32, i32
  }
  func.func @transform_6(%arg0: i32, %arg1: i32) -> (i32, i32) {
    %c0_i32 = arith.constant 0 : i32
    %c0_i32_0 = arith.constant 0 : i32
    %c0_i32_1 = arith.constant 0 : i32
    return %c0_i32, %c0_i32_0 : i32, i32
  }
  func.func @transform_7(%arg0: i32, %arg1: i32) -> (i32, i32) {
    %c0_i32 = arith.constant 0 : i32
    %c0_i32_0 = arith.constant 0 : i32
    %c0_i32_1 = arith.constant 0 : i32
    return %c0_i32, %c0_i32_0 : i32, i32
  }
  func.func @transform_8(%arg0: i32, %arg1: i32) -> (i32, i32) {
    %c0_i32 = arith.constant 0 : i32
    %c0_i32_0 = arith.constant 0 : i32
    %c0_i32_1 = arith.constant 0 : i32
    return %c0_i32, %c0_i32_0 : i32, i32
  }
  func.func @transform_9(%arg0: i32, %arg1: i32) -> (i32, i32) {
    %c0_i32 = arith.constant 0 : i32
    %c0_i32_0 = arith.constant 0 : i32
    %c0_i32_1 = arith.constant 0 : i32
    return %c0_i32, %c0_i32_0 : i32, i32
  }
  func.func @transform_10(%arg0: i32, %arg1: i32) -> (i32, i32) {
    %c0_i32 = arith.constant 0 : i32
    %c0_i32_0 = arith.constant 0 : i32
    %c0_i32_1 = arith.constant 0 : i32
    return %c0_i32, %c0_i32_0 : i32, i32
  }
  func.func @transform_11(%arg0: i32, %arg1: i32) -> (i32, i32) {
    %c0_i32 = arith.constant 0 : i32
    %c0_i32_0 = arith.constant 0 : i32
    %c0_i32_1 = arith.constant 0 : i32
    return %c0_i32, %c0_i32_0 : i32, i32
  }
  func.func @transform_12(%arg0: i32, %arg1: i32) -> (i32, i32) {
    %c0_i32 = arith.constant 0 : i32
    %c0_i32_0 = arith.constant 0 : i32
    %c0_i32_1 = arith.constant 0 : i32
    return %c0_i32, %c0_i32_0 : i32, i32
  }
  func.func @transform_13(%arg0: i32, %arg1: i32) -> (i32, i32) {
    %c0_i32 = arith.constant 0 : i32
    %c0_i32_0 = arith.constant 0 : i32
    %c0_i32_1 = arith.constant 0 : i32
    return %c0_i32, %c0_i32_0 : i32, i32
  }
  func.func @transform_14(%arg0: i32, %arg1: i32) -> (i32, i32, i32) {
    %c0_i32 = arith.constant 0 : i32
    %c0_i32_0 = arith.constant 0 : i32
    %c0_i32_1 = arith.constant 0 : i32
    return %arg0, %c0_i32, %c0_i32_0 : i32, i32, i32
  }
}

</mosaic_0001>

<llo_original>
// kernel: tpu_custom_call.1
$region0: #{tpu_custom_call.1}
  #allocation0 [shape = 'u32[]', space=smem, size = 0x4, offset = 0x4, fixed_abs, tag = 'smem constant byte address 0x4 - core index']
  #allocation1 [shape = 'u32[144,128]{1,0:T(1,128)}', space=vmem, size = 0x12000, scoped, tag = 'internal scratch']
  #allocation2 [shape = 'f32[16,32]{1,0:T(8,128)}', space=vmem, size = 0x2000, scoped, tag = 'scratch operand']
  #allocation3 [shape = 'bf16[16,32]{1,0:T(8,128)(2,1)}', space=vmem, size = 0x1000, scoped, tag = 'scratch operand']
  #allocation4 [shape = 'bf16[16,32]{1,0:T(8,128)(2,1)}', space=vmem, size = 0x1000, scoped, tag = 'scratch operand']
  %s0 = inlined_call_operand.vmem [shape: f32[4,8,32], index: 0, kind: input, shape index: {}]
  %s1 = inlined_call_operand.hbm [shape: s8[4,8,8], index: 1, kind: input, shape index: {}]
  %s2 = inlined_call_operand.vmem [shape: bf16[1,32,96], index: 2, kind: input, shape index: {}]
  %s3 = inlined_call_operand.vmem [shape: f32[1,1,96], index: 3, kind: input, shape index: {}]
  %s4 = inlined_call_operand.hbm [shape: bf16[1,32,32], index: 4, kind: input, shape index: {}]
  %s5 = inlined_call_operand.vmem [shape: f32[1,32], index: 5, kind: input, shape index: {}]
  %s6 = inlined_call_operand.hbm [shape: f32[1,32], index: 6, kind: input, shape index: {}]
  %s7 = inlined_call_operand.hbm [shape: f32[1,32], index: 7, kind: input, shape index: {}]
  %s8 = inlined_call_operand.hbm [shape: bf16[32,64], index: 8, kind: input, shape index: {}]
  %s9 = inlined_call_operand.hbm [shape: f32[1,64], index: 9, kind: input, shape index: {}]
  %s10 = inlined_call_operand.vmem [shape: bf16[64,32], index: 10, kind: input, shape index: {}]
  %s11 = inlined_call_operand.vmem [shape: f32[1,32], index: 11, kind: input, shape index: {}]
  %s12 = inlined_call_operand.vmem [shape: f32[1,32], index: 12, kind: input, shape index: {}]
  %s13 = inlined_call_operand.vmem [shape: f32[1,32], index: 13, kind: input, shape index: {}]
  %s14 = inlined_call_operand.hbm [shape: f32[4,8,32], index: 14, kind: output, shape index: {}]
  %s15 = sld [smem:[#allocation0]]
  $region121: #{tpu_custom_call.1} parent=0
    _
  %s17 = ssub.s32 1, %s15
  %s18 = scalar_select 0, %s17, %s15
  $region1: #{tpu_custom_call.1} parent=0
    #allocation5 [shape = 'u8[4096]{0}', space=vmem, size = 0x1000, scoped, tag = 'input window, operand 1']
    #allocation6 [shape = 's32[2]{0}', space=sflag, size = 0x8, scoped, tag = 'scoped memory for tpu_custom_call.1']
    #allocation7 [shape = 's32[2]{0}', space=sflag, size = 0x8, scoped, tag = 'scoped memory for tpu_custom_call.1']
    #allocation8 [shape = 'u8[8192]{0}', space=vmem, size = 0x2000, scoped, tag = 'input window, operand 4, single buffered']
    #allocation9 [shape = 's32[1]{0}', space=sflag, size = 0x4, scoped, tag = 'scoped memory for tpu_custom_call.1']
    #allocation10 [shape = 'u8[512]{0}', space=vmem, size = 0x400, scoped, tag = 'input window, operand 6, single buffered']
    #allocation11 [shape = 'u8[512]{0}', space=vmem, size = 0x400, scoped, tag = 'input window, operand 7, single buffered']
    #allocation12 [shape = 's32[1]{0}', space=sflag, size = 0x4, scoped, tag = 'scoped memory for tpu_custom_call.1']
    #allocation13 [shape = 'u8[8192]{0}', space=vmem, size = 0x2000, scoped, tag = 'input window, operand 8, single buffered']
    #allocation14 [shape = 'u8[512]{0}', space=vmem, size = 0x400, scoped, tag = 'input window, operand 9, single buffered']
    #allocation15 [shape = 's32[1]{0}', space=sflag, size = 0x4, scoped, tag = 'scoped memory for tpu_custom_call.1']
    #allocation16 [shape = 'u8[16384]{0}', space=vmem, size = 0x4000, scoped, tag = 'output window, operand 0']
    %19 = vsyncpa [#allocation6], 0
    %s20 = scalar_lea.sflag [#allocation6], 1
    %21 = vsyncpa %s20, 0
    %22 = vsyncpa [#allocation9], 0
    %23 = vsyncpa [#allocation12], 0
    %24 = vsyncpa [#allocation15], 0
    %25 = vsyncpa [#allocation7], 0
    %s26 = scalar_lea.sflag [#allocation7], 1
    %27 = vsyncpa %s26, 0
    loop: start=0, step=1, limit=4
    $region2: #{tpu_custom_call.1} parent=1 // loop_pre_header
      _
    $region3: #{tpu_custom_call.1} parent=1 // loop_header
      %s29 = sphi 0, %s33
      %p30 = scmp.ge.s32.totalorder %s29, 4
      %s36 = sphi 0, %s48
      %s37 = sphi 0, %s44
      %s38 = sphi 0, %s36
      %s39 = sphi 0, %s37
      %s40 = sphi 0, %s38
      %s41 = sphi 0, %s39
      %s51 = sphi 0, %s53
      %s54 = sphi 0, %s51
      %s55 = sphi 0, %s54
      %s71 = sphi 0, %s55
      %s77 = sphi 0, %s79
      %s80 = sphi 0, %s77
      %s81 = sphi 0, %s80
      %s97 = sphi 0, %s81
      %s103 = sphi 0, %s105
      %s106 = sphi 0, %s103
      %s107 = sphi 0, %s106
      %s123 = sphi 0, %s107
      %s129 = sphi 0, %s131
      %s132 = sphi 0, %s129
      %s133 = sphi 0, %s132
      %s149 = sphi 0, %s133
      %s155 = sphi 0, %s157
      %s158 = sphi 0, %s155
      %s159 = sphi 0, %s158
      %s175 = sphi 0, %s159
      %s179 = sphi 0, %s179
      %s181 = sphi 0, %s179
      %s182 = sphi 0, %s181
      %s196 = sphi 0, %s182
      %s200 = sphi 0, %s200
      %s202 = sphi 0, %s200
      %s203 = sphi 0, %s202
      %s217 = sphi 0, %s203
      %s221 = sphi 0, %s221
      %s223 = sphi 0, %s221
      %s224 = sphi 0, %s223
      %s238 = sphi 0, %s224
      %s242 = sphi 0, %s242
      %s244 = sphi 0, %s242
      %s245 = sphi 0, %s244
      %s259 = sphi 0, %s245
      %s263 = sphi 0, %s263
      %s265 = sphi 0, %s263
      %s266 = sphi 0, %s265
      %s280 = sphi 0, %s266
      %s284 = sphi 0, %s284
      %s286 = sphi 0, %s284
      %s287 = sphi 0, %s286
      %s301 = sphi 0, %s287
      %s305 = sphi 0, %s305
      %s307 = sphi 0, %s305
      %s308 = sphi 0, %s307
      %s322 = sphi 0, %s308
      %s326 = sphi 0, %s326
      %s328 = sphi 0, %s326
      %s329 = sphi 0, %s328
      %s343 = sphi 0, %s329
      %s347 = sphi 0, %s347
      %s349 = sphi 0, %s347
      %s350 = sphi 0, %s349
      %s364 = sphi 0, %s350
      %s370 = sphi 0, %s372
      %s373 = sphi 0, %s370
      %s374 = sphi 0, %s373
      %s390 = sphi 0, %s374
    $region4: #{tpu_custom_call.1} parent=1 // loop_header_branch
      %32 = sbr.rel (%p30) target = $region8
    $region5: #{tpu_custom_call.1} parent=1 // loop_body
      %s34 = ssub.s32 %s29, 1
      %s35 = ssub.s32 %s29, 2
      %s42 = sadd.s32 1, %s37
      %p43 = scmp.ge.s32.totalorder %s42, 1
      %s44 = scalar_select %p43, 0, %s42
      %s45 = sadd.s32 1, %s36
      %s46 = scalar_select %p43, %s45, %s36
      %p47 = scmp.ge.s32.totalorder %s46, 2
      %s48 = scalar_select %p47, 0, %s46
      %s49 = ssub.s32 %s36, %s48
      %p50 = scmp.eq.s32.totalorder %s49, 0
      %s52 = sadd.s32 %s51, 1
      %s53 = scalar_select %p50, %s51, %s52
      %p56 = pneg %p50
      %p57 = scmp.eq.s32.totalorder %s29, 1
      %p58 = por %p56, %p57
      %p59 = scmp.ne.s32.totalorder %s51, %s54
      %p60 = scmp.eq.s32.totalorder %s29, 0
      %p61 = por %p59, %p60
      %p62 = scmp.ne.s32.totalorder %s51, %s54
      %p63 = scmp.eq.s32.totalorder %s34, 1
      %p64 = por %p62, %p63
      %p65 = scmp.ne.s32.totalorder %s54, %s55
      %p66 = scmp.eq.s32.totalorder %s34, 0
      %p67 = por %p65, %p66
      %p68 = scmp.ne.s32.totalorder %s54, %s55
      %p69 = scmp.eq.s32.totalorder %s35, 1
      %p70 = por %p68, %p69
      %p72 = scmp.ne.s32.totalorder %s55, %s71
      %p73 = scmp.eq.s32.totalorder %s35, 0
      %p74 = por %p72, %p73
      %s75 = ssub.s32 %s36, %s48
      %p76 = scmp.eq.s32.totalorder %s75, 0
      %s78 = sadd.s32 %s77, 1
      %s79 = scalar_select %p76, %s77, %s78
      %p82 = pneg %p76
      %p83 = scmp.eq.s32.totalorder %s29, 1
      %p84 = por %p82, %p83
      %p85 = scmp.ne.s32.totalorder %s77, %s80
      %p86 = scmp.eq.s32.totalorder %s29, 0
      %p87 = por %p85, %p86
      %p88 = scmp.ne.s32.totalorder %s77, %s80
      %p89 = scmp.eq.s32.totalorder %s34, 1
      %p90 = por %p88, %p89
      %p91 = scmp.ne.s32.totalorder %s80, %s81
      %p92 = scmp.eq.s32.totalorder %s34, 0
      %p93 = por %p91, %p92
      %p94 = scmp.ne.s32.totalorder %s80, %s81
      %p95 = scmp.eq.s32.totalorder %s35, 1
      %p96 = por %p94, %p95
      %p98 = scmp.ne.s32.totalorder %s81, %s97
      %p99 = scmp.eq.s32.totalorder %s35, 0
      %p100 = por %p98, %p99
      %s101 = ssub.s32 %s37, %s44
      %p102 = scmp.eq.s32.totalorder %s101, 0
      %s104 = sadd.s32 %s103, 1
      %s105 = scalar_select %p102, %s103, %s104
      %p108 = pneg %p102
      %p109 = scmp.eq.s32.totalorder %s29, 1
      %p110 = por %p108, %p109
      %p111 = scmp.ne.s32.totalorder %s103, %s106
      %p112 = scmp.eq.s32.totalorder %s29, 0
      %p113 = por %p111, %p112
      %p114 = scmp.ne.s32.totalorder %s103, %s106
      %p115 = scmp.eq.s32.totalorder %s34, 1
      %p116 = por %p114, %p115
      %p117 = scmp.ne.s32.totalorder %s106, %s107
      %p118 = scmp.eq.s32.totalorder %s34, 0
      %p119 = por %p117, %p118
      %p120 = scmp.ne.s32.totalorder %s106, %s107
      %p121 = scmp.eq.s32.totalorder %s35, 1
      %p122 = por %p120, %p121
      %p124 = scmp.ne.s32.totalorder %s107, %s123
      %p125 = scmp.eq.s32.totalorder %s35, 0
      %p126 = por %p124, %p125
      %s127 = ssub.s32 %s37, %s44
      %p128 = scmp.eq.s32.totalorder %s127, 0
      %s130 = sadd.s32 %s129, 1
      %s131 = scalar_select %p128, %s129, %s130
      %p134 = pneg %p128
      %p135 = scmp.eq.s32.totalorder %s29, 1
      %p136 = por %p134, %p135
      %p137 = scmp.ne.s32.totalorder %s129, %s132
      %p138 = scmp.eq.s32.totalorder %s29, 0
      %p139 = por %p137, %p138
      %p140 = scmp.ne.s32.totalorder %s129, %s132
      %p141 = scmp.eq.s32.totalorder %s34, 1
      %p142 = por %p140, %p141
      %p143 = scmp.ne.s32.totalorder %s132, %s133
      %p144 = scmp.eq.s32.totalorder %s34, 0
      %p145 = por %p143, %p144
      %p146 = scmp.ne.s32.totalorder %s132, %s133
      %p147 = scmp.eq.s32.totalorder %s35, 1
      %p148 = por %p146, %p147
      %p150 = scmp.ne.s32.totalorder %s133, %s149
      %p151 = scmp.eq.s32.totalorder %s35, 0
      %p152 = por %p150, %p151
      %s153 = ssub.s32 %s37, %s44
      %p154 = scmp.eq.s32.totalorder %s153, 0
      %s156 = sadd.s32 %s155, 1
      %s157 = scalar_select %p154, %s155, %s156
      %p160 = pneg %p154
      %p161 = scmp.eq.s32.totalorder %s29, 1
      %p162 = por %p160, %p161
      %p163 = scmp.ne.s32.totalorder %s155, %s158
      %p164 = scmp.eq.s32.totalorder %s29, 0
      %p165 = por %p163, %p164
      %p166 = scmp.ne.s32.totalorder %s155, %s158
      %p167 = scmp.eq.s32.totalorder %s34, 1
      %p168 = por %p166, %p167
      %p169 = scmp.ne.s32.totalorder %s158, %s159
      %p170 = scmp.eq.s32.totalorder %s34, 0
      %p171 = por %p169, %p170
      %p172 = scmp.ne.s32.totalorder %s158, %s159
      %p173 = scmp.eq.s32.totalorder %s35, 1
      %p174 = por %p172, %p173
      %p176 = scmp.ne.s32.totalorder %s159, %s175
      %p177 = scmp.eq.s32.totalorder %s35, 0
      %p178 = por %p176, %p177
      %s180 = sadd.s32 %s179, 1
      %p183 = scmp.eq.s32.totalorder %s29, 1
      %p184 = scmp.ne.s32.totalorder %s179, %s181
      %p185 = scmp.eq.s32.totalorder %s29, 0
      %p186 = por %p184, %p185
      %p187 = scmp.ne.s32.totalorder %s179, %s181
      %p188 = scmp.eq.s32.totalorder %s34, 1
      %p189 = por %p187, %p188
      %p190 = scmp.ne.s32.totalorder %s181, %s182
      %p191 = scmp.eq.s32.totalorder %s34, 0
      %p192 = por %p190, %p191
      %p193 = scmp.ne.s32.totalorder %s181, %s182
      %p194 = scmp.eq.s32.totalorder %s35, 1
      %p195 = por %p193, %p194
      %p197 = scmp.ne.s32.totalorder %s182, %s196
      %p198 = scmp.eq.s32.totalorder %s35, 0
      %p199 = por %p197, %p198
      %s201 = sadd.s32 %s200, 1
      %p204 = scmp.eq.s32.totalorder %s29, 1
      %p205 = scmp.ne.s32.totalorder %s200, %s202
      %p206 = scmp.eq.s32.totalorder %s29, 0
      %p207 = por %p205, %p206
      %p208 = scmp.ne.s32.totalorder %s200, %s202
      %p209 = scmp.eq.s32.totalorder %s34, 1
      %p210 = por %p208, %p209
      %p211 = scmp.ne.s32.totalorder %s202, %s203
      %p212 = scmp.eq.s32.totalorder %s34, 0
      %p213 = por %p211, %p212
      %p214 = scmp.ne.s32.totalorder %s202, %s203
      %p215 = scmp.eq.s32.totalorder %s35, 1
      %p216 = por %p214, %p215
      %p218 = scmp.ne.s32.totalorder %s203, %s217
      %p219 = scmp.eq.s32.totalorder %s35, 0
      %p220 = por %p218, %p219
      %s222 = sadd.s32 %s221, 1
      %p225 = scmp.eq.s32.totalorder %s29, 1
      %p226 = scmp.ne.s32.totalorder %s221, %s223
      %p227 = scmp.eq.s32.totalorder %s29, 0
      %p228 = por %p226, %p227
      %p229 = scmp.ne.s32.totalorder %s221, %s223
      %p230 = scmp.eq.s32.totalorder %s34, 1
      %p231 = por %p229, %p230
      %p232 = scmp.ne.s32.totalorder %s223, %s224
      %p233 = scmp.eq.s32.totalorder %s34, 0
      %p234 = por %p232, %p233
      %p235 = scmp.ne.s32.totalorder %s223, %s224
      %p236 = scmp.eq.s32.totalorder %s35, 1
      %p237 = por %p235, %p236
      %p239 = scmp.ne.s32.totalorder %s224, %s238
      %p240 = scmp.eq.s32.totalorder %s35, 0
      %p241 = por %p239, %p240
      %s243 = sadd.s32 %s242, 1
      %p246 = scmp.eq.s32.totalorder %s29, 1
      %p247 = scmp.ne.s32.totalorder %s242, %s244
      %p248 = scmp.eq.s32.totalorder %s29, 0
      %p249 = por %p247, %p248
      %p250 = scmp.ne.s32.totalorder %s242, %s244
      %p251 = scmp.eq.s32.totalorder %s34, 1
      %p252 = por %p250, %p251
      %p253 = scmp.ne.s32.totalorder %s244, %s245
      %p254 = scmp.eq.s32.totalorder %s34, 0
      %p255 = por %p253, %p254
      %p256 = scmp.ne.s32.totalorder %s244, %s245
      %p257 = scmp.eq.s32.totalorder %s35, 1
      %p258 = por %p256, %p257
      %p260 = scmp.ne.s32.totalorder %s245, %s259
      %p261 = scmp.eq.s32.totalorder %s35, 0
      %p262 = por %p260, %p261
      %s264 = sadd.s32 %s263, 1
      %p267 = scmp.eq.s32.totalorder %s29, 1
      %p268 = scmp.ne.s32.totalorder %s263, %s265
      %p269 = scmp.eq.s32.totalorder %s29, 0
      %p270 = por %p268, %p269
      %p271 = scmp.ne.s32.totalorder %s263, %s265
      %p272 = scmp.eq.s32.totalorder %s34, 1
      %p273 = por %p271, %p272
      %p274 = scmp.ne.s32.totalorder %s265, %s266
      %p275 = scmp.eq.s32.totalorder %s34, 0
      %p276 = por %p274, %p275
      %p277 = scmp.ne.s32.totalorder %s265, %s266
      %p278 = scmp.eq.s32.totalorder %s35, 1
      %p279 = por %p277, %p278
      %p281 = scmp.ne.s32.totalorder %s266, %s280
      %p282 = scmp.eq.s32.totalorder %s35, 0
      %p283 = por %p281, %p282
      %s285 = sadd.s32 %s284, 1
      %p288 = scmp.eq.s32.totalorder %s29, 1
      %p289 = scmp.ne.s32.totalorder %s284, %s286
      %p290 = scmp.eq.s32.totalorder %s29, 0
      %p291 = por %p289, %p290
      %p292 = scmp.ne.s32.totalorder %s284, %s286
      %p293 = scmp.eq.s32.totalorder %s34, 1
      %p294 = por %p292, %p293
      %p295 = scmp.ne.s32.totalorder %s286, %s287
      %p296 = scmp.eq.s32.totalorder %s34, 0
      %p297 = por %p295, %p296
      %p298 = scmp.ne.s32.totalorder %s286, %s287
      %p299 = scmp.eq.s32.totalorder %s35, 1
      %p300 = por %p298, %p299
      %p302 = scmp.ne.s32.totalorder %s287, %s301
      %p303 = scmp.eq.s32.totalorder %s35, 0
      %p304 = por %p302, %p303
      %s306 = sadd.s32 %s305, 1
      %p309 = scmp.eq.s32.totalorder %s29, 1
      %p310 = scmp.ne.s32.totalorder %s305, %s307
      %p311 = scmp.eq.s32.totalorder %s29, 0
      %p312 = por %p310, %p311
      %p313 = scmp.ne.s32.totalorder %s305, %s307
      %p314 = scmp.eq.s32.totalorder %s34, 1
      %p315 = por %p313, %p314
      %p316 = scmp.ne.s32.totalorder %s307, %s308
      %p317 = scmp.eq.s32.totalorder %s34, 0
      %p318 = por %p316, %p317
      %p319 = scmp.ne.s32.totalorder %s307, %s308
      %p320 = scmp.eq.s32.totalorder %s35, 1
      %p321 = por %p319, %p320
      %p323 = scmp.ne.s32.totalorder %s308, %s322
      %p324 = scmp.eq.s32.totalorder %s35, 0
      %p325 = por %p323, %p324
      %s327 = sadd.s32 %s326, 1
      %p330 = scmp.eq.s32.totalorder %s29, 1
      %p331 = scmp.ne.s32.totalorder %s326, %s328
      %p332 = scmp.eq.s32.totalorder %s29, 0
      %p333 = por %p331, %p332
      %p334 = scmp.ne.s32.totalorder %s326, %s328
      %p335 = scmp.eq.s32.totalorder %s34, 1
      %p336 = por %p334, %p335
      %p337 = scmp.ne.s32.totalorder %s328, %s329
      %p338 = scmp.eq.s32.totalorder %s34, 0
      %p339 = por %p337, %p338
      %p340 = scmp.ne.s32.totalorder %s328, %s329
      %p341 = scmp.eq.s32.totalorder %s35, 1
      %p342 = por %p340, %p341
      %p344 = scmp.ne.s32.totalorder %s329, %s343
      %p345 = scmp.eq.s32.totalorder %s35, 0
      %p346 = por %p344, %p345
      %s348 = sadd.s32 %s347, 1
      %p351 = scmp.eq.s32.totalorder %s29, 1
      %p352 = scmp.ne.s32.totalorder %s347, %s349
      %p353 = scmp.eq.s32.totalorder %s29, 0
      %p354 = por %p352, %p353
      %p355 = scmp.ne.s32.totalorder %s347, %s349
      %p356 = scmp.eq.s32.totalorder %s34, 1
      %p357 = por %p355, %p356
      %p358 = scmp.ne.s32.totalorder %s349, %s350
      %p359 = scmp.eq.s32.totalorder %s34, 0
      %p360 = por %p358, %p359
      %p361 = scmp.ne.s32.totalorder %s349, %s350
      %p362 = scmp.eq.s32.totalorder %s35, 1
      %p363 = por %p361, %p362
      %p365 = scmp.ne.s32.totalorder %s350, %s364
      %p366 = scmp.eq.s32.totalorder %s35, 0
      %p367 = por %p365, %p366
      %s368 = ssub.s32 %s36, %s48
      %p369 = scmp.eq.s32.totalorder %s368, 0
      %s371 = sadd.s32 %s370, 1
      %s372 = scalar_select %p369, %s370, %s371
      %p375 = pneg %p369
      %p376 = scmp.eq.s32.totalorder %s29, 1
      %p377 = por %p375, %p376
      %p378 = scmp.ne.s32.totalorder %s370, %s373
      %p379 = scmp.eq.s32.totalorder %s29, 0
      %p380 = por %p378, %p379
      %p381 = scmp.ne.s32.totalorder %s370, %s373
      %p382 = scmp.eq.s32.totalorder %s34, 1
      %p383 = por %p381, %p382
      %p384 = scmp.ne.s32.totalorder %s373, %s374
      %p385 = scmp.eq.s32.totalorder %s34, 0
      %p386 = por %p384, %p385
      %p387 = scmp.ne.s32.totalorder %s373, %s374
      %p388 = scmp.eq.s32.totalorder %s35, 1
      %p389 = por %p387, %p388
      %p391 = scmp.ne.s32.totalorder %s374, %s390
      %p392 = scmp.eq.s32.totalorder %s35, 0
      %p393 = por %p391, %p392
      %p394 = scmp.le.s32.totalorder 1, %s29
      %p395 = scmp.lt.s32.totalorder %s29, 3
      %p396 = pnand %p394, %p395
      %p397 = pneg %p396
      // Predicated region
      $region9: #{tpu_custom_call.1} parent=5 // pred_check
        _
      $region10: #{tpu_custom_call.1} parent=5 // pred_check_branch
        %399 = sbr.rel (%p396) target = $region12
      $region11: #{tpu_custom_call.1} parent=5 // pred_region
        %s400 = ssub.s32 %s29, 1
        // Predicated region
        $region13: #{tpu_custom_call.1} parent=11 // pred_check
          %p401 = pneg %p119
        $region14: #{tpu_custom_call.1} parent=11 // pred_check_branch
          %403 = sbr.rel (%p401) target = $region16
        $region15: #{tpu_custom_call.1} parent=11 // pred_region
          %p404 = scmp.lt.s32.totalorder %s39, 0
          %s405 = scalar_select %p404, %s39, 0
          %s406 = smul.addr %s405, 4
          %s407 = smul.addr %s406, 4
          %s408 = scalar_lea.vmem %s2, %s407
        $region16: #{tpu_custom_call.1} parent=11 // pred_fallthru
          _
        // Predicated region
        $region17: #{tpu_custom_call.1} parent=11 // pred_check
          %p409 = pneg %p145
        $region18: #{tpu_custom_call.1} parent=11 // pred_check_branch
          %411 = sbr.rel (%p409) target = $region20
        $region19: #{tpu_custom_call.1} parent=11 // pred_region
          %p412 = scmp.lt.s32.totalorder %s39, 0
          %s413 = scalar_select %p412, %s39, 0
          %s414 = scalar_lea.vmem %s3, %s413
        $region20: #{tpu_custom_call.1} parent=11 // pred_fallthru
          _
        // Predicated region
        $region21: #{tpu_custom_call.1} parent=11 // pred_check
          %p415 = pneg %p171
        $region22: #{tpu_custom_call.1} parent=11 // pred_check_branch
          %417 = sbr.rel (%p415) target = $region24
        $region23: #{tpu_custom_call.1} parent=11 // pred_region
          %s419 = ssub.s32 256, 256
          %420 = vsyncadd [#allocation9], %s419
          %s421 = smul.addr %s39, 4
          %s422 = smul.addr %s421, 64
          %s423 = scalar_lea.hbm %s4, %s422
          %s424 = sshll.u32 [#allocation8], 4
          %s425 = int_to_ptr.vmem [resolvable:$true] %s424
          %430 = dma.hbm_to_vmem [thread:$0]  %s423, 256, %s425, [#allocation9], 64, 64, 4
        $region24: #{tpu_custom_call.1} parent=11 // pred_fallthru
          _
        // Predicated region
        $region25: #{tpu_custom_call.1} parent=11 // pred_check
          %p431 = pneg %p192
        $region26: #{tpu_custom_call.1} parent=11 // pred_check_branch
          %433 = sbr.rel (%p431) target = $region28
        $region27: #{tpu_custom_call.1} parent=11 // pred_region
          _
        $region28: #{tpu_custom_call.1} parent=11 // pred_fallthru
          _
        // Predicated region
        $region29: #{tpu_custom_call.1} parent=11 // pred_check
          %p434 = pneg %p213
        $region30: #{tpu_custom_call.1} parent=11 // pred_check_branch
          %436 = sbr.rel (%p434) target = $region32
        $region31: #{tpu_custom_call.1} parent=11 // pred_region
          %s438 = ssub.s32 16, 16
          %439 = vsyncadd [#allocation9], %s438
          %s441 = sshll.u32 [#allocation10], 4
          %s442 = int_to_ptr.vmem [resolvable:$true] %s441
          %444 = dma.hbm_to_vmem [thread:$0]  %s6, 16, %s442, [#allocation9]
        $region32: #{tpu_custom_call.1} parent=11 // pred_fallthru
          _
        // Predicated region
        $region33: #{tpu_custom_call.1} parent=11 // pred_check
          %p445 = pneg %p234
        $region34: #{tpu_custom_call.1} parent=11 // pred_check_branch
          %447 = sbr.rel (%p445) target = $region36
        $region35: #{tpu_custom_call.1} parent=11 // pred_region
          %s449 = ssub.s32 16, 16
          %450 = vsyncadd [#allocation12], %s449
          %s452 = sshll.u32 [#allocation11], 4
          %s453 = int_to_ptr.vmem [resolvable:$true] %s452
          %455 = dma.hbm_to_vmem [thread:$0]  %s7, 16, %s453, [#allocation12]
        $region36: #{tpu_custom_call.1} parent=11 // pred_fallthru
          _
        // Predicated region
        $region37: #{tpu_custom_call.1} parent=11 // pred_check
          %p456 = pneg %p255
        $region38: #{tpu_custom_call.1} parent=11 // pred_check_branch
          %458 = sbr.rel (%p456) target = $region40
        $region39: #{tpu_custom_call.1} parent=11 // pred_region
          %s460 = ssub.s32 256, 256
          %461 = vsyncadd [#allocation12], %s460
          %s462 = sshll.u32 [#allocation13], 4
          %s463 = int_to_ptr.vmem [resolvable:$true] %s462
          %468 = dma.hbm_to_vmem [thread:$0]  %s8, 256, %s463, [#allocation12], 64, 64, 4
        $region40: #{tpu_custom_call.1} parent=11 // pred_fallthru
          _
        // Predicated region
        $region41: #{tpu_custom_call.1} parent=11 // pred_check
          %p469 = pneg %p276
        $region42: #{tpu_custom_call.1} parent=11 // pred_check_branch
          %471 = sbr.rel (%p469) target = $region44
        $region43: #{tpu_custom_call.1} parent=11 // pred_region
          %s473 = ssub.s32 16, 16
          %474 = vsyncadd [#allocation15], %s473
          %s476 = sshll.u32 [#allocation14], 4
          %s477 = int_to_ptr.vmem [resolvable:$true] %s476
          %479 = dma.hbm_to_vmem [thread:$0]  %s9, 16, %s477, [#allocation15]
        $region44: #{tpu_custom_call.1} parent=11 // pred_fallthru
          _
        // Predicated region
        $region45: #{tpu_custom_call.1} parent=11 // pred_check
          %p480 = pneg %p297
        $region46: #{tpu_custom_call.1} parent=11 // pred_check_branch
          %482 = sbr.rel (%p480) target = $region48
        $region47: #{tpu_custom_call.1} parent=11 // pred_region
          _
        $region48: #{tpu_custom_call.1} parent=11 // pred_fallthru
          _
        // Predicated region
        $region49: #{tpu_custom_call.1} parent=11 // pred_check
          %p483 = pneg %p318
        $region50: #{tpu_custom_call.1} parent=11 // pred_check_branch
          %485 = sbr.rel (%p483) target = $region52
        $region51: #{tpu_custom_call.1} parent=11 // pred_region
          _
        $region52: #{tpu_custom_call.1} parent=11 // pred_fallthru
          _
        // Predicated region
        $region53: #{tpu_custom_call.1} parent=11 // pred_check
          %p486 = pneg %p339
        $region54: #{tpu_custom_call.1} parent=11 // pred_check_branch
          %488 = sbr.rel (%p486) target = $region56
        $region55: #{tpu_custom_call.1} parent=11 // pred_region
          _
        $region56: #{tpu_custom_call.1} parent=11 // pred_fallthru
          _
        // Predicated region
        $region57: #{tpu_custom_call.1} parent=11 // pred_check
          %p489 = pneg %p360
        $region58: #{tpu_custom_call.1} parent=11 // pred_check_branch
          %491 = sbr.rel (%p489) target = $region60
        $region59: #{tpu_custom_call.1} parent=11 // pred_region
          _
        $region60: #{tpu_custom_call.1} parent=11 // pred_fallthru
          _
      $region12: #{tpu_custom_call.1} parent=5 // pred_fallthru
        _
      %p492 = scmp.lt.s32.totalorder %s29, 2
      // Predicated region
      $region61: #{tpu_custom_call.1} parent=5 // pred_check
        %p493 = pneg %p492
      $region62: #{tpu_custom_call.1} parent=5 // pred_check_branch
        %495 = sbr.rel (%p493) target = $region64
      $region63: #{tpu_custom_call.1} parent=5 // pred_region
        // Predicated region
        $region65: #{tpu_custom_call.1} parent=63 // pred_check
          %p496 = pneg %p61
        $region66: #{tpu_custom_call.1} parent=63 // pred_check_branch
          %498 = sbr.rel (%p496) target = $region68
        $region67: #{tpu_custom_call.1} parent=63 // pred_region
          %s499 = smul.u32 2, %s36
          %p500 = scmp.lt.s32.totalorder %s499, 3
          %s501 = scalar_select %p500, %s499, 3
          %s502 = smul.addr %s501, 8
          %s503 = scalar_lea.vmem %s0, %s502
          %s504 = smul.u32 2, %s36
        $region68: #{tpu_custom_call.1} parent=63 // pred_fallthru
          _
        // Predicated region
        $region69: #{tpu_custom_call.1} parent=63 // pred_check
          %p505 = pneg %p87
        $region70: #{tpu_custom_call.1} parent=63 // pred_check_branch
          %507 = sbr.rel (%p505) target = $region72
        $region71: #{tpu_custom_call.1} parent=63 // pred_region
          %s508 = sand.u32 %s77, 1
          %s509 = scalar_lea.sflag [#allocation6], %s508
          %s510 = sand.u32 %s77, 1
          %s511 = smul.addr %s510, 4
          %s512 = scalar_lea.vmem [#allocation5], %s511
          %s513 = smul.u32 2, %s36
          %s515 = ssub.s32 64, 64
          %516 = vsyncadd %s509, %s515
          %s517 = smul.addr %s513, 32
          %s518 = scalar_lea.hbm %s1, %s517
          %s519 = sshll.u32 %s512, 4
          %s520 = int_to_ptr.vmem [resolvable:$true] %s519
          %525 = dma.hbm_to_vmem [thread:$0]  %s518, 64, %s520, %s509, 32, 32, 2
        $region72: #{tpu_custom_call.1} parent=63 // pred_fallthru
          _
      $region64: #{tpu_custom_call.1} parent=5 // pred_fallthru
        _
      %p526 = scmp.le.s32.totalorder 1, %s29
      %p527 = scmp.lt.s32.totalorder %s29, 3
      %p528 = pnand %p526, %p527
      %p529 = pneg %p528
      // Predicated region
      $region73: #{tpu_custom_call.1} parent=5 // pred_check
        _
      $region74: #{tpu_custom_call.1} parent=5 // pred_check_branch
        %531 = sbr.rel (%p528) target = $region76
      $region75: #{tpu_custom_call.1} parent=5 // pred_region
        %s532 = ssub.s32 %s29, 1
        %s533 = sand.u32 %s80, 1
        %s534 = scalar_lea.sflag [#allocation6], %s533
        %s535 = sand.u32 %s80, 1
        %s536 = smul.addr %s535, 4
        %s537 = scalar_lea.vmem [#allocation5], %s536
        // Predicated region
        $region77: #{tpu_custom_call.1} parent=75 // pred_check
          %p538 = pneg %p93
        $region78: #{tpu_custom_call.1} parent=75 // pred_check_branch
          %540 = sbr.rel (%p538) target = $region80
        $region79: #{tpu_custom_call.1} parent=75 // pred_region
          %541 = dma.done %s534, 64
        $region80: #{tpu_custom_call.1} parent=75 // pred_fallthru
          _
        // Predicated region
        $region81: #{tpu_custom_call.1} parent=75 // pred_check
          %p542 = pneg %p171
        $region82: #{tpu_custom_call.1} parent=75 // pred_check_branch
          %544 = sbr.rel (%p542) target = $region84
        $region83: #{tpu_custom_call.1} parent=75 // pred_region
          %545 = dma.done [#allocation9], 256
        $region84: #{tpu_custom_call.1} parent=75 // pred_fallthru
          _
        // Predicated region
        $region85: #{tpu_custom_call.1} parent=75 // pred_check
          %p546 = pneg %p213
        $region86: #{tpu_custom_call.1} parent=75 // pred_check_branch
          %548 = sbr.rel (%p546) target = $region88
        $region87: #{tpu_custom_call.1} parent=75 // pred_region
          %549 = dma.done [#allocation9], 16
        $region88: #{tpu_custom_call.1} parent=75 // pred_fallthru
          _
        // Predicated region
        $region89: #{tpu_custom_call.1} parent=75 // pred_check
          %p550 = pneg %p234
        $region90: #{tpu_custom_call.1} parent=75 // pred_check_branch
          %552 = sbr.rel (%p550) target = $region92
        $region91: #{tpu_custom_call.1} parent=75 // pred_region
          %553 = dma.done [#allocation12], 16
        $region92: #{tpu_custom_call.1} parent=75 // pred_fallthru
          _
        // Predicated region
        $region93: #{tpu_custom_call.1} parent=75 // pred_check
          %p554 = pneg %p255
        $region94: #{tpu_custom_call.1} parent=75 // pred_check_branch
          %556 = sbr.rel (%p554) target = $region96
        $region95: #{tpu_custom_call.1} parent=75 // pred_region
          %557 = dma.done [#allocation12], 256
        $region96: #{tpu_custom_call.1} parent=75 // pred_fallthru
          _
        // Predicated region
        $region97: #{tpu_custom_call.1} parent=75 // pred_check
          %p558 = pneg %p276
        $region98: #{tpu_custom_call.1} parent=75 // pred_check_branch
          %560 = sbr.rel (%p558) target = $region100
        $region99: #{tpu_custom_call.1} parent=75 // pred_region
          %561 = dma.done [#allocation15], 16
        $region100: #{tpu_custom_call.1} parent=75 // pred_fallthru
          _
        %s562 = smul.u32 2, %s38
        %p563 = scmp.lt.s32.totalorder %s562, 3
        %s564 = scalar_select %p563, %s562, 3
        %s565 = smul.addr %s564, 8
        %s566 = scalar_lea.vmem %s0, %s565
        %p567 = pneg %p67
        %p568 = pneg %p64
        %s569 = sand.u32 %s80, 1
        %s570 = scalar_lea.sflag [#allocation6], %s569
        %s571 = sand.u32 %s80, 1
        %s572 = smul.addr %s571, 4
        %s573 = scalar_lea.vmem [#allocation5], %s572
        %p574 = pneg %p93
        %p575 = pneg %p90
        %p576 = scmp.lt.s32.totalorder %s39, 0
        %s577 = scalar_select %p576, %s39, 0
        %s578 = smul.addr %s577, 4
        %s579 = smul.addr %s578, 4
        %s580 = scalar_lea.vmem %s2, %s579
        %p581 = pneg %p119
        %p582 = pneg %p116
        %p583 = scmp.lt.s32.totalorder %s39, 0
        %s584 = scalar_select %p583, %s39, 0
        %s585 = scalar_lea.vmem %s3, %s584
        %p586 = pneg %p145
        %p587 = pneg %p142
        %p588 = pneg %p171
        %p589 = pneg %p168
        %p590 = pneg %p192
        %p591 = pneg %p189
        %p592 = pneg %p213
        %p593 = pneg %p210
        %p594 = pneg %p234
        %p595 = pneg %p231
        %p596 = pneg %p255
        %p597 = pneg %p252
        %p598 = pneg %p276
        %p599 = pneg %p273
        %p600 = pneg %p297
        %p601 = pneg %p294
        %p602 = pneg %p318
        %p603 = pneg %p315
        %p604 = pneg %p339
        %p605 = pneg %p336
        %p606 = pneg %p360
        %p607 = pneg %p357
        %p608 = pneg %p386
        %p609 = pneg %p383
        %s610 = sand.u32 %s373, 1
        %s611 = scalar_lea.sflag [#allocation7], %s610
        %s612 = sand.u32 %s373, 1
        %s613 = smul.addr %s612, 16
        %s614 = scalar_lea.vmem [#allocation16], %s613
        %s615 = smul.u32 2, %s38
        %p616 = scmp.lt.s32.totalorder %s615, 3
        %s617 = scalar_select %p616, %s615, 3
        %s618 = smul.addr %s617, 8
        %s619 = scalar_lea.vmem %s0, %s618
        %s620 = smul.u32 2, %s38
        %s621 = smul.u32 2, %s38
        %p622 = scmp.lt.s32.totalorder %s39, 0
        %s623 = scalar_select %p622, %s39, 0
        %s624 = smul.addr %s623, 4
        %s625 = smul.addr %s624, 4
        %s626 = scalar_lea.vmem %s2, %s625
        %p627 = scmp.lt.s32.totalorder %s39, 0
        %s628 = scalar_select %p627, %s39, 0
        %s629 = scalar_lea.vmem %s3, %s628
        %s630 = smul.u32 2, %s38
        %p634 = scmp.eq.s32.totalorder %s39, 0
        // Predicated region
        $region101: #{tpu_custom_call.1} parent=75 // pred_check
          %p635 = pneg %p634
        $region102: #{tpu_custom_call.1} parent=75 // pred_check_branch
          %637 = sbr.rel (%p635) target = $region104
        $region103: #{tpu_custom_call.1} parent=75 // pred_region
          %vm638 = vcmask 261120
          %639 = vst.msk [vmem:[#allocation2] sm:$0xff] %vm638, 0.0
          %640 = vst.msk [vmem:[#allocation2 + $0x8] sm:$0xff] %vm638, 0.0
          %v641 = vld [vmem:[%s619] sm:$0xff]
          %v642 = vld [vmem:[%s619 + $0x8] sm:$0xff]
          %v643 = vpack.c.bf16 %v642, %v641
          %v645 = vunpack.c.l.b16 %v643
          %v646 = vunpack.c.h.b16 %v643
          %v647 = vpack.c.b16 %v645, %v645
          %v648 = vpack.c.b16 %v646, %v646
          %vm651 = vcmask 257024
          %652 = vst.msk [vmem:[#allocation3] sm:$0xf] %vm651, %v647
          %653 = vst.msk [vmem:[#allocation3 + $0x4] sm:$0xf] %vm651, %v648
        $region104: #{tpu_custom_call.1} parent=75 // pred_fallthru
          _
        %v654 = vld [vmem:[#allocation3] sm:$0xf]
        %v655 = vld [vmem:[#allocation3 + $0x4] sm:$0xf]
        %v656 = vld [vmem:[%s626] sm:$0xf]
        %v657 = vld [vmem:[%s626 + $0x4] sm:$0xf]
        %v658 = vld [vmem:[%s626 + $0x8] sm:$0xf]
        %v659 = vld [vmem:[%s626 + $0xc] sm:$0xf]
        %v660 = vld [vmem:[%s629] sm:$0x1]
        %v662 = vlaneseq
        %v663 = vshrl.u32 %v662, 7
        %v664 = vsub.s32 0, %v663
        %v665 = vrot.slane %v660, %v664
        %v669 = vunpack.c.l.b16 %v654
        %v670 = vunpack.c.l.b16 %v655
        %v671 = vpack.c.b16 %v670, %v669
        %v676 = vunpack.c.l.b16 %v656
        %v677 = vunpack.c.l.b16 %v657
        %v678 = vunpack.c.l.b16 %v658
        %v679 = vunpack.c.l.b16 %v659
        %v680 = vpack.c.b16 %v677, %v676
        %v681 = vpack.c.b16 %v679, %v678
        %vm684 = vcmask 261120
        %v686 = vsel %vm684, %v671, 0
        %688 = vmatprep.subr.bf16.mxu0 0
        %689 = vmatpush1.bf16.msra.mxu0 0
        %690 = vmatprep.subr.bf16.mxu0 0
        %691 = vmatpush1.bf16.msra.mxu0 0
        %692 = vmatprep.subr.bf16.mxu0 0
        %693 = vmatpush1.bf16.msra.mxu0 0
        %694 = vmatprep.subr.bf16.mxu0 0
        %695 = vmatpush1.bf16.msra.mxu0 0
        %696 = vmatprep.subr.bf16.mxu0 0
        %697 = vmatpush1.bf16.msra.mxu0 0
        %698 = vmatprep.subr.bf16.mxu0 0
        %699 = vmatpush1.bf16.msra.mxu0 0
        %700 = vmatprep.subr.bf16.mxu0 0
        %701 = vmatpush1.bf16.msra.mxu0 %v681
        %702 = vmatprep.subr.bf16.mxu0 0
        %703 = vmatpush1.bf16.msra.mxu0 %v680
        %704 = vmatprep.subr.bf16.mxu0 0
        %705 = vmatpush2.bf16.msra.mxu0 0
        %706 = vmatprep.subr.bf16.mxu0 0
        %707 = vmatpush2.bf16.msra.mxu0 0
        %708 = vmatprep.subr.bf16.mxu0 0
        %709 = vmatpush2.bf16.msra.mxu0 0
        %710 = vmatprep.subr.bf16.mxu0 0
        %711 = vmatpush2.bf16.msra.mxu0 0
        %712 = vmatprep.subr.bf16.mxu0 0
        %713 = vmatpush2.bf16.msra.mxu0 0
        %714 = vmatprep.subr.bf16.mxu0 0
        %715 = vmatpush2.bf16.msra.mxu0 0
        %716 = vmatprep.subr.bf16.mxu0 0
        %717 = vmatpush2.bf16.msra.mxu0 0
        %718 = vmatprep.subr.bf16.mxu0 0
        %719 = vmatpush2.bf16.msra.mxu0 0
        %720 = vmatprep.mubr.bf16.mxu0 0
        %721 = vmatmul.mubr.bf16.gmra.mxu0 %v686
        %v722 = vpop.f32.mrf.mxu0
        %v723 = vadd.f32 %v665, %v722
        %v724 = vpop.f32.mrf.mxu0
        %v725 = vpop.f32.mrf.mxu0
        %v726 = vadd.f32 %v665, %v725
        %v727 = vpop.f32.mrf.mxu0
        %728 = vdwg.mxu0
        %v729 = vld [vmem:[%s537] sm:$0x3]
        %v730 = vld [vmem:[%s537 + $0x2] sm:$0x3]
        %vm731 = vnez %v729
        %vm732 = vnez %v730
        %v733 = vmul.f32 %v723, 0.35355338
        %v734 = vmul.f32 %v726, 0.35355338
        %v735 = vpack.c.bf16 %v733, %v733
        %v736 = vpack.c.bf16 %v734, %v734
        %v737 = vpack.c.bf16 %v723, %v723
        %v738 = vpack.c.bf16 %v726, %v726
        %740 = vrot.lane.b32.xlu0 %v737, 96
        %v741 = vpop.permute.xlu0 %740
        %vm742 = vcmask 64512
        %v744 = vsel %vm742, %v735, 0
        %v747 = vsel %vm742, %v741, 0
        %749 = vmatprep.subr.bf16.mxu0 0
        %750 = vmatpush1.bf16.xpose.msra.mxu0 0
        %751 = vmatprep.subr.bf16.mxu0 0
        %752 = vmatpush1.bf16.xpose.msra.mxu0 0
        %753 = vmatprep.subr.bf16.mxu0 0
        %754 = vmatpush1.bf16.xpose.msra.mxu0 0
        %755 = vmatprep.subr.bf16.mxu0 0
        %756 = vmatpush1.bf16.xpose.msra.mxu0 0
        %757 = vmatprep.subr.bf16.mxu0 0
        %758 = vmatpush1.bf16.xpose.msra.mxu0 0
        %759 = vmatprep.subr.bf16.mxu0 0
        %760 = vmatpush1.bf16.xpose.msra.mxu0 0
        %761 = vmatprep.subr.bf16.mxu0 0
        %762 = vmatpush1.bf16.xpose.msra.mxu0 0
        %763 = vmatprep.subr.bf16.mxu0 0
        %764 = vmatpush1.bf16.xpose.msra.mxu0 %v747
        %765 = vmatprep.subr.bf16.mxu0 0
        %766 = vmatpush2.bf16.xpose.msra.mxu0 0
        %767 = vmatprep.subr.bf16.mxu0 0
        %768 = vmatpush2.bf16.xpose.msra.mxu0 0
        %769 = vmatprep.subr.bf16.mxu0 0
        %770 = vmatpush2.bf16.xpose.msra.mxu0 0
        %771 = vmatprep.subr.bf16.mxu0 0
        %772 = vmatpush2.bf16.xpose.msra.mxu0 0
        %773 = vmatprep.subr.bf16.mxu0 0
        %774 = vmatpush2.bf16.xpose.msra.mxu0 0
        %775 = vmatprep.subr.bf16.mxu0 0
        %776 = vmatpush2.bf16.xpose.msra.mxu0 0
        %777 = vmatprep.subr.bf16.mxu0 0
        %778 = vmatpush2.bf16.xpose.msra.mxu0 0
        %779 = vmatprep.subr.bf16.mxu0 0
        %780 = vmatpush2.bf16.xpose.msra.mxu0 0
        %781 = vmatprep.mubr.bf16.mxu0 0
        %782 = vmatmul.mubr.bf16.gmra.mxu0 %v744
        %v783 = vpop.f32.mrf.mxu0
        %v784 = vadd.f32 0.0, %v783
        %v785 = vpop.f32.mrf.mxu0
        %v786 = vpop.f32.mrf.mxu0
        %v787 = vpop.f32.mrf.mxu0
        %788 = vdwg.mxu0
        %790 = vrot.lane.b32.xlu0 %v738, 96
        %v791 = vpop.permute.xlu0 %790
        %v793 = vsel %vm742, %v736, 0
        %v796 = vsel %vm742, %v791, 0
        %798 = vmatprep.subr.bf16.mxu0 0
        %799 = vmatpush1.bf16.xpose.msra.mxu0 0
        %800 = vmatprep.subr.bf16.mxu0 0
        %801 = vmatpush1.bf16.xpose.msra.mxu0 0
        %802 = vmatprep.subr.bf16.mxu0 0
        %803 = vmatpush1.bf16.xpose.msra.mxu0 0
        %804 = vmatprep.subr.bf16.mxu0 0
        %805 = vmatpush1.bf16.xpose.msra.mxu0 0
        %806 = vmatprep.subr.bf16.mxu0 0
        %807 = vmatpush1.bf16.xpose.msra.mxu0 0
        %808 = vmatprep.subr.bf16.mxu0 0
        %809 = vmatpush1.bf16.xpose.msra.mxu0 0
        %810 = vmatprep.subr.bf16.mxu0 0
        %811 = vmatpush1.bf16.xpose.msra.mxu0 0
        %812 = vmatprep.subr.bf16.mxu0 0
        %813 = vmatpush1.bf16.xpose.msra.mxu0 %v796
        %814 = vmatprep.subr.bf16.mxu0 0
        %815 = vmatpush2.bf16.xpose.msra.mxu0 0
        %816 = vmatprep.subr.bf16.mxu0 0
        %817 = vmatpush2.bf16.xpose.msra.mxu0 0
        %818 = vmatprep.subr.bf16.mxu0 0
        %819 = vmatpush2.bf16.xpose.msra.mxu0 0
        %820 = vmatprep.subr.bf16.mxu0 0
        %821 = vmatpush2.bf16.xpose.msra.mxu0 0
        %822 = vmatprep.subr.bf16.mxu0 0
        %823 = vmatpush2.bf16.xpose.msra.mxu0 0
        %824 = vmatprep.subr.bf16.mxu0 0
        %825 = vmatpush2.bf16.xpose.msra.mxu0 0
        %826 = vmatprep.subr.bf16.mxu0 0
        %827 = vmatpush2.bf16.xpose.msra.mxu0 0
        %828 = vmatprep.subr.bf16.mxu0 0
        %829 = vmatpush2.bf16.xpose.msra.mxu0 0
        %830 = vmatprep.mubr.bf16.mxu0 0
        %831 = vmatmul.mubr.bf16.gmra.mxu0 %v793
        %v832 = vpop.f32.mrf.mxu0
        %v833 = vadd.f32 0.0, %v832
        %v834 = vpop.f32.mrf.mxu0
        %v835 = vpop.f32.mrf.mxu0
        %v836 = vpop.f32.mrf.mxu0
        %837 = vdwg.mxu0
        %v838 = vsel %vm731, 16843009, 0
        %v839 = vsel %vm732, 16843009, 0
        %v840 = vunpack.c.0.s8 %v838
        %v841 = vunpack.c.0.s8 %v839
        %vm842 = vcmp.ne.s32.totalorder %v840, 0
        %vm843 = vcmp.ne.s32.totalorder %v841, 0
        %v844 = vsel %vm842, %v784, -1e+09
        %v845 = vsel %vm843, %v833, -1e+09
        %v846 = vsel %vm742, %v844, -inf
        %847 = vmax.xlane.f32.xlu0 %v846
        %v848 = vpop.xlane.xlu0 %847
        %v849 = vsel %vm742, %v845, -inf
        %850 = vmax.xlane.f32.xlu0 %v849
        %v851 = vpop.xlane.xlu0 %850
        %v852 = vsub.f32 %v844, %v848
        %v853 = vsub.f32 %v845, %v851
        %v854 = vmul.f32 %v852, 1.442695
        %v855 = vpow.pop %v854
        %v856 = vmul.f32 %v853, 1.442695
        %v857 = vpow.pop %v856
        %v858 = vsel %vm742, %v855, 0.0
        %859 = vadd.xlane.f32.xlu0 %v858
        %v860 = vpop.xlane.xlu0 %859
        %v861 = vsel %vm742, %v857, 0.0
        %862 = vadd.xlane.f32.xlu0 %v861
        %v863 = vpop.xlane.xlu0 %862
        %v864 = vrcp.pop %v860
        %v865 = vrcp.pop %v863
        %v866 = vmul.f32 %v855, %v864
        %v867 = vmul.f32 %v857, %v865
        %v868 = vpack.c.bf16 %v866, %v866
        %v869 = vpack.c.bf16 %v867, %v867
        %870 = vrot.lane.b32.xlu0 %v737, 64
        %v871 = vpop.permute.xlu0 %870
        %v873 = vsel %vm742, %v868, 0
        %vm875 = vcmask 1043456
        %v877 = vsel %vm875, %v871, 0
        %879 = vmatprep.subr.bf16.mxu0 0
        %880 = vmatpush1.bf16.msra.mxu0 0
        %881 = vmatprep.subr.bf16.mxu0 0
        %882 = vmatpush1.bf16.msra.mxu0 0
        %883 = vmatprep.subr.bf16.mxu0 0
        %884 = vmatpush1.bf16.msra.mxu0 0
        %885 = vmatprep.subr.bf16.mxu0 0
        %886 = vmatpush1.bf16.msra.mxu0 0
        %887 = vmatprep.subr.bf16.mxu0 0
        %888 = vmatpush1.bf16.msra.mxu0 0
        %889 = vmatprep.subr.bf16.mxu0 0
        %890 = vmatpush1.bf16.msra.mxu0 0
        %891 = vmatprep.subr.bf16.mxu0 0
        %892 = vmatpush1.bf16.msra.mxu0 0
        %893 = vmatprep.subr.bf16.mxu0 0
        %894 = vmatpush1.bf16.msra.mxu0 %v877
        %895 = vmatprep.subr.bf16.mxu0 0
        %896 = vmatpush2.bf16.msra.mxu0 0
        %897 = vmatprep.subr.bf16.mxu0 0
        %898 = vmatpush2.bf16.msra.mxu0 0
        %899 = vmatprep.subr.bf16.mxu0 0
        %900 = vmatpush2.bf16.msra.mxu0 0
        %901 = vmatprep.subr.bf16.mxu0 0
        %902 = vmatpush2.bf16.msra.mxu0 0
        %903 = vmatprep.subr.bf16.mxu0 0
        %904 = vmatpush2.bf16.msra.mxu0 0
        %905 = vmatprep.subr.bf16.mxu0 0
        %906 = vmatpush2.bf16.msra.mxu0 0
        %907 = vmatprep.subr.bf16.mxu0 0
        %908 = vmatpush2.bf16.msra.mxu0 0
        %909 = vmatprep.subr.bf16.mxu0 0
        %910 = vmatpush2.bf16.msra.mxu0 0
        %911 = vmatprep.mubr.bf16.mxu0 0
        %912 = vmatmul.mubr.bf16.gmra.mxu0 %v873
        %v913 = vpop.f32.mrf.mxu0
        %v914 = vadd.f32 0.0, %v913
        %v915 = vpop.f32.mrf.mxu0
        %v916 = vpop.f32.mrf.mxu0
        %v917 = vpop.f32.mrf.mxu0
        %918 = vdwg.mxu0
        %919 = vrot.lane.b32.xlu0 %v738, 64
        %v920 = vpop.permute.xlu0 %919
        %v922 = vsel %vm742, %v869, 0
        %v925 = vsel %vm875, %v920, 0
        %927 = vmatprep.subr.bf16.mxu0 0
        %928 = vmatpush1.bf16.msra.mxu0 0
        %929 = vmatprep.subr.bf16.mxu0 0
        %930 = vmatpush1.bf16.msra.mxu0 0
        %931 = vmatprep.subr.bf16.mxu0 0
        %932 = vmatpush1.bf16.msra.mxu0 0
        %933 = vmatprep.subr.bf16.mxu0 0
        %934 = vmatpush1.bf16.msra.mxu0 0
        %935 = vmatprep.subr.bf16.mxu0 0
        %936 = vmatpush1.bf16.msra.mxu0 0
        %937 = vmatprep.subr.bf16.mxu0 0
        %938 = vmatpush1.bf16.msra.mxu0 0
        %939 = vmatprep.subr.bf16.mxu0 0
        %940 = vmatpush1.bf16.msra.mxu0 0
        %941 = vmatprep.subr.bf16.mxu0 0
        %942 = vmatpush1.bf16.msra.mxu0 %v925
        %943 = vmatprep.subr.bf16.mxu0 0
        %944 = vmatpush2.bf16.msra.mxu0 0
        %945 = vmatprep.subr.bf16.mxu0 0
        %946 = vmatpush2.bf16.msra.mxu0 0
        %947 = vmatprep.subr.bf16.mxu0 0
        %948 = vmatpush2.bf16.msra.mxu0 0
        %949 = vmatprep.subr.bf16.mxu0 0
        %950 = vmatpush2.bf16.msra.mxu0 0
        %951 = vmatprep.subr.bf16.mxu0 0
        %952 = vmatpush2.bf16.msra.mxu0 0
        %953 = vmatprep.subr.bf16.mxu0 0
        %954 = vmatpush2.bf16.msra.mxu0 0
        %955 = vmatprep.subr.bf16.mxu0 0
        %956 = vmatpush2.bf16.msra.mxu0 0
        %957 = vmatprep.subr.bf16.mxu0 0
        %958 = vmatpush2.bf16.msra.mxu0 0
        %959 = vmatprep.mubr.bf16.mxu0 0
        %960 = vmatmul.mubr.bf16.gmra.mxu0 %v922
        %v961 = vpop.f32.mrf.mxu0
        %v962 = vadd.f32 0.0, %v961
        %v963 = vpop.f32.mrf.mxu0
        %v964 = vpop.f32.mrf.mxu0
        %v965 = vpop.f32.mrf.mxu0
        %966 = vdwg.mxu0
        %v967 = vpack.c.bf16 %v962, %v914
        %v969 = vunpack.c.l.b16 %v967
        %v970 = vunpack.c.h.b16 %v967
        %v971 = vpack.c.b16 %v969, %v969
        %v972 = vpack.c.b16 %v970, %v970
        %vm975 = vcmask 60416
        %976 = vst.msk [vmem:[#allocation4] sm:$0xf] %vm975, %v971
        %977 = vst.msk [vmem:[#allocation4 + $0x4] sm:$0xf] %vm975, %v972
        %979 = vrot.lane.b32.xlu0 %v735, 120
        %v980 = vpop.permute.xlu0 %979
        %981 = vrot.lane.b32.xlu0 %v737, 88
        %v982 = vpop.permute.xlu0 %981
        %v984 = vsel %vm742, %v980, 0
        %v987 = vsel %vm742, %v982, 0
        %989 = vmatprep.subr.bf16.mxu0 0
        %990 = vmatpush1.bf16.xpose.msra.mxu0 0
        %991 = vmatprep.subr.bf16.mxu0 0
        %992 = vmatpush1.bf16.xpose.msra.mxu0 0
        %993 = vmatprep.subr.bf16.mxu0 0
        %994 = vmatpush1.bf16.xpose.msra.mxu0 0
        %995 = vmatprep.subr.bf16.mxu0 0
        %996 = vmatpush1.bf16.xpose.msra.mxu0 0
        %997 = vmatprep.subr.bf16.mxu0 0
        %998 = vmatpush1.bf16.xpose.msra.mxu0 0
        %999 = vmatprep.subr.bf16.mxu0 0
        %1000 = vmatpush1.bf16.xpose.msra.mxu0 0
        %1001 = vmatprep.subr.bf16.mxu0 0
        %1002 = vmatpush1.bf16.xpose.msra.mxu0 0
        %1003 = vmatprep.subr.bf16.mxu0 0
        %1004 = vmatpush1.bf16.xpose.msra.mxu0 %v987
        %1005 = vmatprep.subr.bf16.mxu0 0
        %1006 = vmatpush2.bf16.xpose.msra.mxu0 0
        %1007 = vmatprep.subr.bf16.mxu0 0
        %1008 = vmatpush2.bf16.xpose.msra.mxu0 0
        %1009 = vmatprep.subr.bf16.mxu0 0
        %1010 = vmatpush2.bf16.xpose.msra.mxu0 0
        %1011 = vmatprep.subr.bf16.mxu0 0
        %1012 = vmatpush2.bf16.xpose.msra.mxu0 0
        %1013 = vmatprep.subr.bf16.mxu0 0
        %1014 = vmatpush2.bf16.xpose.msra.mxu0 0
        %1015 = vmatprep.subr.bf16.mxu0 0
        %1016 = vmatpush2.bf16.xpose.msra.mxu0 0
        %1017 = vmatprep.subr.bf16.mxu0 0
        %1018 = vmatpush2.bf16.xpose.msra.mxu0 0
        %1019 = vmatprep.subr.bf16.mxu0 0
        %1020 = vmatpush2.bf16.xpose.msra.mxu0 0
        %1021 = vmatprep.mubr.bf16.mxu0 0
        %1022 = vmatmul.mubr.bf16.gmra.mxu0 %v984
        %v1023 = vpop.f32.mrf.mxu0
        %v1024 = vadd.f32 0.0, %v1023
        %v1025 = vpop.f32.mrf.mxu0
        %v1026 = vpop.f32.mrf.mxu0
        %v1027 = vpop.f32.mrf.mxu0
        %1028 = vdwg.mxu0
        %1030 = vrot.lane.b32.xlu0 %v736, 120
        %v1031 = vpop.permute.xlu0 %1030
        %1032 = vrot.lane.b32.xlu0 %v738, 88
        %v1033 = vpop.permute.xlu0 %1032
        %v1035 = vsel %vm742, %v1031, 0
        %v1038 = vsel %vm742, %v1033, 0
        %1040 = vmatprep.subr.bf16.mxu0 0
        %1041 = vmatpush1.bf16.xpose.msra.mxu0 0
        %1042 = vmatprep.subr.bf16.mxu0 0
        %1043 = vmatpush1.bf16.xpose.msra.mxu0 0
        %1044 = vmatprep.subr.bf16.mxu0 0
        %1045 = vmatpush1.bf16.xpose.msra.mxu0 0
        %1046 = vmatprep.subr.bf16.mxu0 0
        %1047 = vmatpush1.bf16.xpose.msra.mxu0 0
        %1048 = vmatprep.subr.bf16.mxu0 0
        %1049 = vmatpush1.bf16.xpose.msra.mxu0 0
        %1050 = vmatprep.subr.bf16.mxu0 0
        %1051 = vmatpush1.bf16.xpose.msra.mxu0 0
        %1052 = vmatprep.subr.bf16.mxu0 0
        %1053 = vmatpush1.bf16.xpose.msra.mxu0 0
        %1054 = vmatprep.subr.bf16.mxu0 0
        %1055 = vmatpush1.bf16.xpose.msra.mxu0 %v1038
        %1056 = vmatprep.subr.bf16.mxu0 0
        %1057 = vmatpush2.bf16.xpose.msra.mxu0 0
        %1058 = vmatprep.subr.bf16.mxu0 0
        %1059 = vmatpush2.bf16.xpose.msra.mxu0 0
        %1060 = vmatprep.subr.bf16.mxu0 0
        %1061 = vmatpush2.bf16.xpose.msra.mxu0 0
        %1062 = vmatprep.subr.bf16.mxu0 0
        %1063 = vmatpush2.bf16.xpose.msra.mxu0 0
        %1064 = vmatprep.subr.bf16.mxu0 0
        %1065 = vmatpush2.bf16.xpose.msra.mxu0 0
        %1066 = vmatprep.subr.bf16.mxu0 0
        %1067 = vmatpush2.bf16.xpose.msra.mxu0 0
        %1068 = vmatprep.subr.bf16.mxu0 0
        %1069 = vmatpush2.bf16.xpose.msra.mxu0 0
        %1070 = vmatprep.subr.bf16.mxu0 0
        %1071 = vmatpush2.bf16.xpose.msra.mxu0 0
        %1072 = vmatprep.mubr.bf16.mxu0 0
        %1073 = vmatmul.mubr.bf16.gmra.mxu0 %v1035
        %v1074 = vpop.f32.mrf.mxu0
        %v1075 = vadd.f32 0.0, %v1074
        %v1076 = vpop.f32.mrf.mxu0
        %v1077 = vpop.f32.mrf.mxu0
        %v1078 = vpop.f32.mrf.mxu0
        %1079 = vdwg.mxu0
        %v1080 = vsel %vm842, %v1024, -1e+09
        %v1081 = vsel %vm843, %v1075, -1e+09
        %v1082 = vsel %vm742, %v1080, -inf
        %1083 = vmax.xlane.f32.xlu0 %v1082
        %v1084 = vpop.xlane.xlu0 %1083
        %v1085 = vsel %vm742, %v1081, -inf
        %1086 = vmax.xlane.f32.xlu0 %v1085
        %v1087 = vpop.xlane.xlu0 %1086
        %v1088 = vsub.f32 %v1080, %v1084
        %v1089 = vsub.f32 %v1081, %v1087
        %v1090 = vmul.f32 %v1088, 1.442695
        %v1091 = vpow.pop %v1090
        %v1092 = vmul.f32 %v1089, 1.442695
        %v1093 = vpow.pop %v1092
        %v1094 = vsel %vm742, %v1091, 0.0
        %1095 = vadd.xlane.f32.xlu0 %v1094
        %v1096 = vpop.xlane.xlu0 %1095
        %v1097 = vsel %vm742, %v1093, 0.0
        %1098 = vadd.xlane.f32.xlu0 %v1097
        %v1099 = vpop.xlane.xlu0 %1098
        %v1100 = vrcp.pop %v1096
        %v1101 = vrcp.pop %v1099
        %v1102 = vmul.f32 %v1091, %v1100
        %v1103 = vmul.f32 %v1093, %v1101
        %v1104 = vpack.c.bf16 %v1102, %v1102
        %v1105 = vpack.c.bf16 %v1103, %v1103
        %1106 = vrot.lane.b32.xlu0 %v737, 56
        %v1107 = vpop.permute.xlu0 %1106
        %v1109 = vsel %vm742, %v1104, 0
        %v1112 = vsel %vm875, %v1107, 0
        %1114 = vmatprep.subr.bf16.mxu0 0
        %1115 = vmatpush1.bf16.msra.mxu0 0
        %1116 = vmatprep.subr.bf16.mxu0 0
        %1117 = vmatpush1.bf16.msra.mxu0 0
        %1118 = vmatprep.subr.bf16.mxu0 0
        %1119 = vmatpush1.bf16.msra.mxu0 0
        %1120 = vmatprep.subr.bf16.mxu0 0
        %1121 = vmatpush1.bf16.msra.mxu0 0
        %1122 = vmatprep.subr.bf16.mxu0 0
        %1123 = vmatpush1.bf16.msra.mxu0 0
        %1124 = vmatprep.subr.bf16.mxu0 0
        %1125 = vmatpush1.bf16.msra.mxu0 0
        %1126 = vmatprep.subr.bf16.mxu0 0
        %1127 = vmatpush1.bf16.msra.mxu0 0
        %1128 = vmatprep.subr.bf16.mxu0 0
        %1129 = vmatpush1.bf16.msra.mxu0 %v1112
        %1130 = vmatprep.subr.bf16.mxu0 0
        %1131 = vmatpush2.bf16.msra.mxu0 0
        %1132 = vmatprep.subr.bf16.mxu0 0
        %1133 = vmatpush2.bf16.msra.mxu0 0
        %1134 = vmatprep.subr.bf16.mxu0 0
        %1135 = vmatpush2.bf16.msra.mxu0 0
        %1136 = vmatprep.subr.bf16.mxu0 0
        %1137 = vmatpush2.bf16.msra.mxu0 0
        %1138 = vmatprep.subr.bf16.mxu0 0
        %1139 = vmatpush2.bf16.msra.mxu0 0
        %1140 = vmatprep.subr.bf16.mxu0 0
        %1141 = vmatpush2.bf16.msra.mxu0 0
        %1142 = vmatprep.subr.bf16.mxu0 0
        %1143 = vmatpush2.bf16.msra.mxu0 0
        %1144 = vmatprep.subr.bf16.mxu0 0
        %1145 = vmatpush2.bf16.msra.mxu0 0
        %1146 = vmatprep.mubr.bf16.mxu0 0
        %1147 = vmatmul.mubr.bf16.gmra.mxu0 %v1109
        %v1148 = vpop.f32.mrf.mxu0
        %v1149 = vadd.f32 0.0, %v1148
        %v1150 = vpop.f32.mrf.mxu0
        %v1151 = vpop.f32.mrf.mxu0
        %v1152 = vpop.f32.mrf.mxu0
        %1153 = vdwg.mxu0
        %1154 = vrot.lane.b32.xlu0 %v738, 56
        %v1155 = vpop.permute.xlu0 %1154
        %v1157 = vsel %vm742, %v1105, 0
        %v1160 = vsel %vm875, %v1155, 0
        %1162 = vmatprep.subr.bf16.mxu0 0
        %1163 = vmatpush1.bf16.msra.mxu0 0
        %1164 = vmatprep.subr.bf16.mxu0 0
        %1165 = vmatpush1.bf16.msra.mxu0 0
        %1166 = vmatprep.subr.bf16.mxu0 0
        %1167 = vmatpush1.bf16.msra.mxu0 0
        %1168 = vmatprep.subr.bf16.mxu0 0
        %1169 = vmatpush1.bf16.msra.mxu0 0
        %1170 = vmatprep.subr.bf16.mxu0 0
        %1171 = vmatpush1.bf16.msra.mxu0 0
        %1172 = vmatprep.subr.bf16.mxu0 0
        %1173 = vmatpush1.bf16.msra.mxu0 0
        %1174 = vmatprep.subr.bf16.mxu0 0
        %1175 = vmatpush1.bf16.msra.mxu0 0
        %1176 = vmatprep.subr.bf16.mxu0 0
        %1177 = vmatpush1.bf16.msra.mxu0 %v1160
        %1178 = vmatprep.subr.bf16.mxu0 0
        %1179 = vmatpush2.bf16.msra.mxu0 0
        %1180 = vmatprep.subr.bf16.mxu0 0
        %1181 = vmatpush2.bf16.msra.mxu0 0
        %1182 = vmatprep.subr.bf16.mxu0 0
        %1183 = vmatpush2.bf16.msra.mxu0 0
        %1184 = vmatprep.subr.bf16.mxu0 0
        %1185 = vmatpush2.bf16.msra.mxu0 0
        %1186 = vmatprep.subr.bf16.mxu0 0
        %1187 = vmatpush2.bf16.msra.mxu0 0
        %1188 = vmatprep.subr.bf16.mxu0 0
        %1189 = vmatpush2.bf16.msra.mxu0 0
        %1190 = vmatprep.subr.bf16.mxu0 0
        %1191 = vmatpush2.bf16.msra.mxu0 0
        %1192 = vmatprep.subr.bf16.mxu0 0
        %1193 = vmatpush2.bf16.msra.mxu0 0
        %1194 = vmatprep.mubr.bf16.mxu0 0
        %1195 = vmatmul.mubr.bf16.gmra.mxu0 %v1157
        %v1196 = vpop.f32.mrf.mxu0
        %v1197 = vadd.f32 0.0, %v1196
        %v1198 = vpop.f32.mrf.mxu0
        %v1199 = vpop.f32.mrf.mxu0
        %v1200 = vpop.f32.mrf.mxu0
        %1201 = vdwg.mxu0
        %v1202 = vpack.c.bf16 %v1197, %v1149
        %v1204 = vunpack.c.l.b16 %v1202
        %v1205 = vunpack.c.h.b16 %v1202
        %v1206 = vpack.c.b16 %v1204, %v1204
        %v1207 = vpack.c.b16 %v1205, %v1205
        %1208 = vrot.lane.b32.xlu0 %v1206, 8
        %v1209 = vpop.permute.xlu0 %1208
        %1210 = vrot.lane.b32.xlu0 %v1207, 8
        %v1211 = vpop.permute.xlu0 %1210
        %vm1214 = vcmask 126016
        %1215 = vst.msk [vmem:[#allocation4] sm:$0xf] %vm1214, %v1209
        %1216 = vst.msk [vmem:[#allocation4 + $0x4] sm:$0xf] %vm1214, %v1211
        %1217 = vrot.lane.b32.xlu0 %v735, 112
        %v1218 = vpop.permute.xlu0 %1217
        %1219 = vrot.lane.b32.xlu0 %v737, 80
        %v1220 = vpop.permute.xlu0 %1219
        %v1222 = vsel %vm742, %v1218, 0
        %v1225 = vsel %vm742, %v1220, 0
        %1227 = vmatprep.subr.bf16.mxu0 0
        %1228 = vmatpush1.bf16.xpose.msra.mxu0 0
        %1229 = vmatprep.subr.bf16.mxu0 0
        %1230 = vmatpush1.bf16.xpose.msra.mxu0 0
        %1231 = vmatprep.subr.bf16.mxu0 0
        %1232 = vmatpush1.bf16.xpose.msra.mxu0 0
        %1233 = vmatprep.subr.bf16.mxu0 0
        %1234 = vmatpush1.bf16.xpose.msra.mxu0 0
        %1235 = vmatprep.subr.bf16.mxu0 0
        %1236 = vmatpush1.bf16.xpose.msra.mxu0 0
        %1237 = vmatprep.subr.bf16.mxu0 0
        %1238 = vmatpush1.bf16.xpose.msra.mxu0 0
        %1239 = vmatprep.subr.bf16.mxu0 0
        %1240 = vmatpush1.bf16.xpose.msra.mxu0 0
        %1241 = vmatprep.subr.bf16.mxu0 0
        %1242 = vmatpush1.bf16.xpose.msra.mxu0 %v1225
        %1243 = vmatprep.subr.bf16.mxu0 0
        %1244 = vmatpush2.bf16.xpose.msra.mxu0 0
        %1245 = vmatprep.subr.bf16.mxu0 0
        %1246 = vmatpush2.bf16.xpose.msra.mxu0 0
        %1247 = vmatprep.subr.bf16.mxu0 0
        %1248 = vmatpush2.bf16.xpose.msra.mxu0 0
        %1249 = vmatprep.subr.bf16.mxu0 0
        %1250 = vmatpush2.bf16.xpose.msra.mxu0 0
        %1251 = vmatprep.subr.bf16.mxu0 0
        %1252 = vmatpush2.bf16.xpose.msra.mxu0 0
        %1253 = vmatprep.subr.bf16.mxu0 0
        %1254 = vmatpush2.bf16.xpose.msra.mxu0 0
        %1255 = vmatprep.subr.bf16.mxu0 0
        %1256 = vmatpush2.bf16.xpose.msra.mxu0 0
        %1257 = vmatprep.subr.bf16.mxu0 0
        %1258 = vmatpush2.bf16.xpose.msra.mxu0 0
        %1259 = vmatprep.mubr.bf16.mxu0 0
        %1260 = vmatmul.mubr.bf16.gmra.mxu0 %v1222
        %v1261 = vpop.f32.mrf.mxu0
        %v1262 = vadd.f32 0.0, %v1261
        %v1263 = vpop.f32.mrf.mxu0
        %v1264 = vpop.f32.mrf.mxu0
        %v1265 = vpop.f32.mrf.mxu0
        %1266 = vdwg.mxu0
        %1267 = vrot.lane.b32.xlu0 %v736, 112
        %v1268 = vpop.permute.xlu0 %1267
        %1269 = vrot.lane.b32.xlu0 %v738, 80
        %v1270 = vpop.permute.xlu0 %1269
        %v1272 = vsel %vm742, %v1268, 0
        %v1275 = vsel %vm742, %v1270, 0
        %1277 = vmatprep.subr.bf16.mxu0 0
        %1278 = vmatpush1.bf16.xpose.msra.mxu0 0
        %1279 = vmatprep.subr.bf16.mxu0 0
        %1280 = vmatpush1.bf16.xpose.msra.mxu0 0
        %1281 = vmatprep.subr.bf16.mxu0 0
        %1282 = vmatpush1.bf16.xpose.msra.mxu0 0
        %1283 = vmatprep.subr.bf16.mxu0 0
        %1284 = vmatpush1.bf16.xpose.msra.mxu0 0
        %1285 = vmatprep.subr.bf16.mxu0 0
        %1286 = vmatpush1.bf16.xpose.msra.mxu0 0
        %1287 = vmatprep.subr.bf16.mxu0 0
        %1288 = vmatpush1.bf16.xpose.msra.mxu0 0
        %1289 = vmatprep.subr.bf16.mxu0 0
        %1290 = vmatpush1.bf16.xpose.msra.mxu0 0
        %1291 = vmatprep.subr.bf16.mxu0 0
        %1292 = vmatpush1.bf16.xpose.msra.mxu0 %v1275
        %1293 = vmatprep.subr.bf16.mxu0 0
        %1294 = vmatpush2.bf16.xpose.msra.mxu0 0
        %1295 = vmatprep.subr.bf16.mxu0 0
        %1296 = vmatpush2.bf16.xpose.msra.mxu0 0
        %1297 = vmatprep.subr.bf16.mxu0 0
        %1298 = vmatpush2.bf16.xpose.msra.mxu0 0
        %1299 = vmatprep.subr.bf16.mxu0 0
        %1300 = vmatpush2.bf16.xpose.msra.mxu0 0
        %1301 = vmatprep.subr.bf16.mxu0 0
        %1302 = vmatpush2.bf16.xpose.msra.mxu0 0
        %1303 = vmatprep.subr.bf16.mxu0 0
        %1304 = vmatpush2.bf16.xpose.msra.mxu0 0
        %1305 = vmatprep.subr.bf16.mxu0 0
        %1306 = vmatpush2.bf16.xpose.msra.mxu0 0
        %1307 = vmatprep.subr.bf16.mxu0 0
        %1308 = vmatpush2.bf16.xpose.msra.mxu0 0
        %1309 = vmatprep.mubr.bf16.mxu0 0
        %1310 = vmatmul.mubr.bf16.gmra.mxu0 %v1272
        %v1311 = vpop.f32.mrf.mxu0
        %v1312 = vadd.f32 0.0, %v1311
        %v1313 = vpop.f32.mrf.mxu0
        %v1314 = vpop.f32.mrf.mxu0
        %v1315 = vpop.f32.mrf.mxu0
        %1316 = vdwg.mxu0
        %v1317 = vsel %vm842, %v1262, -1e+09
        %v1318 = vsel %vm843, %v1312, -1e+09
        %v1319 = vsel %vm742, %v1317, -inf
        %1320 = vmax.xlane.f32.xlu0 %v1319
        %v1321 = vpop.xlane.xlu0 %1320
        %v1322 = vsel %vm742, %v1318, -inf
        %1323 = vmax.xlane.f32.xlu0 %v1322
        %v1324 = vpop.xlane.xlu0 %1323
        %v1325 = vsub.f32 %v1317, %v1321
        %v1326 = vsub.f32 %v1318, %v1324
        %v1327 = vmul.f32 %v1325, 1.442695
        %v1328 = vpow.pop %v1327
        %v1329 = vmul.f32 %v1326, 1.442695
        %v1330 = vpow.pop %v1329
        %v1331 = vsel %vm742, %v1328, 0.0
        %1332 = vadd.xlane.f32.xlu0 %v1331
        %v1333 = vpop.xlane.xlu0 %1332
        %v1334 = vsel %vm742, %v1330, 0.0
        %1335 = vadd.xlane.f32.xlu0 %v1334
        %v1336 = vpop.xlane.xlu0 %1335
        %v1337 = vrcp.pop %v1333
        %v1338 = vrcp.pop %v1336
        %v1339 = vmul.f32 %v1328, %v1337
        %v1340 = vmul.f32 %v1330, %v1338
        %v1341 = vpack.c.bf16 %v1339, %v1339
        %v1342 = vpack.c.bf16 %v1340, %v1340
        %1343 = vrot.lane.b32.xlu0 %v737, 48
        %v1344 = vpop.permute.xlu0 %1343
        %v1346 = vsel %vm742, %v1341, 0
        %v1349 = vsel %vm875, %v1344, 0
        %1351 = vmatprep.subr.bf16.mxu0 0
        %1352 = vmatpush1.bf16.msra.mxu0 0
        %1353 = vmatprep.subr.bf16.mxu0 0
        %1354 = vmatpush1.bf16.msra.mxu0 0
        %1355 = vmatprep.subr.bf16.mxu0 0
        %1356 = vmatpush1.bf16.msra.mxu0 0
        %1357 = vmatprep.subr.bf16.mxu0 0
        %1358 = vmatpush1.bf16.msra.mxu0 0
        %1359 = vmatprep.subr.bf16.mxu0 0
        %1360 = vmatpush1.bf16.msra.mxu0 0
        %1361 = vmatprep.subr.bf16.mxu0 0
        %1362 = vmatpush1.bf16.msra.mxu0 0
        %1363 = vmatprep.subr.bf16.mxu0 0
        %1364 = vmatpush1.bf16.msra.mxu0 0
        %1365 = vmatprep.subr.bf16.mxu0 0
        %1366 = vmatpush1.bf16.msra.mxu0 %v1349
        %1367 = vmatprep.subr.bf16.mxu0 0
        %1368 = vmatpush2.bf16.msra.mxu0 0
        %1369 = vmatprep.subr.bf16.mxu0 0
        %1370 = vmatpush2.bf16.msra.mxu0 0
        %1371 = vmatprep.subr.bf16.mxu0 0
        %1372 = vmatpush2.bf16.msra.mxu0 0
        %1373 = vmatprep.subr.bf16.mxu0 0
        %1374 = vmatpush2.bf16.msra.mxu0 0
        %1375 = vmatprep.subr.bf16.mxu0 0
        %1376 = vmatpush2.bf16.msra.mxu0 0
        %1377 = vmatprep.subr.bf16.mxu0 0
        %1378 = vmatpush2.bf16.msra.mxu0 0
        %1379 = vmatprep.subr.bf16.mxu0 0
        %1380 = vmatpush2.bf16.msra.mxu0 0
        %1381 = vmatprep.subr.bf16.mxu0 0
        %1382 = vmatpush2.bf16.msra.mxu0 0
        %1383 = vmatprep.mubr.bf16.mxu0 0
        %1384 = vmatmul.mubr.bf16.gmra.mxu0 %v1346
        %v1385 = vpop.f32.mrf.mxu0
        %v1386 = vadd.f32 0.0, %v1385
        %v1387 = vpop.f32.mrf.mxu0
        %v1388 = vpop.f32.mrf.mxu0
        %v1389 = vpop.f32.mrf.mxu0
        %1390 = vdwg.mxu0
        %1391 = vrot.lane.b32.xlu0 %v738, 48
        %v1392 = vpop.permute.xlu0 %1391
        %v1394 = vsel %vm742, %v1342, 0
        %v1397 = vsel %vm875, %v1392, 0
        %1399 = vmatprep.subr.bf16.mxu0 0
        %1400 = vmatpush1.bf16.msra.mxu0 0
        %1401 = vmatprep.subr.bf16.mxu0 0
        %1402 = vmatpush1.bf16.msra.mxu0 0
        %1403 = vmatprep.subr.bf16.mxu0 0
        %1404 = vmatpush1.bf16.msra.mxu0 0
        %1405 = vmatprep.subr.bf16.mxu0 0
        %1406 = vmatpush1.bf16.msra.mxu0 0
        %1407 = vmatprep.subr.bf16.mxu0 0
        %1408 = vmatpush1.bf16.msra.mxu0 0
        %1409 = vmatprep.subr.bf16.mxu0 0
        %1410 = vmatpush1.bf16.msra.mxu0 0
        %1411 = vmatprep.subr.bf16.mxu0 0
        %1412 = vmatpush1.bf16.msra.mxu0 0
        %1413 = vmatprep.subr.bf16.mxu0 0
        %1414 = vmatpush1.bf16.msra.mxu0 %v1397
        %1415 = vmatprep.subr.bf16.mxu0 0
        %1416 = vmatpush2.bf16.msra.mxu0 0
        %1417 = vmatprep.subr.bf16.mxu0 0
        %1418 = vmatpush2.bf16.msra.mxu0 0
        %1419 = vmatprep.subr.bf16.mxu0 0
        %1420 = vmatpush2.bf16.msra.mxu0 0
        %1421 = vmatprep.subr.bf16.mxu0 0
        %1422 = vmatpush2.bf16.msra.mxu0 0
        %1423 = vmatprep.subr.bf16.mxu0 0
        %1424 = vmatpush2.bf16.msra.mxu0 0
        %1425 = vmatprep.subr.bf16.mxu0 0
        %1426 = vmatpush2.bf16.msra.mxu0 0
        %1427 = vmatprep.subr.bf16.mxu0 0
        %1428 = vmatpush2.bf16.msra.mxu0 0
        %1429 = vmatprep.subr.bf16.mxu0 0
        %1430 = vmatpush2.bf16.msra.mxu0 0
        %1431 = vmatprep.mubr.bf16.mxu0 0
        %1432 = vmatmul.mubr.bf16.gmra.mxu0 %v1394
        %v1433 = vpop.f32.mrf.mxu0
        %v1434 = vadd.f32 0.0, %v1433
        %v1435 = vpop.f32.mrf.mxu0
        %v1436 = vpop.f32.mrf.mxu0
        %v1437 = vpop.f32.mrf.mxu0
        %1438 = vdwg.mxu0
        %v1439 = vpack.c.bf16 %v1434, %v1386
        %v1441 = vunpack.c.l.b16 %v1439
        %v1442 = vunpack.c.h.b16 %v1439
        %v1443 = vpack.c.b16 %v1441, %v1441
        %v1444 = vpack.c.b16 %v1442, %v1442
        %1445 = vrot.lane.b32.xlu0 %v1443, 16
        %v1446 = vpop.permute.xlu0 %1445
        %1447 = vrot.lane.b32.xlu0 %v1444, 16
        %v1448 = vpop.permute.xlu0 %1447
        %vm1451 = vcmask 191616
        %1452 = vst.msk [vmem:[#allocation4] sm:$0xf] %vm1451, %v1446
        %1453 = vst.msk [vmem:[#allocation4 + $0x4] sm:$0xf] %vm1451, %v1448
        %1454 = vrot.lane.b32.xlu0 %v735, 104
        %v1455 = vpop.permute.xlu0 %1454
        %1456 = vrot.lane.b32.xlu0 %v737, 72
        %v1457 = vpop.permute.xlu0 %1456
        %v1459 = vsel %vm742, %v1455, 0
        %v1462 = vsel %vm742, %v1457, 0
        %1464 = vmatprep.subr.bf16.mxu0 0
        %1465 = vmatpush1.bf16.xpose.msra.mxu0 0
        %1466 = vmatprep.subr.bf16.mxu0 0
        %1467 = vmatpush1.bf16.xpose.msra.mxu0 0
        %1468 = vmatprep.subr.bf16.mxu0 0
        %1469 = vmatpush1.bf16.xpose.msra.mxu0 0
        %1470 = vmatprep.subr.bf16.mxu0 0
        %1471 = vmatpush1.bf16.xpose.msra.mxu0 0
        %1472 = vmatprep.subr.bf16.mxu0 0
        %1473 = vmatpush1.bf16.xpose.msra.mxu0 0
        %1474 = vmatprep.subr.bf16.mxu0 0
        %1475 = vmatpush1.bf16.xpose.msra.mxu0 0
        %1476 = vmatprep.subr.bf16.mxu0 0
        %1477 = vmatpush1.bf16.xpose.msra.mxu0 0
        %1478 = vmatprep.subr.bf16.mxu0 0
        %1479 = vmatpush1.bf16.xpose.msra.mxu0 %v1462
        %1480 = vmatprep.subr.bf16.mxu0 0
        %1481 = vmatpush2.bf16.xpose.msra.mxu0 0
        %1482 = vmatprep.subr.bf16.mxu0 0
        %1483 = vmatpush2.bf16.xpose.msra.mxu0 0
        %1484 = vmatprep.subr.bf16.mxu0 0
        %1485 = vmatpush2.bf16.xpose.msra.mxu0 0
        %1486 = vmatprep.subr.bf16.mxu0 0
        %1487 = vmatpush2.bf16.xpose.msra.mxu0 0
        %1488 = vmatprep.subr.bf16.mxu0 0
        %1489 = vmatpush2.bf16.xpose.msra.mxu0 0
        %1490 = vmatprep.subr.bf16.mxu0 0
        %1491 = vmatpush2.bf16.xpose.msra.mxu0 0
        %1492 = vmatprep.subr.bf16.mxu0 0
        %1493 = vmatpush2.bf16.xpose.msra.mxu0 0
        %1494 = vmatprep.subr.bf16.mxu0 0
        %1495 = vmatpush2.bf16.xpose.msra.mxu0 0
        %1496 = vmatprep.mubr.bf16.mxu0 0
        %1497 = vmatmul.mubr.bf16.gmra.mxu0 %v1459
        %v1498 = vpop.f32.mrf.mxu0
        %v1499 = vadd.f32 0.0, %v1498
        %v1500 = vpop.f32.mrf.mxu0
        %v1501 = vpop.f32.mrf.mxu0
        %v1502 = vpop.f32.mrf.mxu0
        %1503 = vdwg.mxu0
        %1504 = vrot.lane.b32.xlu0 %v736, 104
        %v1505 = vpop.permute.xlu0 %1504
        %1506 = vrot.lane.b32.xlu0 %v738, 72
        %v1507 = vpop.permute.xlu0 %1506
        %v1509 = vsel %vm742, %v1505, 0
        %v1512 = vsel %vm742, %v1507, 0
        %1514 = vmatprep.subr.bf16.mxu0 0
        %1515 = vmatpush1.bf16.xpose.msra.mxu0 0
        %1516 = vmatprep.subr.bf16.mxu0 0
        %1517 = vmatpush1.bf16.xpose.msra.mxu0 0
        %1518 = vmatprep.subr.bf16.mxu0 0
        %1519 = vmatpush1.bf16.xpose.msra.mxu0 0
        %1520 = vmatprep.subr.bf16.mxu0 0
        %1521 = vmatpush1.bf16.xpose.msra.mxu0 0
        %1522 = vmatprep.subr.bf16.mxu0 0
        %1523 = vmatpush1.bf16.xpose.msra.mxu0 0
        %1524 = vmatprep.subr.bf16.mxu0 0
        %1525 = vmatpush1.bf16.xpose.msra.mxu0 0
        %1526 = vmatprep.subr.bf16.mxu0 0
        %1527 = vmatpush1.bf16.xpose.msra.mxu0 0
        %1528 = vmatprep.subr.bf16.mxu0 0
        %1529 = vmatpush1.bf16.xpose.msra.mxu0 %v1512
        %1530 = vmatprep.subr.bf16.mxu0 0
        %1531 = vmatpush2.bf16.xpose.msra.mxu0 0
        %1532 = vmatprep.subr.bf16.mxu0 0
        %1533 = vmatpush2.bf16.xpose.msra.mxu0 0
        %1534 = vmatprep.subr.bf16.mxu0 0
        %1535 = vmatpush2.bf16.xpose.msra.mxu0 0
        %1536 = vmatprep.subr.bf16.mxu0 0
        %1537 = vmatpush2.bf16.xpose.msra.mxu0 0
        %1538 = vmatprep.subr.bf16.mxu0 0
        %1539 = vmatpush2.bf16.xpose.msra.mxu0 0
        %1540 = vmatprep.subr.bf16.mxu0 0
        %1541 = vmatpush2.bf16.xpose.msra.mxu0 0
        %1542 = vmatprep.subr.bf16.mxu0 0
        %1543 = vmatpush2.bf16.xpose.msra.mxu0 0
        %1544 = vmatprep.subr.bf16.mxu0 0
        %1545 = vmatpush2.bf16.xpose.msra.mxu0 0
        %1546 = vmatprep.mubr.bf16.mxu0 0
        %1547 = vmatmul.mubr.bf16.gmra.mxu0 %v1509
        %v1548 = vpop.f32.mrf.mxu0
        %v1549 = vadd.f32 0.0, %v1548
        %v1550 = vpop.f32.mrf.mxu0
        %v1551 = vpop.f32.mrf.mxu0
        %v1552 = vpop.f32.mrf.mxu0
        %1553 = vdwg.mxu0
        %v1554 = vsel %vm842, %v1499, -1e+09
        %v1555 = vsel %vm843, %v1549, -1e+09
        %v1556 = vsel %vm742, %v1554, -inf
        %1557 = vmax.xlane.f32.xlu0 %v1556
        %v1558 = vpop.xlane.xlu0 %1557
        %v1559 = vsel %vm742, %v1555, -inf
        %1560 = vmax.xlane.f32.xlu0 %v1559
        %v1561 = vpop.xlane.xlu0 %1560
        %v1562 = vsub.f32 %v1554, %v1558
        %v1563 = vsub.f32 %v1555, %v1561
        %v1564 = vmul.f32 %v1562, 1.442695
        %v1565 = vpow.pop %v1564
        %v1566 = vmul.f32 %v1563, 1.442695
        %v1567 = vpow.pop %v1566
        %v1568 = vsel %vm742, %v1565, 0.0
        %1569 = vadd.xlane.f32.xlu0 %v1568
        %v1570 = vpop.xlane.xlu0 %1569
        %v1571 = vsel %vm742, %v1567, 0.0
        %1572 = vadd.xlane.f32.xlu0 %v1571
        %v1573 = vpop.xlane.xlu0 %1572
        %v1574 = vrcp.pop %v1570
        %v1575 = vrcp.pop %v1573
        %v1576 = vmul.f32 %v1565, %v1574
        %v1577 = vmul.f32 %v1567, %v1575
        %v1578 = vpack.c.bf16 %v1576, %v1576
        %v1579 = vpack.c.bf16 %v1577, %v1577
        %1580 = vrot.lane.b32.xlu0 %v737, 40
        %v1581 = vpop.permute.xlu0 %1580
        %v1583 = vsel %vm742, %v1578, 0
        %v1586 = vsel %vm875, %v1581, 0
        %1588 = vmatprep.subr.bf16.mxu0 0
        %1589 = vmatpush1.bf16.msra.mxu0 0
        %1590 = vmatprep.subr.bf16.mxu0 0
        %1591 = vmatpush1.bf16.msra.mxu0 0
        %1592 = vmatprep.subr.bf16.mxu0 0
        %1593 = vmatpush1.bf16.msra.mxu0 0
        %1594 = vmatprep.subr.bf16.mxu0 0
        %1595 = vmatpush1.bf16.msra.mxu0 0
        %1596 = vmatprep.subr.bf16.mxu0 0
        %1597 = vmatpush1.bf16.msra.mxu0 0
        %1598 = vmatprep.subr.bf16.mxu0 0
        %1599 = vmatpush1.bf16.msra.mxu0 0
        %1600 = vmatprep.subr.bf16.mxu0 0
        %1601 = vmatpush1.bf16.msra.mxu0 0
        %1602 = vmatprep.subr.bf16.mxu0 0
        %1603 = vmatpush1.bf16.msra.mxu0 %v1586
        %1604 = vmatprep.subr.bf16.mxu0 0
        %1605 = vmatpush2.bf16.msra.mxu0 0
        %1606 = vmatprep.subr.bf16.mxu0 0
        %1607 = vmatpush2.bf16.msra.mxu0 0
        %1608 = vmatprep.subr.bf16.mxu0 0
        %1609 = vmatpush2.bf16.msra.mxu0 0
        %1610 = vmatprep.subr.bf16.mxu0 0
        %1611 = vmatpush2.bf16.msra.mxu0 0
        %1612 = vmatprep.subr.bf16.mxu0 0
        %1613 = vmatpush2.bf16.msra.mxu0 0
        %1614 = vmatprep.subr.bf16.mxu0 0
        %1615 = vmatpush2.bf16.msra.mxu0 0
        %1616 = vmatprep.subr.bf16.mxu0 0
        %1617 = vmatpush2.bf16.msra.mxu0 0
        %1618 = vmatprep.subr.bf16.mxu0 0
        %1619 = vmatpush2.bf16.msra.mxu0 0
        %1620 = vmatprep.mubr.bf16.mxu0 0
        %1621 = vmatmul.mubr.bf16.gmra.mxu0 %v1583
        %v1622 = vpop.f32.mrf.mxu0
        %v1623 = vadd.f32 0.0, %v1622
        %v1624 = vpop.f32.mrf.mxu0
        %v1625 = vpop.f32.mrf.mxu0
        %v1626 = vpop.f32.mrf.mxu0
        %1627 = vdwg.mxu0
        %1628 = vrot.lane.b32.xlu0 %v738, 40
        %v1629 = vpop.permute.xlu0 %1628
        %v1631 = vsel %vm742, %v1579, 0
        %v1634 = vsel %vm875, %v1629, 0
        %1636 = vmatprep.subr.bf16.mxu0 0
        %1637 = vmatpush1.bf16.msra.mxu0 0
        %1638 = vmatprep.subr.bf16.mxu0 0
        %1639 = vmatpush1.bf16.msra.mxu0 0
        %1640 = vmatprep.subr.bf16.mxu0 0
        %1641 = vmatpush1.bf16.msra.mxu0 0
        %1642 = vmatprep.subr.bf16.mxu0 0
        %1643 = vmatpush1.bf16.msra.mxu0 0
        %1644 = vmatprep.subr.bf16.mxu0 0
        %1645 = vmatpush1.bf16.msra.mxu0 0
        %1646 = vmatprep.subr.bf16.mxu0 0
        %1647 = vmatpush1.bf16.msra.mxu0 0
        %1648 = vmatprep.subr.bf16.mxu0 0
        %1649 = vmatpush1.bf16.msra.mxu0 0
        %1650 = vmatprep.subr.bf16.mxu0 0
        %1651 = vmatpush1.bf16.msra.mxu0 %v1634
        %1652 = vmatprep.subr.bf16.mxu0 0
        %1653 = vmatpush2.bf16.msra.mxu0 0
        %1654 = vmatprep.subr.bf16.mxu0 0
        %1655 = vmatpush2.bf16.msra.mxu0 0
        %1656 = vmatprep.subr.bf16.mxu0 0
        %1657 = vmatpush2.bf16.msra.mxu0 0
        %1658 = vmatprep.subr.bf16.mxu0 0
        %1659 = vmatpush2.bf16.msra.mxu0 0
        %1660 = vmatprep.subr.bf16.mxu0 0
        %1661 = vmatpush2.bf16.msra.mxu0 0
        %1662 = vmatprep.subr.bf16.mxu0 0
        %1663 = vmatpush2.bf16.msra.mxu0 0
        %1664 = vmatprep.subr.bf16.mxu0 0
        %1665 = vmatpush2.bf16.msra.mxu0 0
        %1666 = vmatprep.subr.bf16.mxu0 0
        %1667 = vmatpush2.bf16.msra.mxu0 0
        %1668 = vmatprep.mubr.bf16.mxu0 0
        %1669 = vmatmul.mubr.bf16.gmra.mxu0 %v1631
        %v1670 = vpop.f32.mrf.mxu0
        %v1671 = vadd.f32 0.0, %v1670
        %v1672 = vpop.f32.mrf.mxu0
        %v1673 = vpop.f32.mrf.mxu0
        %v1674 = vpop.f32.mrf.mxu0
        %1675 = vdwg.mxu0
        %v1676 = vpack.c.bf16 %v1671, %v1623
        %v1678 = vunpack.c.l.b16 %v1676
        %v1679 = vunpack.c.h.b16 %v1676
        %v1680 = vpack.c.b16 %v1678, %v1678
        %v1681 = vpack.c.b16 %v1679, %v1679
        %1682 = vrot.lane.b32.xlu0 %v1680, 24
        %v1683 = vpop.permute.xlu0 %1682
        %1684 = vrot.lane.b32.xlu0 %v1681, 24
        %v1685 = vpop.permute.xlu0 %1684
        %vm1688 = vcmask 257216
        %1689 = vst.msk [vmem:[#allocation4] sm:$0xf] %vm1688, %v1683
        %1690 = vst.msk [vmem:[#allocation4 + $0x4] sm:$0xf] %vm1688, %v1685
        %v1691 = vld [vmem:[#allocation2] sm:$0xff]
        %v1692 = vld [vmem:[#allocation2 + $0x8] sm:$0xff]
        %v1693 = vld [vmem:[#allocation4] sm:$0xf]
        %v1694 = vld [vmem:[#allocation4 + $0x4] sm:$0xf]
        %v1695 = vld [vmem:[#allocation8] sm:$0xf]
        %v1696 = vld [vmem:[#allocation8 + $0x4] sm:$0xf]
        %v1697 = vld [vmem:[#allocation8 + $0x8] sm:$0xf]
        %v1698 = vld [vmem:[#allocation8 + $0xc] sm:$0xf]
        %v1701 = vunpack.c.l.b16 %v1693
        %v1702 = vunpack.c.l.b16 %v1694
        %v1703 = vpack.c.b16 %v1702, %v1701
        %v1708 = vunpack.c.l.b16 %v1695
        %v1709 = vunpack.c.l.b16 %v1696
        %v1710 = vunpack.c.l.b16 %v1697
        %v1711 = vunpack.c.l.b16 %v1698
        %v1712 = vpack.c.b16 %v1709, %v1708
        %v1713 = vpack.c.b16 %v1711, %v1710
        %v1717 = vsel %vm684, %v1703, 0
        %1719 = vmatprep.subr.bf16.mxu0 0
        %1720 = vmatpush1.bf16.msra.mxu0 0
        %1721 = vmatprep.subr.bf16.mxu0 0
        %1722 = vmatpush1.bf16.msra.mxu0 0
        %1723 = vmatprep.subr.bf16.mxu0 0
        %1724 = vmatpush1.bf16.msra.mxu0 0
        %1725 = vmatprep.subr.bf16.mxu0 0
        %1726 = vmatpush1.bf16.msra.mxu0 0
        %1727 = vmatprep.subr.bf16.mxu0 0
        %1728 = vmatpush1.bf16.msra.mxu0 0
        %1729 = vmatprep.subr.bf16.mxu0 0
        %1730 = vmatpush1.bf16.msra.mxu0 0
        %1731 = vmatprep.subr.bf16.mxu0 0
        %1732 = vmatpush1.bf16.msra.mxu0 %v1713
        %1733 = vmatprep.subr.bf16.mxu0 0
        %1734 = vmatpush1.bf16.msra.mxu0 %v1712
        %1735 = vmatprep.subr.bf16.mxu0 0
        %1736 = vmatpush2.bf16.msra.mxu0 0
        %1737 = vmatprep.subr.bf16.mxu0 0
        %1738 = vmatpush2.bf16.msra.mxu0 0
        %1739 = vmatprep.subr.bf16.mxu0 0
        %1740 = vmatpush2.bf16.msra.mxu0 0
        %1741 = vmatprep.subr.bf16.mxu0 0
        %1742 = vmatpush2.bf16.msra.mxu0 0
        %1743 = vmatprep.subr.bf16.mxu0 0
        %1744 = vmatpush2.bf16.msra.mxu0 0
        %1745 = vmatprep.subr.bf16.mxu0 0
        %1746 = vmatpush2.bf16.msra.mxu0 0
        %1747 = vmatprep.subr.bf16.mxu0 0
        %1748 = vmatpush2.bf16.msra.mxu0 0
        %1749 = vmatprep.subr.bf16.mxu0 0
        %1750 = vmatpush2.bf16.msra.mxu0 0
        %1751 = vmatprep.mubr.bf16.mxu0 0
        %1752 = vmatmul.mubr.bf16.gmra.mxu0 %v1717
        %v1753 = vpop.f32.mrf.mxu0
        %v1754 = vadd.f32 0.0, %v1753
        %v1755 = vpop.f32.mrf.mxu0
        %v1756 = vpop.f32.mrf.mxu0
        %v1757 = vadd.f32 0.0, %v1756
        %v1758 = vpop.f32.mrf.mxu0
        %1759 = vdwg.mxu0
        %v1760 = vadd.f32 %v1691, %v1754
        %v1761 = vadd.f32 %v1692, %v1757
        %1762 = vst.msk [vmem:[#allocation2] sm:$0xff] %vm684, %v1760
        %1763 = vst.msk [vmem:[#allocation2 + $0x8] sm:$0xff] %vm684, %v1761
        // Predicated region
        $region105: #{tpu_custom_call.1} parent=75 // pred_check
          %p1764 = pneg %p634
        $region106: #{tpu_custom_call.1} parent=75 // pred_check_branch
          %1766 = sbr.rel (%p1764) target = $region108
        $region107: #{tpu_custom_call.1} parent=75 // pred_region
          %v1767 = vld [vmem:[%s619] sm:$0xff]
          %v1768 = vld [vmem:[%s619 + $0x8] sm:$0xff]
          %v1769 = vld [vmem:[#allocation2] sm:$0xff]
          %v1770 = vld [vmem:[#allocation2 + $0x8] sm:$0xff]
          %v1771 = vld [vmem:[%s5] sm:$0x1]
          %v1773 = vlaneseq
          %v1774 = vshrl.u32 %v1773, 7
          %v1775 = vsub.s32 0, %v1774
          %v1776 = vrot.slane %v1771, %v1775
          %v1778 = vadd.f32 %v1769, %v1776
          %v1779 = vadd.f32 %v1770, %v1776
          %v1780 = vadd.f32 %v1778, %v1767
          %v1781 = vadd.f32 %v1779, %v1768
          %v1782 = vld [vmem:[#allocation10] sm:$0x1]
          %v1783 = vld [vmem:[#allocation11] sm:$0x1]
          %v1784 = vsel %vm684, %v1780, 0.0
          %1785 = vadd.xlane.f32.xlu0 %v1784
          %v1786 = vpop.xlane.xlu0 %1785
          %v1787 = vsel %vm684, %v1781, 0.0
          %1788 = vadd.xlane.f32.xlu0 %v1787
          %v1789 = vpop.xlane.xlu0 %1788
          %v1790 = vrcp.pop 32.0
          %v1791 = vmul.f32 %v1786, %v1790
          %v1792 = vmul.f32 %v1789, %v1790
          %v1793 = vsub.f32 %v1780, %v1791
          %v1794 = vsub.f32 %v1781, %v1792
          %v1795 = vmul.f32 %v1793, %v1793
          %v1796 = vmul.f32 %v1794, %v1794
          %v1797 = vsel %vm684, %v1795, 0.0
          %1798 = vadd.xlane.f32.xlu0 %v1797
          %v1799 = vpop.xlane.xlu0 %1798
          %v1800 = vsel %vm684, %v1796, 0.0
          %1801 = vadd.xlane.f32.xlu0 %v1800
          %v1802 = vpop.xlane.xlu0 %1801
          %v1803 = vmul.f32 %v1799, %v1790
          %v1804 = vmul.f32 %v1802, %v1790
          %v1805 = vadd.f32 %v1803, 1e-05
          %v1806 = vadd.f32 %v1804, 1e-05
          %v1807 = vrsqrt.pop %v1805
          %v1808 = vrsqrt.pop %v1806
          %v1809 = vmul.f32 %v1793, %v1807
          %v1810 = vmul.f32 %v1794, %v1808
          %v1812 = vlaneseq
          %v1813 = vshrl.u32 %v1812, 7
          %v1814 = vsub.s32 0, %v1813
          %v1815 = vrot.slane %v1782, %v1814
          %v1817 = vmul.f32 %v1809, %v1815
          %v1818 = vmul.f32 %v1810, %v1815
          %v1820 = vlaneseq
          %v1821 = vshrl.u32 %v1820, 7
          %v1822 = vsub.s32 0, %v1821
          %v1823 = vrot.slane %v1783, %v1822
          %v1825 = vadd.f32 %v1817, %v1823
          %v1826 = vadd.f32 %v1818, %v1823
          %v1827 = vpack.c.bf16 %v1826, %v1825
          %v1828 = vld [vmem:[#allocation13] sm:$0xf]
          %v1829 = vld [vmem:[#allocation13 + $0x4] sm:$0xf]
          %v1830 = vld [vmem:[#allocation13 + $0x8] sm:$0xf]
          %v1831 = vld [vmem:[#allocation13 + $0xc] sm:$0xf]
          %v1832 = vld [vmem:[#allocation14] sm:$0x1]
          %v1834 = vlaneseq
          %v1835 = vshrl.u32 %v1834, 7
          %v1836 = vsub.s32 0, %v1835
          %v1837 = vrot.slane %v1832, %v1836
          %v1843 = vunpack.c.l.b16 %v1828
          %v1844 = vunpack.c.l.b16 %v1829
          %v1845 = vunpack.c.l.b16 %v1830
          %v1846 = vunpack.c.l.b16 %v1831
          %v1847 = vpack.c.b16 %v1844, %v1843
          %v1848 = vpack.c.b16 %v1846, %v1845
          %v1852 = vsel %vm684, %v1827, 0
          %1854 = vmatprep.subr.bf16.mxu0 0
          %1855 = vmatpush1.bf16.msra.mxu0 0
          %1856 = vmatprep.subr.bf16.mxu0 0
          %1857 = vmatpush1.bf16.msra.mxu0 0
          %1858 = vmatprep.subr.bf16.mxu0 0
          %1859 = vmatpush1.bf16.msra.mxu0 0
          %1860 = vmatprep.subr.bf16.mxu0 0
          %1861 = vmatpush1.bf16.msra.mxu0 0
          %1862 = vmatprep.subr.bf16.mxu0 0
          %1863 = vmatpush1.bf16.msra.mxu0 0
          %1864 = vmatprep.subr.bf16.mxu0 0
          %1865 = vmatpush1.bf16.msra.mxu0 0
          %1866 = vmatprep.subr.bf16.mxu0 0
          %1867 = vmatpush1.bf16.msra.mxu0 %v1848
          %1868 = vmatprep.subr.bf16.mxu0 0
          %1869 = vmatpush1.bf16.msra.mxu0 %v1847
          %1870 = vmatprep.subr.bf16.mxu0 0
          %1871 = vmatpush2.bf16.msra.mxu0 0
          %1872 = vmatprep.subr.bf16.mxu0 0
          %1873 = vmatpush2.bf16.msra.mxu0 0
          %1874 = vmatprep.subr.bf16.mxu0 0
          %1875 = vmatpush2.bf16.msra.mxu0 0
          %1876 = vmatprep.subr.bf16.mxu0 0
          %1877 = vmatpush2.bf16.msra.mxu0 0
          %1878 = vmatprep.subr.bf16.mxu0 0
          %1879 = vmatpush2.bf16.msra.mxu0 0
          %1880 = vmatprep.subr.bf16.mxu0 0
          %1881 = vmatpush2.bf16.msra.mxu0 0
          %1882 = vmatprep.subr.bf16.mxu0 0
          %1883 = vmatpush2.bf16.msra.mxu0 0
          %1884 = vmatprep.subr.bf16.mxu0 0
          %1885 = vmatpush2.bf16.msra.mxu0 0
          %1886 = vmatprep.mubr.bf16.mxu0 0
          %1887 = vmatmul.mubr.bf16.gmra.mxu0 %v1852
          %v1888 = vpop.f32.mrf.mxu0
          %v1889 = vadd.f32 %v1837, %v1888
          %v1890 = vpop.f32.mrf.mxu0
          %v1891 = vpop.f32.mrf.mxu0
          %v1892 = vadd.f32 %v1837, %v1891
          %v1893 = vpop.f32.mrf.mxu0
          %1894 = vdwg.mxu0
          %v1895 = vmax.f32 %v1889, 0.0
          %v1896 = vmax.f32 %v1892, 0.0
          %v1897 = vpack.c.bf16 %v1896, %v1895
          %v1898 = vld [vmem:[%s10] sm:$0xf]
          %v1899 = vld [vmem:[%s10 + $0x4] sm:$0xf]
          %v1900 = vld [vmem:[%s10 + $0x8] sm:$0xf]
          %v1901 = vld [vmem:[%s10 + $0xc] sm:$0xf]
          %v1902 = vld [vmem:[%s10 + $0x10] sm:$0xf]
          %v1903 = vld [vmem:[%s10 + $0x14] sm:$0xf]
          %v1904 = vld [vmem:[%s10 + $0x18] sm:$0xf]
          %v1905 = vld [vmem:[%s10 + $0x1c] sm:$0xf]
          %v1906 = vld [vmem:[%s11] sm:$0x1]
          %v1908 = vlaneseq
          %v1909 = vshrl.u32 %v1908, 7
          %v1910 = vsub.s32 0, %v1909
          %v1911 = vrot.slane %v1906, %v1910
          %v1921 = vunpack.c.l.b16 %v1898
          %v1922 = vunpack.c.l.b16 %v1899
          %v1923 = vunpack.c.l.b16 %v1900
          %v1924 = vunpack.c.l.b16 %v1901
          %v1925 = vunpack.c.l.b16 %v1902
          %v1926 = vunpack.c.l.b16 %v1903
          %v1927 = vunpack.c.l.b16 %v1904
          %v1928 = vunpack.c.l.b16 %v1905
          %v1929 = vpack.c.b16 %v1922, %v1921
          %v1930 = vpack.c.b16 %v1924, %v1923
          %v1931 = vpack.c.b16 %v1926, %v1925
          %v1932 = vpack.c.b16 %v1928, %v1927
          %vm1937 = vcmask 523264
          %v1939 = vsel %vm1937, %v1897, 0
          %1941 = vmatprep.subr.bf16.mxu0 0
          %1942 = vmatpush1.bf16.msra.mxu0 0
          %1943 = vmatprep.subr.bf16.mxu0 0
          %1944 = vmatpush1.bf16.msra.mxu0 0
          %1945 = vmatprep.subr.bf16.mxu0 0
          %1946 = vmatpush1.bf16.msra.mxu0 0
          %1947 = vmatprep.subr.bf16.mxu0 0
          %1948 = vmatpush1.bf16.msra.mxu0 0
          %1949 = vmatprep.subr.bf16.mxu0 0
          %1950 = vmatpush1.bf16.msra.mxu0 %v1932
          %1951 = vmatprep.subr.bf16.mxu0 0
          %1952 = vmatpush1.bf16.msra.mxu0 %v1931
          %1953 = vmatprep.subr.bf16.mxu0 0
          %1954 = vmatpush1.bf16.msra.mxu0 %v1930
          %1955 = vmatprep.subr.bf16.mxu0 0
          %1956 = vmatpush1.bf16.msra.mxu0 %v1929
          %1957 = vmatprep.subr.bf16.mxu0 0
          %1958 = vmatpush2.bf16.msra.mxu0 0
          %1959 = vmatprep.subr.bf16.mxu0 0
          %1960 = vmatpush2.bf16.msra.mxu0 0
          %1961 = vmatprep.subr.bf16.mxu0 0
          %1962 = vmatpush2.bf16.msra.mxu0 0
          %1963 = vmatprep.subr.bf16.mxu0 0
          %1964 = vmatpush2.bf16.msra.mxu0 0
          %1965 = vmatprep.subr.bf16.mxu0 0
          %1966 = vmatpush2.bf16.msra.mxu0 0
          %1967 = vmatprep.subr.bf16.mxu0 0
          %1968 = vmatpush2.bf16.msra.mxu0 0
          %1969 = vmatprep.subr.bf16.mxu0 0
          %1970 = vmatpush2.bf16.msra.mxu0 0
          %1971 = vmatprep.subr.bf16.mxu0 0
          %1972 = vmatpush2.bf16.msra.mxu0 0
          %1973 = vmatprep.mubr.bf16.mxu0 0
          %1974 = vmatmul.mubr.bf16.gmra.mxu0 %v1939
          %v1975 = vpop.f32.mrf.mxu0
          %v1976 = vadd.f32 %v1911, %v1975
          %v1977 = vpop.f32.mrf.mxu0
          %v1978 = vpop.f32.mrf.mxu0
          %v1979 = vadd.f32 %v1911, %v1978
          %v1980 = vpop.f32.mrf.mxu0
          %1981 = vdwg.mxu0
          %v1982 = vadd.f32 %v1976, %v1825
          %v1983 = vadd.f32 %v1979, %v1826
          %v1984 = vld [vmem:[%s12] sm:$0x1]
          %v1985 = vld [vmem:[%s13] sm:$0x1]
          %v1986 = vsel %vm684, %v1982, 0.0
          %1987 = vadd.xlane.f32.xlu0 %v1986
          %v1988 = vpop.xlane.xlu0 %1987
          %v1989 = vsel %vm684, %v1983, 0.0
          %1990 = vadd.xlane.f32.xlu0 %v1989
          %v1991 = vpop.xlane.xlu0 %1990
          %v1992 = vmul.f32 %v1988, %v1790
          %v1993 = vmul.f32 %v1991, %v1790
          %v1994 = vsub.f32 %v1982, %v1992
          %v1995 = vsub.f32 %v1983, %v1993
          %v1996 = vmul.f32 %v1994, %v1994
          %v1997 = vmul.f32 %v1995, %v1995
          %v1998 = vsel %vm684, %v1996, 0.0
          %1999 = vadd.xlane.f32.xlu0 %v1998
          %v2000 = vpop.xlane.xlu0 %1999
          %v2001 = vsel %vm684, %v1997, 0.0
          %2002 = vadd.xlane.f32.xlu0 %v2001
          %v2003 = vpop.xlane.xlu0 %2002
          %v2004 = vmul.f32 %v2000, %v1790
          %v2005 = vmul.f32 %v2003, %v1790
          %v2006 = vadd.f32 %v2004, 1e-05
          %v2007 = vadd.f32 %v2005, 1e-05
          %v2008 = vrsqrt.pop %v2006
          %v2009 = vrsqrt.pop %v2007
          %v2010 = vmul.f32 %v1994, %v2008
          %v2011 = vmul.f32 %v1995, %v2009
          %v2013 = vlaneseq
          %v2014 = vshrl.u32 %v2013, 7
          %v2015 = vsub.s32 0, %v2014
          %v2016 = vrot.slane %v1984, %v2015
          %v2018 = vmul.f32 %v2010, %v2016
          %v2019 = vmul.f32 %v2011, %v2016
          %v2021 = vlaneseq
          %v2022 = vshrl.u32 %v2021, 7
          %v2023 = vsub.s32 0, %v2022
          %v2024 = vrot.slane %v1985, %v2023
          %v2026 = vadd.f32 %v2018, %v2024
          %v2027 = vadd.f32 %v2019, %v2024
          %2028 = vst.msk [vmem:[%s614] sm:$0xff] %vm684, %v2026
          %2029 = vst.msk [vmem:[%s614 + $0x8] sm:$0xff] %vm684, %v2027
        $region108: #{tpu_custom_call.1} parent=75 // pred_fallthru
          _
        %s2030 = sand.u32 %s373, 1
        %s2031 = scalar_lea.sflag [#allocation7], %s2030
        %s2032 = sand.u32 %s373, 1
        %s2033 = smul.addr %s2032, 16
        %s2034 = scalar_lea.vmem [#allocation16], %s2033
        // Predicated region
        $region109: #{tpu_custom_call.1} parent=75 // pred_check
          %p2035 = pneg %p383
        $region110: #{tpu_custom_call.1} parent=75 // pred_check_branch
          %2037 = sbr.rel (%p2035) target = $region112
        $region111: #{tpu_custom_call.1} parent=75 // pred_region
          %s2038 = smul.u32 2, %s38
          %s2040 = ssub.s32 256, 256
          %2041 = vsyncadd %s2031, %s2040
          %s2042 = smul.addr %s2038, 128
          %s2043 = scalar_lea.hbm %s14, %s2042
          %s2044 = sshll.u32 %s2034, 4
          %s2045 = int_to_ptr.vmem [resolvable:$true] %s2044
          %2050 = dma.vmem_to_hbm [thread:$0]  %s2045, 256, %s2043, %s2031, 128, 128, 8
        $region112: #{tpu_custom_call.1} parent=75 // pred_fallthru
          _
      $region76: #{tpu_custom_call.1} parent=5 // pred_fallthru
        _
      %p2051 = scmp.le.s32.totalorder 2, %s29
      // Predicated region
      $region113: #{tpu_custom_call.1} parent=5 // pred_check
        %p2052 = pneg %p2051
      $region114: #{tpu_custom_call.1} parent=5 // pred_check_branch
        %2054 = sbr.rel (%p2052) target = $region116
      $region115: #{tpu_custom_call.1} parent=5 // pred_region
        %s2055 = ssub.s32 %s29, 2
        // Predicated region
        $region117: #{tpu_custom_call.1} parent=115 // pred_check
          %p2056 = pneg %p389
        $region118: #{tpu_custom_call.1} parent=115 // pred_check_branch
          %2058 = sbr.rel (%p2056) target = $region120
        $region119: #{tpu_custom_call.1} parent=115 // pred_region
          %s2059 = sand.u32 %s374, 1
          %s2060 = scalar_lea.sflag [#allocation7], %s2059
          %s2061 = sand.u32 %s374, 1
          %s2062 = smul.addr %s2061, 16
          %s2063 = scalar_lea.vmem [#allocation16], %s2062
          %2064 = dma.done %s2060, 256
        $region120: #{tpu_custom_call.1} parent=115 // pred_fallthru
          _
      $region116: #{tpu_custom_call.1} parent=5 // pred_fallthru
        _
    $region6: #{tpu_custom_call.1} parent=1 // loop_footer
      %s33 = sadd.s32 1, %s29
    $region7: #{tpu_custom_call.1} parent=1 // loop_footer_branch
      %28 = sbr.rel target = $region3
    $region8: #{tpu_custom_call.1} parent=1 // loop_exit
      _
    %2065 = vsyncpa [#allocation6], 1
    %s2066 = scalar_lea.sflag [#allocation6], 1
    %2067 = vsyncpa %s2066, 1
    %2068 = vsyncpa [#allocation9], 1
    %2069 = vsyncpa [#allocation12], 1
    %2070 = vsyncpa [#allocation15], 1
    %2071 = vsyncpa [#allocation7], 1
    %s2072 = scalar_lea.sflag [#allocation7], 1
    %2073 = vsyncpa %s2072, 1

// kernel: tpu_custom_call.1
$region0: #{tpu_custom_call.1}
  #allocation0 [shape = 'u32[]', space=smem, size = 0x4, offset = 0x4, fixed_abs, tag = 'smem constant byte address 0x4 - core index']
  #allocation1 [shape = 'u32[144,128]{1,0:T(1,128)}', space=vmem, size = 0x12000, scoped, tag = 'internal scratch']
  #allocation2 [shape = 'f32[16,32]{1,0:T(8,128)}', space=vmem, size = 0x2000, scoped, tag = 'scratch operand']
  #allocation3 [shape = 'bf16[16,32]{1,0:T(8,128)(2,1)}', space=vmem, size = 0x1000, scoped, tag = 'scratch operand']
  #allocation4 [shape = 'bf16[16,32]{1,0:T(8,128)(2,1)}', space=vmem, size = 0x1000, scoped, tag = 'scratch operand']
  %s0 = inlined_call_operand.vmem [shape: f32[4,8,32], index: 0, kind: input, shape index: {}]
  %s1 = inlined_call_operand.hbm [shape: s8[4,8,8], index: 1, kind: input, shape index: {}]
  %s2 = inlined_call_operand.vmem [shape: bf16[1,32,96], index: 2, kind: input, shape index: {}]
  %s3 = inlined_call_operand.vmem [shape: f32[1,1,96], index: 3, kind: input, shape index: {}]
  %s4 = inlined_call_operand.hbm [shape: bf16[1,32,32], index: 4, kind: input, shape index: {}]
  %s5 = inlined_call_operand.vmem [shape: f32[1,32], index: 5, kind: input, shape index: {}]
  %s6 = inlined_call_operand.hbm [shape: f32[1,32], index: 6, kind: input, shape index: {}]
  %s7 = inlined_call_operand.hbm [shape: f32[1,32], index: 7, kind: input, shape index: {}]
  %s8 = inlined_call_operand.hbm [shape: bf16[32,64], index: 8, kind: input, shape index: {}]
  %s9 = inlined_call_operand.hbm [shape: f32[1,64], index: 9, kind: input, shape index: {}]
  %s10 = inlined_call_operand.vmem [shape: bf16[64,32], index: 10, kind: input, shape index: {}]
  %s11 = inlined_call_operand.vmem [shape: f32[1,32], index: 11, kind: input, shape index: {}]
  %s12 = inlined_call_operand.vmem [shape: f32[1,32], index: 12, kind: input, shape index: {}]
  %s13 = inlined_call_operand.vmem [shape: f32[1,32], index: 13, kind: input, shape index: {}]
  %s14 = inlined_call_operand.hbm [shape: f32[4,8,32], index: 14, kind: output, shape index: {}]
  %s15 = sld [smem:[#allocation0]]
  $region121: #{tpu_custom_call.1} parent=0
    _
  %s17 = ssub.s32 1, %s15
  %s18 = scalar_select 0, %s17, %s15
  $region1: #{tpu_custom_call.1} parent=0
    #allocation5 [shape = 'u8[4096]{0}', space=vmem, size = 0x1000, scoped, tag = 'input window, operand 1']
    #allocation6 [shape = 's32[2]{0}', space=sflag, size = 0x8, scoped, tag = 'scoped memory for tpu_custom_call.1']
    #allocation7 [shape = 's32[2]{0}', space=sflag, size = 0x8, scoped, tag = 'scoped memory for tpu_custom_call.1']
    #allocation8 [shape = 'u8[8192]{0}', space=vmem, size = 0x2000, scoped, tag = 'input window, operand 4, single buffered']
    #allocation9 [shape = 's32[1]{0}', space=sflag, size = 0x4, scoped, tag = 'scoped memory for tpu_custom_call.1']
    #allocation10 [shape = 'u8[512]{0}', space=vmem, size = 0x400, scoped, tag = 'input window, operand 6, single buffered']
    #allocation11 [shape = 'u8[512]{0}', space=vmem, size = 0x400, scoped, tag = 'input window, operand 7, single buffered']
    #allocation12 [shape = 's32[1]{0}', space=sflag, size = 0x4, scoped, tag = 'scoped memory for tpu_custom_call.1']
    #allocation13 [shape = 'u8[8192]{0}', space=vmem, size = 0x2000, scoped, tag = 'input window, operand 8, single buffered']
    #allocation14 [shape = 'u8[512]{0}', space=vmem, size = 0x400, scoped, tag = 'input window, operand 9, single buffered']
    #allocation15 [shape = 's32[1]{0}', space=sflag, size = 0x4, scoped, tag = 'scoped memory for tpu_custom_call.1']
    #allocation16 [shape = 'u8[16384]{0}', space=vmem, size = 0x4000, scoped, tag = 'output window, operand 0']
    %19 = vsyncpa [#allocation6], 0
    %s20 = scalar_lea.sflag [#allocation6], 1
    %21 = vsyncpa %s20, 0
    %22 = vsyncpa [#allocation9], 0
    %23 = vsyncpa [#allocation12], 0
    %24 = vsyncpa [#allocation15], 0
    %25 = vsyncpa [#allocation7], 0
    %s26 = scalar_lea.sflag [#allocation7], 1
    %27 = vsyncpa %s26, 0
    loop: start=0, step=1, limit=4
    $region2: #{tpu_custom_call.1} parent=1 // loop_pre_header
      _
    $region3: #{tpu_custom_call.1} parent=1 // loop_header
      %s29 = sphi 0, %s33
      %p30 = scmp.ge.s32.totalorder %s29, 4
      %s36 = sphi 0, %s48
      %s37 = sphi 0, %s44
      %s38 = sphi 0, %s36
      %s39 = sphi 0, %s37
      %s40 = sphi 0, %s38
      %s41 = sphi 0, %s39
      %s51 = sphi 0, %s53
      %s54 = sphi 0, %s51
      %s55 = sphi 0, %s54
      %s71 = sphi 0, %s55
      %s77 = sphi 0, %s79
      %s80 = sphi 0, %s77
      %s81 = sphi 0, %s80
      %s97 = sphi 0, %s81
      %s103 = sphi 0, %s105
      %s106 = sphi 0, %s103
      %s107 = sphi 0, %s106
      %s123 = sphi 0, %s107
      %s129 = sphi 0, %s131
      %s132 = sphi 0, %s129
      %s133 = sphi 0, %s132
      %s149 = sphi 0, %s133
      %s155 = sphi 0, %s157
      %s158 = sphi 0, %s155
      %s159 = sphi 0, %s158
      %s175 = sphi 0, %s159
      %s179 = sphi 0, %s179
      %s181 = sphi 0, %s179
      %s182 = sphi 0, %s181
      %s196 = sphi 0, %s182
      %s200 = sphi 0, %s200
      %s202 = sphi 0, %s200
      %s203 = sphi 0, %s202
      %s217 = sphi 0, %s203
      %s221 = sphi 0, %s221
      %s223 = sphi 0, %s221
      %s224 = sphi 0, %s223
      %s238 = sphi 0, %s224
      %s242 = sphi 0, %s242
      %s244 = sphi 0, %s242
      %s245 = sphi 0, %s244
      %s259 = sphi 0, %s245
      %s263 = sphi 0, %s263
      %s265 = sphi 0, %s263
      %s266 = sphi 0, %s265
      %s280 = sphi 0, %s266
      %s284 = sphi 0, %s284
      %s286 = sphi 0, %s284
      %s287 = sphi 0, %s286
      %s301 = sphi 0, %s287
      %s305 = sphi 0, %s305
      %s307 = sphi 0, %s305
      %s308 = sphi 0, %s307
      %s322 = sphi 0, %s308
      %s326 = sphi 0, %s326
      %s328 = sphi 0, %s326
      %s329 = sphi 0, %s328
      %s343 = sphi 0, %s329
      %s347 = sphi 0, %s347
      %s349 = sphi 0, %s347
      %s350 = sphi 0, %s349
      %s364 = sphi 0, %s350
      %s370 = sphi 0, %s372
      %s373 = sphi 0, %s370
      %s374 = sphi 0, %s373
      %s390 = sphi 0, %s374
    $region4: #{tpu_custom_call.1} parent=1 // loop_header_branch
      %32 = sbr.rel (%p30) target = $region8
    $region5: #{tpu_custom_call.1} parent=1 // loop_body
      %s34 = ssub.s32 %s29, 1
      %s35 = ssub.s32 %s29, 2
      %s42 = sadd.s32 1, %s37
      %p43 = scmp.ge.s32.totalorder %s42, 1
      %s44 = scalar_select %p43, 0, %s42
      %s45 = sadd.s32 1, %s36
      %s46 = scalar_select %p43, %s45, %s36
      %p47 = scmp.ge.s32.totalorder %s46, 2
      %s48 = scalar_select %p47, 0, %s46
      %s49 = ssub.s32 %s36, %s48
      %p50 = scmp.eq.s32.totalorder %s49, 0
      %s52 = sadd.s32 %s51, 1
      %s53 = scalar_select %p50, %s51, %s52
      %p56 = pneg %p50
      %p57 = scmp.eq.s32.totalorder %s29, 1
      %p58 = por %p56, %p57
      %p59 = scmp.ne.s32.totalorder %s51, %s54
      %p60 = scmp.eq.s32.totalorder %s29, 0
      %p61 = por %p59, %p60
      %p62 = scmp.ne.s32.totalorder %s51, %s54
      %p63 = scmp.eq.s32.totalorder %s34, 1
      %p64 = por %p62, %p63
      %p65 = scmp.ne.s32.totalorder %s54, %s55
      %p66 = scmp.eq.s32.totalorder %s34, 0
      %p67 = por %p65, %p66
      %p68 = scmp.ne.s32.totalorder %s54, %s55
      %p69 = scmp.eq.s32.totalorder %s35, 1
      %p70 = por %p68, %p69
      %p72 = scmp.ne.s32.totalorder %s55, %s71
      %p73 = scmp.eq.s32.totalorder %s35, 0
      %p74 = por %p72, %p73
      %s75 = ssub.s32 %s36, %s48
      %p76 = scmp.eq.s32.totalorder %s75, 0
      %s78 = sadd.s32 %s77, 1
      %s79 = scalar_select %p76, %s77, %s78
      %p82 = pneg %p76
      %p83 = scmp.eq.s32.totalorder %s29, 1
      %p84 = por %p82, %p83
      %p85 = scmp.ne.s32.totalorder %s77, %s80
      %p86 = scmp.eq.s32.totalorder %s29, 0
      %p87 = por %p85, %p86
      %p88 = scmp.ne.s32.totalorder %s77, %s80
      %p89 = scmp.eq.s32.totalorder %s34, 1
      %p90 = por %p88, %p89
      %p91 = scmp.ne.s32.totalorder %s80, %s81
      %p92 = scmp.eq.s32.totalorder %s34, 0
      %p93 = por %p91, %p92
      %p94 = scmp.ne.s32.totalorder %s80, %s81
      %p95 = scmp.eq.s32.totalorder %s35, 1
      %p96 = por %p94, %p95
      %p98 = scmp.ne.s32.totalorder %s81, %s97
      %p99 = scmp.eq.s32.totalorder %s35, 0
      %p100 = por %p98, %p99
      %s101 = ssub.s32 %s37, %s44
      %p102 = scmp.eq.s32.totalorder %s101, 0
      %s104 = sadd.s32 %s103, 1
      %s105 = scalar_select %p102, %s103, %s104
      %p108 = pneg %p102
      %p109 = scmp.eq.s32.totalorder %s29, 1
      %p110 = por %p108, %p109
      %p111 = scmp.ne.s32.totalorder %s103, %s106
      %p112 = scmp.eq.s32.totalorder %s29, 0
      %p113 = por %p111, %p112
      %p114 = scmp.ne.s32.totalorder %s103, %s106
      %p115 = scmp.eq.s32.totalorder %s34, 1
      %p116 = por %p114, %p115
      %p117 = scmp.ne.s32.totalorder %s106, %s107
      %p118 = scmp.eq.s32.totalorder %s34, 0
      %p119 = por %p117, %p118
      %p120 = scmp.ne.s32.totalorder %s106, %s107
      %p121 = scmp.eq.s32.totalorder %s35, 1
      %p122 = por %p120, %p121
      %p124 = scmp.ne.s32.totalorder %s107, %s123
      %p125 = scmp.eq.s32.totalorder %s35, 0
      %p126 = por %p124, %p125
      %s127 = ssub.s32 %s37, %s44
      %p128 = scmp.eq.s32.totalorder %s127, 0
      %s130 = sadd.s32 %s129, 1
      %s131 = scalar_select %p128, %s129, %s130
      %p134 = pneg %p128
      %p135 = scmp.eq.s32.totalorder %s29, 1
      %p136 = por %p134, %p135
      %p137 = scmp.ne.s32.totalorder %s129, %s132
      %p138 = scmp.eq.s32.totalorder %s29, 0
      %p139 = por %p137, %p138
      %p140 = scmp.ne.s32.totalorder %s129, %s132
      %p141 = scmp.eq.s32.totalorder %s34, 1
      %p142 = por %p140, %p141
      %p143 = scmp.ne.s32.totalorder %s132, %s133
      %p144 = scmp.eq.s32.totalorder %s34, 0
      %p145 = por %p143, %p144
      %p146 = scmp.ne.s32.totalorder %s132, %s133
      %p147 = scmp.eq.s32.totalorder %s35, 1
      %p148 = por %p146, %p147
      %p150 = scmp.ne.s32.totalorder %s133, %s149
      %p151 = scmp.eq.s32.totalorder %s35, 0
      %p152 = por %p150, %p151
      %s153 = ssub.s32 %s37, %s44
      %p154 = scmp.eq.s32.totalorder %s153, 0
      %s156 = sadd.s32 %s155, 1
      %s157 = scalar_select %p154, %s155, %s156
      %p160 = pneg %p154
      %p161 = scmp.eq.s32.totalorder %s29, 1
      %p162 = por %p160, %p161
      %p163 = scmp.ne.s32.totalorder %s155, %s158
      %p164 = scmp.eq.s32.totalorder %s29, 0
      %p165 = por %p163, %p164
      %p166 = scmp.ne.s32.totalorder %s155, %s158
      %p167 = scmp.eq.s32.totalorder %s34, 1
      %p168 = por %p166, %p167
      %p169 = scmp.ne.s32.totalorder %s158, %s159
      %p170 = scmp.eq.s32.totalorder %s34, 0
      %p171 = por %p169, %p170
      %p172 = scmp.ne.s32.totalorder %s158, %s159
      %p173 = scmp.eq.s32.totalorder %s35, 1
      %p174 = por %p172, %p173
      %p176 = scmp.ne.s32.totalorder %s159, %s175
      %p177 = scmp.eq.s32.totalorder %s35, 0
      %p178 = por %p176, %p177
      %s180 = sadd.s32 %s179, 1
      %p183 = scmp.eq.s32.totalorder %s29, 1
      %p184 = scmp.ne.s32.totalorder %s179, %s181
      %p185 = scmp.eq.s32.totalorder %s29, 0
      %p186 = por %p184, %p185
      %p187 = scmp.ne.s32.totalorder %s179, %s181
      %p188 = scmp.eq.s32.totalorder %s34, 1
      %p189 = por %p187, %p188
      %p190 = scmp.ne.s32.totalorder %s181, %s182
      %p191 = scmp.eq.s32.totalorder %s34, 0
      %p192 = por %p190, %p191
      %p193 = scmp.ne.s32.totalorder %s181, %s182
      %p194 = scmp.eq.s32.totalorder %s35, 1
      %p195 = por %p193, %p194
      %p197 = scmp.ne.s32.totalorder %s182, %s196
      %p198 = scmp.eq.s32.totalorder %s35, 0
      %p199 = por %p197, %p198
      %s201 = sadd.s32 %s200, 1
      %p204 = scmp.eq.s32.totalorder %s29, 1
      %p205 = scmp.ne.s32.totalorder %s200, %s202
      %p206 = scmp.eq.s32.totalorder %s29, 0
      %p207 = por %p205, %p206
      %p208 = scmp.ne.s32.totalorder %s200, %s202
      %p209 = scmp.eq.s32.totalorder %s34, 1
      %p210 = por %p208, %p209
      %p211 = scmp.ne.s32.totalorder %s202, %s203
      %p212 = scmp.eq.s32.totalorder %s34, 0
      %p213 = por %p211, %p212
      %p214 = scmp.ne.s32.totalorder %s202, %s203
      %p215 = scmp.eq.s32.totalorder %s35, 1
      %p216 = por %p214, %p215
      %p218 = scmp.ne.s32.totalorder %s203, %s217
      %p219 = scmp.eq.s32.totalorder %s35, 0
      %p220 = por %p218, %p219
      %s222 = sadd.s32 %s221, 1
      %p225 = scmp.eq.s32.totalorder %s29, 1
      %p226 = scmp.ne.s32.totalorder %s221, %s223
      %p227 = scmp.eq.s32.totalorder %s29, 0
      %p228 = por %p226, %p227
      %p229 = scmp.ne.s32.totalorder %s221, %s223
      %p230 = scmp.eq.s32.totalorder %s34, 1
      %p231 = por %p229, %p230
      %p232 = scmp.ne.s32.totalorder %s223, %s224
      %p233 = scmp.eq.s32.totalorder %s34, 0
      %p234 = por %p232, %p233
      %p235 = scmp.ne.s32.totalorder %s223, %s224
      %p236 = scmp.eq.s32.totalorder %s35, 1
      %p237 = por %p235, %p236
      %p239 = scmp.ne.s32.totalorder %s224, %s238
      %p240 = scmp.eq.s32.totalorder %s35, 0
      %p241 = por %p239, %p240
      %s243 = sadd.s32 %s242, 1
      %p246 = scmp.eq.s32.totalorder %s29, 1
      %p247 = scmp.ne.s32.totalorder %s242, %s244
      %p248 = scmp.eq.s32.totalorder %s29, 0
      %p249 = por %p247, %p248
      %p250 = scmp.ne.s32.totalorder %s242, %s244
      %p251 = scmp.eq.s32.totalorder %s34, 1
      %p252 = por %p250, %p251
      %p253 = scmp.ne.s32.totalorder %s244, %s245
      %p254 = scmp.eq.s32.totalorder %s34, 0
      %p255 = por %p253, %p254
      %p256 = scmp.ne.s32.totalorder %s244, %s245
      %p257 = scmp.eq.s32.totalorder %s35, 1
      %p258 = por %p256, %p257
      %p260 = scmp.ne.s32.totalorder %s245, %s259
      %p261 = scmp.eq.s32.totalorder %s35, 0
      %p262 = por %p260, %p261
      %s264 = sadd.s32 %s263, 1
      %p267 = scmp.eq.s32.totalorder %s29, 1
      %p268 = scmp.ne.s32.totalorder %s263, %s265
      %p269 = scmp.eq.s32.totalorder %s29, 0
      %p270 = por %p268, %p269
      %p271 = scmp.ne.s32.totalorder %s263, %s265
      %p272 = scmp.eq.s32.totalorder %s34, 1
      %p273 = por %p271, %p272
      %p274 = scmp.ne.s32.totalorder %s265, %s266
      %p275 = scmp.eq.s32.totalorder %s34, 0
      %p276 = por %p274, %p275
      %p277 = scmp.ne.s32.totalorder %s265, %s266
      %p278 = scmp.eq.s32.totalorder %s35, 1
      %p279 = por %p277, %p278
      %p281 = scmp.ne.s32.totalorder %s266, %s280
      %p282 = scmp.eq.s32.totalorder %s35, 0
      %p283 = por %p281, %p282
      %s285 = sadd.s32 %s284, 1
      %p288 = scmp.eq.s32.totalorder %s29, 1
      %p289 = scmp.ne.s32.totalorder %s284, %s286
      %p290 = scmp.eq.s32.totalorder %s29, 0
      %p291 = por %p289, %p290
      %p292 = scmp.ne.s32.totalorder %s284, %s286
      %p293 = scmp.eq.s32.totalorder %s34, 1
      %p294 = por %p292, %p293
      %p295 = scmp.ne.s32.totalorder %s286, %s287
      %p296 = scmp.eq.s32.totalorder %s34, 0
      %p297 = por %p295, %p296
      %p298 = scmp.ne.s32.totalorder %s286, %s287
      %p299 = scmp.eq.s32.totalorder %s35, 1
      %p300 = por %p298, %p299
      %p302 = scmp.ne.s32.totalorder %s287, %s301
      %p303 = scmp.eq.s32.totalorder %s35, 0
      %p304 = por %p302, %p303
      %s306 = sadd.s32 %s305, 1
      %p309 = scmp.eq.s32.totalorder %s29, 1
      %p310 = scmp.ne.s32.totalorder %s305, %s307
      %p311 = scmp.eq.s32.totalorder %s29, 0
      %p312 = por %p310, %p311
      %p313 = scmp.ne.s32.totalorder %s305, %s307
      %p314 = scmp.eq.s32.totalorder %s34, 1
      %p315 = por %p313, %p314
      %p316 = scmp.ne.s32.totalorder %s307, %s308
      %p317 = scmp.eq.s32.totalorder %s34, 0
      %p318 = por %p316, %p317
      %p319 = scmp.ne.s32.totalorder %s307, %s308
      %p320 = scmp.eq.s32.totalorder %s35, 1
      %p321 = por %p319, %p320
      %p323 = scmp.ne.s32.totalorder %s308, %s322
      %p324 = scmp.eq.s32.totalorder %s35, 0
      %p325 = por %p323, %p324
      %s327 = sadd.s32 %s326, 1
      %p330 = scmp.eq.s32.totalorder %s29, 1
      %p331 = scmp.ne.s32.totalorder %s326, %s328
      %p332 = scmp.eq.s32.totalorder %s29, 0
      %p333 = por %p331, %p332
      %p334 = scmp.ne.s32.totalorder %s326, %s328
      %p335 = scmp.eq.s32.totalorder %s34, 1
      %p336 = por %p334, %p335
      %p337 = scmp.ne.s32.totalorder %s328, %s329
      %p338 = scmp.eq.s32.totalorder %s34, 0
      %p339 = por %p337, %p338
      %p340 = scmp.ne.s32.totalorder %s328, %s329
      %p341 = scmp.eq.s32.totalorder %s35, 1
      %p342 = por %p340, %p341
      %p344 = scmp.ne.s32.totalorder %s329, %s343
      %p345 = scmp.eq.s32.totalorder %s35, 0
      %p346 = por %p344, %p345
      %s348 = sadd.s32 %s347, 1
      %p351 = scmp.eq.s32.totalorder %s29, 1
      %p352 = scmp.ne.s32.totalorder %s347, %s349
      %p353 = scmp.eq.s32.totalorder %s29, 0
      %p354 = por %p352, %p353
      %p355 = scmp.ne.s32.totalorder %s347, %s349
      %p356 = scmp.eq.s32.totalorder %s34, 1
      %p357 = por %p355, %p356
      %p358 = scmp.ne.s32.totalorder %s349, %s350
      %p359 = scmp.eq.s32.totalorder %s34, 0
      %p360 = por %p358, %p359
      %p361 = scmp.ne.s32.totalorder %s349, %s350
      %p362 = scmp.eq.s32.totalorder %s35, 1
      %p363 = por %p361, %p362
      %p365 = scmp.ne.s32.totalorder %s350, %s364
      %p366 = scmp.eq.s32.totalorder %s35, 0
      %p367 = por %p365, %p366
      %s368 = ssub.s32 %s36, %s48
      %p369 = scmp.eq.s32.totalorder %s368, 0
      %s371 = sadd.s32 %s370, 1
      %s372 = scalar_select %p369, %s370, %s371
      %p375 = pneg %p369
      %p376 = scmp.eq.s32.totalorder %s29, 1
      %p377 = por %p375, %p376
      %p378 = scmp.ne.s32.totalorder %s370, %s373
      %p379 = scmp.eq.s32.totalorder %s29, 0
      %p380 = por %p378, %p379
      %p381 = scmp.ne.s32.totalorder %s370, %s373
      %p382 = scmp.eq.s32.totalorder %s34, 1
      %p383 = por %p381, %p382
      %p384 = scmp.ne.s32.totalorder %s373, %s374
      %p385 = scmp.eq.s32.totalorder %s34, 0
      %p386 = por %p384, %p385
      %p387 = scmp.ne.s32.totalorder %s373, %s374
      %p388 = scmp.eq.s32.totalorder %s35, 1
      %p389 = por %p387, %p388
      %p391 = scmp.ne.s32.totalorder %s374, %s390
      %p392 = scmp.eq.s32.totalorder %s35, 0
      %p393 = por %p391, %p392
      %p394 = scmp.le.s32.totalorder 1, %s29
      %p395 = scmp.lt.s32.totalorder %s29, 3
      %p396 = pnand %p394, %p395
      %p397 = pneg %p396
      // Predicated region
      $region9: #{tpu_custom_call.1} parent=5 // pred_check
        _
      $region10: #{tpu_custom_call.1} parent=5 // pred_check_branch
        %399 = sbr.rel (%p396) target = $region12
      $region11: #{tpu_custom_call.1} parent=5 // pred_region
        %s400 = ssub.s32 %s29, 1
        // Predicated region
        $region13: #{tpu_custom_call.1} parent=11 // pred_check
          %p401 = pneg %p119
        $region14: #{tpu_custom_call.1} parent=11 // pred_check_branch
          %403 = sbr.rel (%p401) target = $region16
        $region15: #{tpu_custom_call.1} parent=11 // pred_region
          %p404 = scmp.lt.s32.totalorder %s39, 0
          %s405 = scalar_select %p404, %s39, 0
          %s406 = smul.addr %s405, 4
          %s407 = smul.addr %s406, 4
          %s408 = scalar_lea.vmem %s2, %s407
        $region16: #{tpu_custom_call.1} parent=11 // pred_fallthru
          _
        // Predicated region
        $region17: #{tpu_custom_call.1} parent=11 // pred_check
          %p409 = pneg %p145
        $region18: #{tpu_custom_call.1} parent=11 // pred_check_branch
          %411 = sbr.rel (%p409) target = $region20
        $region19: #{tpu_custom_call.1} parent=11 // pred_region
          %p412 = scmp.lt.s32.totalorder %s39, 0
          %s413 = scalar_select %p412, %s39, 0
          %s414 = scalar_lea.vmem %s3, %s413
        $region20: #{tpu_custom_call.1} parent=11 // pred_fallthru
          _
        // Predicated region
        $region21: #{tpu_custom_call.1} parent=11 // pred_check
          %p415 = pneg %p171
        $region22: #{tpu_custom_call.1} parent=11 // pred_check_branch
          %417 = sbr.rel (%p415) target = $region24
        $region23: #{tpu_custom_call.1} parent=11 // pred_region
          %s419 = ssub.s32 256, 256
          %420 = vsyncadd [#allocation9], %s419
          %s421 = smul.addr %s39, 4
          %s422 = smul.addr %s421, 64
          %s423 = scalar_lea.hbm %s4, %s422
          %s424 = sshll.u32 [#allocation8], 4
          %s425 = int_to_ptr.vmem [resolvable:$true] %s424
          %430 = dma.hbm_to_vmem [thread:$0]  %s423, 256, %s425, [#allocation9], 64, 64, 4
        $region24: #{tpu_custom_call.1} parent=11 // pred_fallthru
          _
        // Predicated region
        $region25: #{tpu_custom_call.1} parent=11 // pred_check
          %p431 = pneg %p192
        $region26: #{tpu_custom_call.1} parent=11 // pred_check_branch
          %433 = sbr.rel (%p431) target = $region28
        $region27: #{tpu_custom_call.1} parent=11 // pred_region
          _
        $region28: #{tpu_custom_call.1} parent=11 // pred_fallthru
          _
        // Predicated region
        $region29: #{tpu_custom_call.1} parent=11 // pred_check
          %p434 = pneg %p213
        $region30: #{tpu_custom_call.1} parent=11 // pred_check_branch
          %436 = sbr.rel (%p434) target = $region32
        $region31: #{tpu_custom_call.1} parent=11 // pred_region
          %s438 = ssub.s32 16, 16
          %439 = vsyncadd [#allocation9], %s438
          %s441 = sshll.u32 [#allocation10], 4
          %s442 = int_to_ptr.vmem [resolvable:$true] %s441
          %444 = dma.hbm_to_vmem [thread:$0]  %s6, 16, %s442, [#allocation9]
        $region32: #{tpu_custom_call.1} parent=11 // pred_fallthru
          _
        // Predicated region
        $region33: #{tpu_custom_call.1} parent=11 // pred_check
          %p445 = pneg %p234
        $region34: #{tpu_custom_call.1} parent=11 // pred_check_branch
          %447 = sbr.rel (%p445) target = $region36
        $region35: #{tpu_custom_call.1} parent=11 // pred_region
          %s449 = ssub.s32 16, 16
          %450 = vsyncadd [#allocation12], %s449
          %s452 = sshll.u32 [#allocation11], 4
          %s453 = int_to_ptr.vmem [resolvable:$true] %s452
          %455 = dma.hbm_to_vmem [thread:$0]  %s7, 16, %s453, [#allocation12]
        $region36: #{tpu_custom_call.1} parent=11 // pred_fallthru
          _
        // Predicated region
        $region37: #{tpu_custom_call.1} parent=11 // pred_check
          %p456 = pneg %p255
        $region38: #{tpu_custom_call.1} parent=11 // pred_check_branch
          %458 = sbr.rel (%p456) target = $region40
        $region39: #{tpu_custom_call.1} parent=11 // pred_region
          %s460 = ssub.s32 256, 256
          %461 = vsyncadd [#allocation12], %s460
          %s462 = sshll.u32 [#allocation13], 4
          %s463 = int_to_ptr.vmem [resolvable:$true] %s462
          %468 = dma.hbm_to_vmem [thread:$0]  %s8, 256, %s463, [#allocation12], 64, 64, 4
        $region40: #{tpu_custom_call.1} parent=11 // pred_fallthru
          _
        // Predicated region
        $region41: #{tpu_custom_call.1} parent=11 // pred_check
          %p469 = pneg %p276
        $region42: #{tpu_custom_call.1} parent=11 // pred_check_branch
          %471 = sbr.rel (%p469) target = $region44
        $region43: #{tpu_custom_call.1} parent=11 // pred_region
          %s473 = ssub.s32 16, 16
          %474 = vsyncadd [#allocation15], %s473
          %s476 = sshll.u32 [#allocation14], 4
          %s477 = int_to_ptr.vmem [resolvable:$true] %s476
          %479 = dma.hbm_to_vmem [thread:$0]  %s9, 16, %s477, [#allocation15]
        $region44: #{tpu_custom_call.1} parent=11 // pred_fallthru
          _
        // Predicated region
        $region45: #{tpu_custom_call.1} parent=11 // pred_check
          %p480 = pneg %p297
        $region46: #{tpu_custom_call.1} parent=11 // pred_check_branch
          %482 = sbr.rel (%p480) target = $region48
        $region47: #{tpu_custom_call.1} parent=11 // pred_region
          _
        $region48: #{tpu_custom_call.1} parent=11 // pred_fallthru
          _
        // Predicated region
        $region49: #{tpu_custom_call.1} parent=11 // pred_check
          %p483 = pneg %p318
        $region50: #{tpu_custom_call.1} parent=11 // pred_check_branch
          %485 = sbr.rel (%p483) target = $region52
        $region51: #{tpu_custom_call.1} parent=11 // pred_region
          _
        $region52: #{tpu_custom_call.1} parent=11 // pred_fallthru
          _
        // Predicated region
        $region53: #{tpu_custom_call.1} parent=11 // pred_check
          %p486 = pneg %p339
        $region54: #{tpu_custom_call.1} parent=11 // pred_check_branch
          %488 = sbr.rel (%p486) target = $region56
        $region55: #{tpu_custom_call.1} parent=11 // pred_region
          _
        $region56: #{tpu_custom_call.1} parent=11 // pred_fallthru
          _
        // Predicated region
        $region57: #{tpu_custom_call.1} parent=11 // pred_check
          %p489 = pneg %p360
        $region58: #{tpu_custom_call.1} parent=11 // pred_check_branch
          %491 = sbr.rel (%p489) target = $region60
        $region59: #{tpu_custom_call.1} parent=11 // pred_region
          _
        $region60: #{tpu_custom_call.1} parent=11 // pred_fallthru
          _
      $region12: #{tpu_custom_call.1} parent=5 // pred_fallthru
        _
      %p492 = scmp.lt.s32.totalorder %s29, 2
      // Predicated region
      $region61: #{tpu_custom_call.1} parent=5 // pred_check
        %p493 = pneg %p492
      $region62: #{tpu_custom_call.1} parent=5 // pred_check_branch
        %495 = sbr.rel (%p493) target = $region64
      $region63: #{tpu_custom_call.1} parent=5 // pred_region
        // Predicated region
        $region65: #{tpu_custom_call.1} parent=63 // pred_check
          %p496 = pneg %p61
        $region66: #{tpu_custom_call.1} parent=63 // pred_check_branch
          %498 = sbr.rel (%p496) target = $region68
        $region67: #{tpu_custom_call.1} parent=63 // pred_region
          %s499 = smul.u32 2, %s36
          %p500 = scmp.lt.s32.totalorder %s499, 3
          %s501 = scalar_select %p500, %s499, 3
          %s502 = smul.addr %s501, 8
          %s503 = scalar_lea.vmem %s0, %s502
          %s504 = smul.u32 2, %s36
        $region68: #{tpu_custom_call.1} parent=63 // pred_fallthru
          _
        // Predicated region
        $region69: #{tpu_custom_call.1} parent=63 // pred_check
          %p505 = pneg %p87
        $region70: #{tpu_custom_call.1} parent=63 // pred_check_branch
          %507 = sbr.rel (%p505) target = $region72
        $region71: #{tpu_custom_call.1} parent=63 // pred_region
          %s508 = sand.u32 %s77, 1
          %s509 = scalar_lea.sflag [#allocation6], %s508
          %s510 = sand.u32 %s77, 1
          %s511 = smul.addr %s510, 4
          %s512 = scalar_lea.vmem [#allocation5], %s511
          %s513 = smul.u32 2, %s36
          %s515 = ssub.s32 64, 64
          %516 = vsyncadd %s509, %s515
          %s517 = smul.addr %s513, 32
          %s518 = scalar_lea.hbm %s1, %s517
          %s519 = sshll.u32 %s512, 4
          %s520 = int_to_ptr.vmem [resolvable:$true] %s519
          %525 = dma.hbm_to_vmem [thread:$0]  %s518, 64, %s520, %s509, 32, 32, 2
        $region72: #{tpu_custom_call.1} parent=63 // pred_fallthru
          _
      $region64: #{tpu_custom_call.1} parent=5 // pred_fallthru
        _
      %p526 = scmp.le.s32.totalorder 1, %s29
      %p527 = scmp.lt.s32.totalorder %s29, 3
      %p528 = pnand %p526, %p527
      %p529 = pneg %p528
      // Predicated region
      $region73: #{tpu_custom_call.1} parent=5 // pred_check
        _
      $region74: #{tpu_custom_call.1} parent=5 // pred_check_branch
        %531 = sbr.rel (%p528) target = $region76
      $region75: #{tpu_custom_call.1} parent=5 // pred_region
        %s532 = ssub.s32 %s29, 1
        %s533 = sand.u32 %s80, 1
        %s534 = scalar_lea.sflag [#allocation6], %s533
        %s535 = sand.u32 %s80, 1
        %s536 = smul.addr %s535, 4
        %s537 = scalar_lea.vmem [#allocation5], %s536
        // Predicated region
        $region77: #{tpu_custom_call.1} parent=75 // pred_check
          %p538 = pneg %p93
        $region78: #{tpu_custom_call.1} parent=75 // pred_check_branch
          %540 = sbr.rel (%p538) target = $region80
        $region79: #{tpu_custom_call.1} parent=75 // pred_region
          %541 = dma.done %s534, 64
        $region80: #{tpu_custom_call.1} parent=75 // pred_fallthru
          _
        // Predicated region
        $region81: #{tpu_custom_call.1} parent=75 // pred_check
          %p542 = pneg %p171
        $region82: #{tpu_custom_call.1} parent=75 // pred_check_branch
          %544 = sbr.rel (%p542) target = $region84
        $region83: #{tpu_custom_call.1} parent=75 // pred_region
          %545 = dma.done [#allocation9], 256
        $region84: #{tpu_custom_call.1} parent=75 // pred_fallthru
          _
        // Predicated region
        $region85: #{tpu_custom_call.1} parent=75 // pred_check
          %p546 = pneg %p213
        $region86: #{tpu_custom_call.1} parent=75 // pred_check_branch
          %548 = sbr.rel (%p546) target = $region88
        $region87: #{tpu_custom_call.1} parent=75 // pred_region
          %549 = dma.done [#allocation9], 16
        $region88: #{tpu_custom_call.1} parent=75 // pred_fallthru
          _
        // Predicated region
        $region89: #{tpu_custom_call.1} parent=75 // pred_check
          %p550 = pneg %p234
        $region90: #{tpu_custom_call.1} parent=75 // pred_check_branch
          %552 = sbr.rel (%p550) target = $region92
        $region91: #{tpu_custom_call.1} parent=75 // pred_region
          %553 = dma.done [#allocation12], 16
        $region92: #{tpu_custom_call.1} parent=75 // pred_fallthru
          _
        // Predicated region
        $region93: #{tpu_custom_call.1} parent=75 // pred_check
          %p554 = pneg %p255
        $region94: #{tpu_custom_call.1} parent=75 // pred_check_branch
          %556 = sbr.rel (%p554) target = $region96
        $region95: #{tpu_custom_call.1} parent=75 // pred_region
          %557 = dma.done [#allocation12], 256
        $region96: #{tpu_custom_call.1} parent=75 // pred_fallthru
          _
        // Predicated region
        $region97: #{tpu_custom_call.1} parent=75 // pred_check
          %p558 = pneg %p276
        $region98: #{tpu_custom_call.1} parent=75 // pred_check_branch
          %560 = sbr.rel (%p558) target = $region100
        $region99: #{tpu_custom_call.1} parent=75 // pred_region
          %561 = dma.done [#allocation15], 16
        $region100: #{tpu_custom_call.1} parent=75 // pred_fallthru
          _
        %s562 = smul.u32 2, %s38
        %p563 = scmp.lt.s32.totalorder %s562, 3
        %s564 = scalar_select %p563, %s562, 3
        %s565 = smul.addr %s564, 8
        %s566 = scalar_lea.vmem %s0, %s565
        %p567 = pneg %p67
        %p568 = pneg %p64
        %s569 = sand.u32 %s80, 1
        %s570 = scalar_lea.sflag [#allocation6], %s569
        %s571 = sand.u32 %s80, 1
        %s572 = smul.addr %s571, 4
        %s573 = scalar_lea.vmem [#allocation5], %s572
        %p574 = pneg %p93
        %p575 = pneg %p90
        %p576 = scmp.lt.s32.totalorder %s39, 0
        %s577 = scalar_select %p576, %s39, 0
        %s578 = smul.addr %s577, 4
        %s579 = smul.addr %s578, 4
        %s580 = scalar_lea.vmem %s2, %s579
        %p581 = pneg %p119
        %p582 = pneg %p116
        %p583 = scmp.lt.s32.totalorder %s39, 0
        %s584 = scalar_select %p583, %s39, 0
        %s585 = scalar_lea.vmem %s3, %s584
        %p586 = pneg %p145
        %p587 = pneg %p142
        %p588 = pneg %p171
        %p589 = pneg %p168
        %p590 = pneg %p192
        %p591 = pneg %p189
        %p592 = pneg %p213
        %p593 = pneg %p210
        %p594 = pneg %p234
        %p595 = pneg %p231
        %p596 = pneg %p255
        %p597 = pneg %p252
        %p598 = pneg %p276
        %p599 = pneg %p273
        %p600 = pneg %p297
        %p601 = pneg %p294
        %p602 = pneg %p318
        %p603 = pneg %p315
        %p604 = pneg %p339
        %p605 = pneg %p336
        %p606 = pneg %p360
        %p607 = pneg %p357
        %p608 = pneg %p386
        %p609 = pneg %p383
        %s610 = sand.u32 %s373, 1
        %s611 = scalar_lea.sflag [#allocation7], %s610
        %s612 = sand.u32 %s373, 1
        %s613 = smul.addr %s612, 16
        %s614 = scalar_lea.vmem [#allocation16], %s613
        %s615 = smul.u32 2, %s38
        %p616 = scmp.lt.s32.totalorder %s615, 3
        %s617 = scalar_select %p616, %s615, 3
        %s618 = smul.addr %s617, 8
        %s619 = scalar_lea.vmem %s0, %s618
        %s620 = smul.u32 2, %s38
        %s621 = smul.u32 2, %s38
        %p622 = scmp.lt.s32.totalorder %s39, 0
        %s623 = scalar_select %p622, %s39, 0
        %s624 = smul.addr %s623, 4
        %s625 = smul.addr %s624, 4
        %s626 = scalar_lea.vmem %s2, %s625
        %p627 = scmp.lt.s32.totalorder %s39, 0
        %s628 = scalar_select %p627, %s39, 0
        %s629 = scalar_lea.vmem %s3, %s628
        %s630 = smul.u32 2, %s38
        %p634 = scmp.eq.s32.totalorder %s39, 0
        // Predicated region
        $region101: #{tpu_custom_call.1} parent=75 // pred_check
          %p635 = pneg %p634
        $region102: #{tpu_custom_call.1} parent=75 // pred_check_branch
          %637 = sbr.rel (%p635) target = $region104
        $region103: #{tpu_custom_call.1} parent=75 // pred_region
          %vm638 = vcmask 261120
          %639 = vst.msk [vmem:[#allocation2] sm:$0xff] %vm638, 0.0
          %640 = vst.msk [vmem:[#allocation2 + $0x8] sm:$0xff] %vm638, 0.0
          %v641 = vld [vmem:[%s619] sm:$0xff]
          %v642 = vld [vmem:[%s619 + $0x8] sm:$0xff]
          %v643 = vpack.c.bf16 %v642, %v641
          %v645 = vunpack.c.l.b16 %v643
          %v646 = vunpack.c.h.b16 %v643
          %v647 = vpack.c.b16 %v645, %v645
          %v648 = vpack.c.b16 %v646, %v646
          %vm651 = vcmask 257024
          %652 = vst.msk [vmem:[#allocation3] sm:$0xf] %vm651, %v647
          %653 = vst.msk [vmem:[#allocation3 + $0x4] sm:$0xf] %vm651, %v648
        $region104: #{tpu_custom_call.1} parent=75 // pred_fallthru
          _
        %v654 = vld [vmem:[#allocation3] sm:$0xf]
        %v655 = vld [vmem:[#allocation3 + $0x4] sm:$0xf]
        %v656 = vld [vmem:[%s626] sm:$0xf]
        %v657 = vld [vmem:[%s626 + $0x4] sm:$0xf]
        %v658 = vld [vmem:[%s626 + $0x8] sm:$0xf]
        %v659 = vld [vmem:[%s626 + $0xc] sm:$0xf]
        %v660 = vld [vmem:[%s629] sm:$0x1]
        %v662 = vlaneseq
        %v663 = vshrl.u32 %v662, 7
        %v664 = vsub.s32 0, %v663
        %v665 = vrot.slane %v660, %v664
        %v669 = vunpack.c.l.b16 %v654
        %v670 = vunpack.c.l.b16 %v655
        %v671 = vpack.c.b16 %v670, %v669
        %v676 = vunpack.c.l.b16 %v656
        %v677 = vunpack.c.l.b16 %v657
        %v678 = vunpack.c.l.b16 %v658
        %v679 = vunpack.c.l.b16 %v659
        %v680 = vpack.c.b16 %v677, %v676
        %v681 = vpack.c.b16 %v679, %v678
        %vm684 = vcmask 261120
        %v686 = vsel %vm684, %v671, 0
        %688 = vmatprep.subr.bf16.mxu0 0
        %689 = vmatpush1.bf16.msra.mxu0 0
        %690 = vmatprep.subr.bf16.mxu0 0
        %691 = vmatpush1.bf16.msra.mxu0 0
        %692 = vmatprep.subr.bf16.mxu0 0
        %693 = vmatpush1.bf16.msra.mxu0 0
        %694 = vmatprep.subr.bf16.mxu0 0
        %695 = vmatpush1.bf16.msra.mxu0 0
        %696 = vmatprep.subr.bf16.mxu0 0
        %697 = vmatpush1.bf16.msra.mxu0 0
        %698 = vmatprep.subr.bf16.mxu0 0
        %699 = vmatpush1.bf16.msra.mxu0 0
        %700 = vmatprep.subr.bf16.mxu0 0
        %701 = vmatpush1.bf16.msra.mxu0 %v681
        %702 = vmatprep.subr.bf16.mxu0 0
        %703 = vmatpush1.bf16.msra.mxu0 %v680
        %704 = vmatprep.subr.bf16.mxu0 0
        %705 = vmatpush2.bf16.msra.mxu0 0
        %706 = vmatprep.subr.bf16.mxu0 0
        %707 = vmatpush2.bf16.msra.mxu0 0
        %708 = vmatprep.subr.bf16.mxu0 0
        %709 = vmatpush2.bf16.msra.mxu0 0
        %710 = vmatprep.subr.bf16.mxu0 0
        %711 = vmatpush2.bf16.msra.mxu0 0
        %712 = vmatprep.subr.bf16.mxu0 0
        %713 = vmatpush2.bf16.msra.mxu0 0
        %714 = vmatprep.subr.bf16.mxu0 0
        %715 = vmatpush2.bf16.msra.mxu0 0
        %716 = vmatprep.subr.bf16.mxu0 0
        %717 = vmatpush2.bf16.msra.mxu0 0
        %718 = vmatprep.subr.bf16.mxu0 0
        %719 = vmatpush2.bf16.msra.mxu0 0
        %720 = vmatprep.mubr.bf16.mxu0 0
        %721 = vmatmul.mubr.bf16.gmra.mxu0 %v686
        %v722 = vpop.f32.mrf.mxu0
        %v723 = vadd.f32 %v665, %v722
        %v724 = vpop.f32.mrf.mxu0
        %v725 = vpop.f32.mrf.mxu0
        %v726 = vadd.f32 %v665, %v725
        %v727 = vpop.f32.mrf.mxu0
        %728 = vdwg.mxu0
        %v729 = vld [vmem:[%s537] sm:$0x3]
        %v730 = vld [vmem:[%s537 + $0x2] sm:$0x3]
        %vm731 = vnez %v729
        %vm732 = vnez %v730
        %v733 = vmul.f32 %v723, 0.35355338
        %v734 = vmul.f32 %v726, 0.35355338
        %v735 = vpack.c.bf16 %v733, %v733
        %v736 = vpack.c.bf16 %v734, %v734
        %v737 = vpack.c.bf16 %v723, %v723
        %v738 = vpack.c.bf16 %v726, %v726
        %740 = vrot.lane.b32.xlu0 %v737, 96
        %v741 = vpop.permute.xlu0 %740
        %vm742 = vcmask 64512
        %v744 = vsel %vm742, %v735, 0
        %v747 = vsel %vm742, %v741, 0
        %749 = vmatprep.subr.bf16.mxu0 0
        %750 = vmatpush1.bf16.xpose.msra.mxu0 0
        %751 = vmatprep.subr.bf16.mxu0 0
        %752 = vmatpush1.bf16.xpose.msra.mxu0 0
        %753 = vmatprep.subr.bf16.mxu0 0
        %754 = vmatpush1.bf16.xpose.msra.mxu0 0
        %755 = vmatprep.subr.bf16.mxu0 0
        %756 = vmatpush1.bf16.xpose.msra.mxu0 0
        %757 = vmatprep.subr.bf16.mxu0 0
        %758 = vmatpush1.bf16.xpose.msra.mxu0 0
        %759 = vmatprep.subr.bf16.mxu0 0
        %760 = vmatpush1.bf16.xpose.msra.mxu0 0
        %761 = vmatprep.subr.bf16.mxu0 0
        %762 = vmatpush1.bf16.xpose.msra.mxu0 0
        %763 = vmatprep.subr.bf16.mxu0 0
        %764 = vmatpush1.bf16.xpose.msra.mxu0 %v747
        %765 = vmatprep.subr.bf16.mxu0 0
        %766 = vmatpush2.bf16.xpose.msra.mxu0 0
        %767 = vmatprep.subr.bf16.mxu0 0
        %768 = vmatpush2.bf16.xpose.msra.mxu0 0
        %769 = vmatprep.subr.bf16.mxu0 0
        %770 = vmatpush2.bf16.xpose.msra.mxu0 0
        %771 = vmatprep.subr.bf16.mxu0 0
        %772 = vmatpush2.bf16.xpose.msra.mxu0 0
        %773 = vmatprep.subr.bf16.mxu0 0
        %774 = vmatpush2.bf16.xpose.msra.mxu0 0
        %775 = vmatprep.subr.bf16.mxu0 0
        %776 = vmatpush2.bf16.xpose.msra.mxu0 0
        %777 = vmatprep.subr.bf16.mxu0 0
        %778 = vmatpush2.bf16.xpose.msra.mxu0 0
        %779 = vmatprep.subr.bf16.mxu0 0
        %780 = vmatpush2.bf16.xpose.msra.mxu0 0
        %781 = vmatprep.mubr.bf16.mxu0 0
        %782 = vmatmul.mubr.bf16.gmra.mxu0 %v744
        %v783 = vpop.f32.mrf.mxu0
        %v784 = vadd.f32 0.0, %v783
        %v785 = vpop.f32.mrf.mxu0
        %v786 = vpop.f32.mrf.mxu0
        %v787 = vpop.f32.mrf.mxu0
        %788 = vdwg.mxu0
        %790 = vrot.lane.b32.xlu0 %v738, 96
        %v791 = vpop.permute.xlu0 %790
        %v793 = vsel %vm742, %v736, 0
        %v796 = vsel %vm742, %v791, 0
        %798 = vmatprep.subr.bf16.mxu0 0
        %799 = vmatpush1.bf16.xpose.msra.mxu0 0
        %800 = vmatprep.subr.bf16.mxu0 0
        %801 = vmatpush1.bf16.xpose.msra.mxu0 0
        %802 = vmatprep.subr.bf16.mxu0 0
        %803 = vmatpush1.bf16.xpose.msra.mxu0 0
        %804 = vmatprep.subr.bf16.mxu0 0
        %805 = vmatpush1.bf16.xpose.msra.mxu0 0
        %806 = vmatprep.subr.bf16.mxu0 0
        %807 = vmatpush1.bf16.xpose.msra.mxu0 0
        %808 = vmatprep.subr.bf16.mxu0 0
        %809 = vmatpush1.bf16.xpose.msra.mxu0 0
        %810 = vmatprep.subr.bf16.mxu0 0
        %811 = vmatpush1.bf16.xpose.msra.mxu0 0
        %812 = vmatprep.subr.bf16.mxu0 0
        %813 = vmatpush1.bf16.xpose.msra.mxu0 %v796
        %814 = vmatprep.subr.bf16.mxu0 0
        %815 = vmatpush2.bf16.xpose.msra.mxu0 0
        %816 = vmatprep.subr.bf16.mxu0 0
        %817 = vmatpush2.bf16.xpose.msra.mxu0 0
        %818 = vmatprep.subr.bf16.mxu0 0
        %819 = vmatpush2.bf16.xpose.msra.mxu0 0
        %820 = vmatprep.subr.bf16.mxu0 0
        %821 = vmatpush2.bf16.xpose.msra.mxu0 0
        %822 = vmatprep.subr.bf16.mxu0 0
        %823 = vmatpush2.bf16.xpose.msra.mxu0 0
        %824 = vmatprep.subr.bf16.mxu0 0
        %825 = vmatpush2.bf16.xpose.msra.mxu0 0
        %826 = vmatprep.subr.bf16.mxu0 0
        %827 = vmatpush2.bf16.xpose.msra.mxu0 0
        %828 = vmatprep.subr.bf16.mxu0 0
        %829 = vmatpush2.bf16.xpose.msra.mxu0 0
        %830 = vmatprep.mubr.bf16.mxu0 0
        %831 = vmatmul.mubr.bf16.gmra.mxu0 %v793
        %v832 = vpop.f32.mrf.mxu0
        %v833 = vadd.f32 0.0, %v832
        %v834 = vpop.f32.mrf.mxu0
        %v835 = vpop.f32.mrf.mxu0
        %v836 = vpop.f32.mrf.mxu0
        %837 = vdwg.mxu0
        %v838 = vsel %vm731, 16843009, 0
        %v839 = vsel %vm732, 16843009, 0
        %v840 = vunpack.c.0.s8 %v838
        %v841 = vunpack.c.0.s8 %v839
        %vm842 = vcmp.ne.s32.totalorder %v840, 0
        %vm843 = vcmp.ne.s32.totalorder %v841, 0
        %v844 = vsel %vm842, %v784, -1e+09
        %v845 = vsel %vm843, %v833, -1e+09
        %v846 = vsel %vm742, %v844, -inf
        %847 = vmax.xlane.f32.xlu0 %v846
        %v848 = vpop.xlane.xlu0 %847
        %v849 = vsel %vm742, %v845, -inf
        %850 = vmax.xlane.f32.xlu0 %v849
        %v851 = vpop.xlane.xlu0 %850
        %v852 = vsub.f32 %v844, %v848
        %v853 = vsub.f32 %v845, %v851
        %v854 = vmul.f32 %v852, 1.442695
        %v855 = vpow.pop %v854
        %v856 = vmul.f32 %v853, 1.442695
        %v857 = vpow.pop %v856
        %v858 = vsel %vm742, %v855, 0.0
        %859 = vadd.xlane.f32.xlu0 %v858
        %v860 = vpop.xlane.xlu0 %859
        %v861 = vsel %vm742, %v857, 0.0
        %862 = vadd.xlane.f32.xlu0 %v861
        %v863 = vpop.xlane.xlu0 %862
        %v864 = vrcp.pop %v860
        %v865 = vrcp.pop %v863
        %v866 = vmul.f32 %v855, %v864
        %v867 = vmul.f32 %v857, %v865
        %v868 = vpack.c.bf16 %v866, %v866
        %v869 = vpack.c.bf16 %v867, %v867
        %870 = vrot.lane.b32.xlu0 %v737, 64
        %v871 = vpop.permute.xlu0 %870
        %v873 = vsel %vm742, %v868, 0
        %vm875 = vcmask 1043456
        %v877 = vsel %vm875, %v871, 0
        %879 = vmatprep.subr.bf16.mxu0 0
        %880 = vmatpush1.bf16.msra.mxu0 0
        %881 = vmatprep.subr.bf16.mxu0 0
        %882 = vmatpush1.bf16.msra.mxu0 0
        %883 = vmatprep.subr.bf16.mxu0 0
        %884 = vmatpush1.bf16.msra.mxu0 0
        %885 = vmatprep.subr.bf16.mxu0 0
        %886 = vmatpush1.bf16.msra.mxu0 0
        %887 = vmatprep.subr.bf16.mxu0 0
        %888 = vmatpush1.bf16.msra.mxu0 0
        %889 = vmatprep.subr.bf16.mxu0 0
        %890 = vmatpush1.bf16.msra.mxu0 0
        %891 = vmatprep.subr.bf16.mxu0 0
        %892 = vmatpush1.bf16.msra.mxu0 0
        %893 = vmatprep.subr.bf16.mxu0 0
        %894 = vmatpush1.bf16.msra.mxu0 %v877
        %895 = vmatprep.subr.bf16.mxu0 0
        %896 = vmatpush2.bf16.msra.mxu0 0
        %897 = vmatprep.subr.bf16.mxu0 0
        %898 = vmatpush2.bf16.msra.mxu0 0
        %899 = vmatprep.subr.bf16.mxu0 0
        %900 = vmatpush2.bf16.msra.mxu0 0
        %901 = vmatprep.subr.bf16.mxu0 0
        %902 = vmatpush2.bf16.msra.mxu0 0
        %903 = vmatprep.subr.bf16.mxu0 0
        %904 = vmatpush2.bf16.msra.mxu0 0
        %905 = vmatprep.subr.bf16.mxu0 0
        %906 = vmatpush2.bf16.msra.mxu0 0
        %907 = vmatprep.subr.bf16.mxu0 0
        %908 = vmatpush2.bf16.msra.mxu0 0
        %909 = vmatprep.subr.bf16.mxu0 0
        %910 = vmatpush2.bf16.msra.mxu0 0
        %911 = vmatprep.mubr.bf16.mxu0 0
        %912 = vmatmul.mubr.bf16.gmra.mxu0 %v873
        %v913 = vpop.f32.mrf.mxu0
        %v914 = vadd.f32 0.0, %v913
        %v915 = vpop.f32.mrf.mxu0
        %v916 = vpop.f32.mrf.mxu0
        %v917 = vpop.f32.mrf.mxu0
        %918 = vdwg.mxu0
        %919 = vrot.lane.b32.xlu0 %v738, 64
        %v920 = vpop.permute.xlu0 %919
        %v922 = vsel %vm742, %v869, 0
        %v925 = vsel %vm875, %v920, 0
        %927 = vmatprep.subr.bf16.mxu0 0
        %928 = vmatpush1.bf16.msra.mxu0 0
        %929 = vmatprep.subr.bf16.mxu0 0
        %930 = vmatpush1.bf16.msra.mxu0 0
        %931 = vmatprep.subr.bf16.mxu0 0
        %932 = vmatpush1.bf16.msra.mxu0 0
        %933 = vmatprep.subr.bf16.mxu0 0
        %934 = vmatpush1.bf16.msra.mxu0 0
        %935 = vmatprep.subr.bf16.mxu0 0
        %936 = vmatpush1.bf16.msra.mxu0 0
        %937 = vmatprep.subr.bf16.mxu0 0
        %938 = vmatpush1.bf16.msra.mxu0 0
        %939 = vmatprep.subr.bf16.mxu0 0
        %940 = vmatpush1.bf16.msra.mxu0 0
        %941 = vmatprep.subr.bf16.mxu0 0
        %942 = vmatpush1.bf16.msra.mxu0 %v925
        %943 = vmatprep.subr.bf16.mxu0 0
        %944 = vmatpush2.bf16.msra.mxu0 0
        %945 = vmatprep.subr.bf16.mxu0 0
        %946 = vmatpush2.bf16.msra.mxu0 0
        %947 = vmatprep.subr.bf16.mxu0 0
        %948 = vmatpush2.bf16.msra.mxu0 0
        %949 = vmatprep.subr.bf16.mxu0 0
        %950 = vmatpush2.bf16.msra.mxu0 0
        %951 = vmatprep.subr.bf16.mxu0 0
        %952 = vmatpush2.bf16.msra.mxu0 0
        %953 = vmatprep.subr.bf16.mxu0 0
        %954 = vmatpush2.bf16.msra.mxu0 0
        %955 = vmatprep.subr.bf16.mxu0 0
        %956 = vmatpush2.bf16.msra.mxu0 0
        %957 = vmatprep.subr.bf16.mxu0 0
        %958 = vmatpush2.bf16.msra.mxu0 0
        %959 = vmatprep.mubr.bf16.mxu0 0
        %960 = vmatmul.mubr.bf16.gmra.mxu0 %v922
        %v961 = vpop.f32.mrf.mxu0
        %v962 = vadd.f32 0.0, %v961
        %v963 = vpop.f32.mrf.mxu0
        %v964 = vpop.f32.mrf.mxu0
        %v965 = vpop.f32.mrf.mxu0
        %966 = vdwg.mxu0
        %v967 = vpack.c.bf16 %v962, %v914
        %v969 = vunpack.c.l.b16 %v967
        %v970 = vunpack.c.h.b16 %v967
        %v971 = vpack.c.b16 %v969, %v969
        %v972 = vpack.c.b16 %v970, %v970
        %vm975 = vcmask 60416
        %976 = vst.msk [vmem:[#allocation4] sm:$0xf] %vm975, %v971
        %977 = vst.msk [vmem:[#allocation4 + $0x4] sm:$0xf] %vm975, %v972
        %979 = vrot.lane.b32.xlu0 %v735, 120
        %v980 = vpop.permute.xlu0 %979
        %981 = vrot.lane.b32.xlu0 %v737, 88
        %v982 = vpop.permute.xlu0 %981
        %v984 = vsel %vm742, %v980, 0
        %v987 = vsel %vm742, %v982, 0
        %989 = vmatprep.subr.bf16.mxu0 0
        %990 = vmatpush1.bf16.xpose.msra.mxu0 0
        %991 = vmatprep.subr.bf16.mxu0 0
        %992 = vmatpush1.bf16.xpose.msra.mxu0 0
        %993 = vmatprep.subr.bf16.mxu0 0
        %994 = vmatpush1.bf16.xpose.msra.mxu0 0
        %995 = vmatprep.subr.bf16.mxu0 0
        %996 = vmatpush1.bf16.xpose.msra.mxu0 0
        %997 = vmatprep.subr.bf16.mxu0 0
        %998 = vmatpush1.bf16.xpose.msra.mxu0 0
        %999 = vmatprep.subr.bf16.mxu0 0
        %1000 = vmatpush1.bf16.xpose.msra.mxu0 0
        %1001 = vmatprep.subr.bf16.mxu0 0
        %1002 = vmatpush1.bf16.xpose.msra.mxu0 0
        %1003 = vmatprep.subr.bf16.mxu0 0
        %1004 = vmatpush1.bf16.xpose.msra.mxu0 %v987
        %1005 = vmatprep.subr.bf16.mxu0 0
        %1006 = vmatpush2.bf16.xpose.msra.mxu0 0
        %1007 = vmatprep.subr.bf16.mxu0 0
        %1008 = vmatpush2.bf16.xpose.msra.mxu0 0
        %1009 = vmatprep.subr.bf16.mxu0 0
        %1010 = vmatpush2.bf16.xpose.msra.mxu0 0
        %1011 = vmatprep.subr.bf16.mxu0 0
        %1012 = vmatpush2.bf16.xpose.msra.mxu0 0
        %1013 = vmatprep.subr.bf16.mxu0 0
        %1014 = vmatpush2.bf16.xpose.msra.mxu0 0
        %1015 = vmatprep.subr.bf16.mxu0 0
        %1016 = vmatpush2.bf16.xpose.msra.mxu0 0
        %1017 = vmatprep.subr.bf16.mxu0 0
        %1018 = vmatpush2.bf16.xpose.msra.mxu0 0
        %1019 = vmatprep.subr.bf16.mxu0 0
        %1020 = vmatpush2.bf16.xpose.msra.mxu0 0
        %1021 = vmatprep.mubr.bf16.mxu0 0
        %1022 = vmatmul.mubr.bf16.gmra.mxu0 %v984
        %v1023 = vpop.f32.mrf.mxu0
        %v1024 = vadd.f32 0.0, %v1023
        %v1025 = vpop.f32.mrf.mxu0
        %v1026 = vpop.f32.mrf.mxu0
        %v1027 = vpop.f32.mrf.mxu0
        %1028 = vdwg.mxu0
        %1030 = vrot.lane.b32.xlu0 %v736, 120
        %v1031 = vpop.permute.xlu0 %1030
        %1032 = vrot.lane.b32.xlu0 %v738, 88
        %v1033 = vpop.permute.xlu0 %1032
        %v1035 = vsel %vm742, %v1031, 0
        %v1038 = vsel %vm742, %v1033, 0
        %1040 = vmatprep.subr.bf16.mxu0 0
        %1041 = vmatpush1.bf16.xpose.msra.mxu0 0
        %1042 = vmatprep.subr.bf16.mxu0 0
        %1043 = vmatpush1.bf16.xpose.msra.mxu0 0
        %1044 = vmatprep.subr.bf16.mxu0 0
        %1045 = vmatpush1.bf16.xpose.msra.mxu0 0
        %1046 = vmatprep.subr.bf16.mxu0 0
        %1047 = vmatpush1.bf16.xpose.msra.mxu0 0
        %1048 = vmatprep.subr.bf16.mxu0 0
        %1049 = vmatpush1.bf16.xpose.msra.mxu0 0
        %1050 = vmatprep.subr.bf16.mxu0 0
        %1051 = vmatpush1.bf16.xpose.msra.mxu0 0
        %1052 = vmatprep.subr.bf16.mxu0 0
        %1053 = vmatpush1.bf16.xpose.msra.mxu0 0
        %1054 = vmatprep.subr.bf16.mxu0 0
        %1055 = vmatpush1.bf16.xpose.msra.mxu0 %v1038
        %1056 = vmatprep.subr.bf16.mxu0 0
        %1057 = vmatpush2.bf16.xpose.msra.mxu0 0
        %1058 = vmatprep.subr.bf16.mxu0 0
        %1059 = vmatpush2.bf16.xpose.msra.mxu0 0
        %1060 = vmatprep.subr.bf16.mxu0 0
        %1061 = vmatpush2.bf16.xpose.msra.mxu0 0
        %1062 = vmatprep.subr.bf16.mxu0 0
        %1063 = vmatpush2.bf16.xpose.msra.mxu0 0
        %1064 = vmatprep.subr.bf16.mxu0 0
        %1065 = vmatpush2.bf16.xpose.msra.mxu0 0
        %1066 = vmatprep.subr.bf16.mxu0 0
        %1067 = vmatpush2.bf16.xpose.msra.mxu0 0
        %1068 = vmatprep.subr.bf16.mxu0 0
        %1069 = vmatpush2.bf16.xpose.msra.mxu0 0
        %1070 = vmatprep.subr.bf16.mxu0 0
        %1071 = vmatpush2.bf16.xpose.msra.mxu0 0
        %1072 = vmatprep.mubr.bf16.mxu0 0
        %1073 = vmatmul.mubr.bf16.gmra.mxu0 %v1035
        %v1074 = vpop.f32.mrf.mxu0
        %v1075 = vadd.f32 0.0, %v1074
        %v1076 = vpop.f32.mrf.mxu0
        %v1077 = vpop.f32.mrf.mxu0
        %v1078 = vpop.f32.mrf.mxu0
        %1079 = vdwg.mxu0
        %v1080 = vsel %vm842, %v1024, -1e+09
        %v1081 = vsel %vm843, %v1075, -1e+09
        %v1082 = vsel %vm742, %v1080, -inf
        %1083 = vmax.xlane.f32.xlu0 %v1082
        %v1084 = vpop.xlane.xlu0 %1083
        %v1085 = vsel %vm742, %v1081, -inf
        %1086 = vmax.xlane.f32.xlu0 %v1085
        %v1087 = vpop.xlane.xlu0 %1086
        %v1088 = vsub.f32 %v1080, %v1084
        %v1089 = vsub.f32 %v1081, %v1087
        %v1090 = vmul.f32 %v1088, 1.442695
        %v1091 = vpow.pop %v1090
        %v1092 = vmul.f32 %v1089, 1.442695
        %v1093 = vpow.pop %v1092
        %v1094 = vsel %vm742, %v1091, 0.0
        %1095 = vadd.xlane.f32.xlu0 %v1094
        %v1096 = vpop.xlane.xlu0 %1095
        %v1097 = vsel %vm742, %v1093, 0.0
        %1098 = vadd.xlane.f32.xlu0 %v1097
        %v1099 = vpop.xlane.xlu0 %1098
        %v1100 = vrcp.pop %v1096
        %v1101 = vrcp.pop %v1099
        %v1102 = vmul.f32 %v1091, %v1100
        %v1103 = vmul.f32 %v1093, %v1101
        %v1104 = vpack.c.bf16 %v1102, %v1102
        %v1105 = vpack.c.bf16 %v1103, %v1103
        %1106 = vrot.lane.b32.xlu0 %v737, 56
        %v1107 = vpop.permute.xlu0 %1106
        %v1109 = vsel %vm742, %v1104, 0
        %v1112 = vsel %vm875, %v1107, 0
        %1114 = vmatprep.subr.bf16.mxu0 0
        %1115 = vmatpush1.bf16.msra.mxu0 0
        %1116 = vmatprep.subr.bf16.mxu0 0
        %1117 = vmatpush1.bf16.msra.mxu0 0
        %1118 = vmatprep.subr.bf16.mxu0 0
        %1119 = vmatpush1.bf16.msra.mxu0 0
        %1120 = vmatprep.subr.bf16.mxu0 0
        %1121 = vmatpush1.bf16.msra.mxu0 0
        %1122 = vmatprep.subr.bf16.mxu0 0
        %1123 = vmatpush1.bf16.msra.mxu0 0
        %1124 = vmatprep.subr.bf16.mxu0 0
        %1125 = vmatpush1.bf16.msra.mxu0 0
        %1126 = vmatprep.subr.bf16.mxu0 0
        %1127 = vmatpush1.bf16.msra.mxu0 0
        %1128 = vmatprep.subr.bf16.mxu0 0
        %1129 = vmatpush1.bf16.msra.mxu0 %v1112
        %1130 = vmatprep.subr.bf16.mxu0 0
        %1131 = vmatpush2.bf16.msra.mxu0 0
        %1132 = vmatprep.subr.bf16.mxu0 0
        %1133 = vmatpush2.bf16.msra.mxu0 0
        %1134 = vmatprep.subr.bf16.mxu0 0
        %1135 = vmatpush2.bf16.msra.mxu0 0
        %1136 = vmatprep.subr.bf16.mxu0 0
        %1137 = vmatpush2.bf16.msra.mxu0 0
        %1138 = vmatprep.subr.bf16.mxu0 0
        %1139 = vmatpush2.bf16.msra.mxu0 0
        %1140 = vmatprep.subr.bf16.mxu0 0
        %1141 = vmatpush2.bf16.msra.mxu0 0
        %1142 = vmatprep.subr.bf16.mxu0 0
        %1143 = vmatpush2.bf16.msra.mxu0 0
        %1144 = vmatprep.subr.bf16.mxu0 0
        %1145 = vmatpush2.bf16.msra.mxu0 0
        %1146 = vmatprep.mubr.bf16.mxu0 0
        %1147 = vmatmul.mubr.bf16.gmra.mxu0 %v1109
        %v1148 = vpop.f32.mrf.mxu0
        %v1149 = vadd.f32 0.0, %v1148
        %v1150 = vpop.f32.mrf.mxu0
        %v1151 = vpop.f32.mrf.mxu0
        %v1152 = vpop.f32.mrf.mxu0
        %1153 = vdwg.mxu0
        %1154 = vrot.lane.b32.xlu0 %v738, 56
        %v1155 = vpop.permute.xlu0 %1154
        %v1157 = vsel %vm742, %v1105, 0
        %v1160 = vsel %vm875, %v1155, 0
        %1162 = vmatprep.subr.bf16.mxu0 0
        %1163 = vmatpush1.bf16.msra.mxu0 0
        %1164 = vmatprep.subr.bf16.mxu0 0
        %1165 = vmatpush1.bf16.msra.mxu0 0
        %1166 = vmatprep.subr.bf16.mxu0 0
        %1167 = vmatpush1.bf16.msra.mxu0 0
        %1168 = vmatprep.subr.bf16.mxu0 0
        %1169 = vmatpush1.bf16.msra.mxu0 0
        %1170 = vmatprep.subr.bf16.mxu0 0
        %1171 = vmatpush1.bf16.msra.mxu0 0
        %1172 = vmatprep.subr.bf16.mxu0 0
        %1173 = vmatpush1.bf16.msra.mxu0 0
        %1174 = vmatprep.subr.bf16.mxu0 0
        %1175 = vmatpush1.bf16.msra.mxu0 0
        %1176 = vmatprep.subr.bf16.mxu0 0
        %1177 = vmatpush1.bf16.msra.mxu0 %v1160
        %1178 = vmatprep.subr.bf16.mxu0 0
        %1179 = vmatpush2.bf16.msra.mxu0 0
        %1180 = vmatprep.subr.bf16.mxu0 0
        %1181 = vmatpush2.bf16.msra.mxu0 0
        %1182 = vmatprep.subr.bf16.mxu0 0
        %1183 = vmatpush2.bf16.msra.mxu0 0
        %1184 = vmatprep.subr.bf16.mxu0 0
        %1185 = vmatpush2.bf16.msra.mxu0 0
        %1186 = vmatprep.subr.bf16.mxu0 0
        %1187 = vmatpush2.bf16.msra.mxu0 0
        %1188 = vmatprep.subr.bf16.mxu0 0
        %1189 = vmatpush2.bf16.msra.mxu0 0
        %1190 = vmatprep.subr.bf16.mxu0 0
        %1191 = vmatpush2.bf16.msra.mxu0 0
        %1192 = vmatprep.subr.bf16.mxu0 0
        %1193 = vmatpush2.bf16.msra.mxu0 0
        %1194 = vmatprep.mubr.bf16.mxu0 0
        %1195 = vmatmul.mubr.bf16.gmra.mxu0 %v1157
        %v1196 = vpop.f32.mrf.mxu0
        %v1197 = vadd.f32 0.0, %v1196
        %v1198 = vpop.f32.mrf.mxu0
        %v1199 = vpop.f32.mrf.mxu0
        %v1200 = vpop.f32.mrf.mxu0
        %1201 = vdwg.mxu0
        %v1202 = vpack.c.bf16 %v1197, %v1149
        %v1204 = vunpack.c.l.b16 %v1202
        %v1205 = vunpack.c.h.b16 %v1202
        %v1206 = vpack.c.b16 %v1204, %v1204
        %v1207 = vpack.c.b16 %v1205, %v1205
        %1208 = vrot.lane.b32.xlu0 %v1206, 8
        %v1209 = vpop.permute.xlu0 %1208
        %1210 = vrot.lane.b32.xlu0 %v1207, 8
        %v1211 = vpop.permute.xlu0 %1210
        %vm1214 = vcmask 126016
        %1215 = vst.msk [vmem:[#allocation4] sm:$0xf] %vm1214, %v1209
        %1216 = vst.msk [vmem:[#allocation4 + $0x4] sm:$0xf] %vm1214, %v1211
        %1217 = vrot.lane.b32.xlu0 %v735, 112
        %v1218 = vpop.permute.xlu0 %1217
        %1219 = vrot.lane.b32.xlu0 %v737, 80
        %v1220 = vpop.permute.xlu0 %1219
        %v1222 = vsel %vm742, %v1218, 0
        %v1225 = vsel %vm742, %v1220, 0
        %1227 = vmatprep.subr.bf16.mxu0 0
        %1228 = vmatpush1.bf16.xpose.msra.mxu0 0
        %1229 = vmatprep.subr.bf16.mxu0 0
        %1230 = vmatpush1.bf16.xpose.msra.mxu0 0
        %1231 = vmatprep.subr.bf16.mxu0 0
        %1232 = vmatpush1.bf16.xpose.msra.mxu0 0
        %1233 = vmatprep.subr.bf16.mxu0 0
        %1234 = vmatpush1.bf16.xpose.msra.mxu0 0
        %1235 = vmatprep.subr.bf16.mxu0 0
        %1236 = vmatpush1.bf16.xpose.msra.mxu0 0
        %1237 = vmatprep.subr.bf16.mxu0 0
        %1238 = vmatpush1.bf16.xpose.msra.mxu0 0
        %1239 = vmatprep.subr.bf16.mxu0 0
        %1240 = vmatpush1.bf16.xpose.msra.mxu0 0
        %1241 = vmatprep.subr.bf16.mxu0 0
        %1242 = vmatpush1.bf16.xpose.msra.mxu0 %v1225
        %1243 = vmatprep.subr.bf16.mxu0 0
        %1244 = vmatpush2.bf16.xpose.msra.mxu0 0
        %1245 = vmatprep.subr.bf16.mxu0 0
        %1246 = vmatpush2.bf16.xpose.msra.mxu0 0
        %1247 = vmatprep.subr.bf16.mxu0 0
        %1248 = vmatpush2.bf16.xpose.msra.mxu0 0
        %1249 = vmatprep.subr.bf16.mxu0 0
        %1250 = vmatpush2.bf16.xpose.msra.mxu0 0
        %1251 = vmatprep.subr.bf16.mxu0 0
        %1252 = vmatpush2.bf16.xpose.msra.mxu0 0
        %1253 = vmatprep.subr.bf16.mxu0 0
        %1254 = vmatpush2.bf16.xpose.msra.mxu0 0
        %1255 = vmatprep.subr.bf16.mxu0 0
        %1256 = vmatpush2.bf16.xpose.msra.mxu0 0
        %1257 = vmatprep.subr.bf16.mxu0 0
        %1258 = vmatpush2.bf16.xpose.msra.mxu0 0
        %1259 = vmatprep.mubr.bf16.mxu0 0
        %1260 = vmatmul.mubr.bf16.gmra.mxu0 %v1222
        %v1261 = vpop.f32.mrf.mxu0
        %v1262 = vadd.f32 0.0, %v1261
        %v1263 = vpop.f32.mrf.mxu0
        %v1264 = vpop.f32.mrf.mxu0
        %v1265 = vpop.f32.mrf.mxu0
        %1266 = vdwg.mxu0
        %1267 = vrot.lane.b32.xlu0 %v736, 112
        %v1268 = vpop.permute.xlu0 %1267
        %1269 = vrot.lane.b32.xlu0 %v738, 80
        %v1270 = vpop.permute.xlu0 %1269
        %v1272 = vsel %vm742, %v1268, 0
        %v1275 = vsel %vm742, %v1270, 0
        %1277 = vmatprep.subr.bf16.mxu0 0
        %1278 = vmatpush1.bf16.xpose.msra.mxu0 0
        %1279 = vmatprep.subr.bf16.mxu0 0
        %1280 = vmatpush1.bf16.xpose.msra.mxu0 0
        %1281 = vmatprep.subr.bf16.mxu0 0
        %1282 = vmatpush1.bf16.xpose.msra.mxu0 0
        %1283 = vmatprep.subr.bf16.mxu0 0
        %1284 = vmatpush1.bf16.xpose.msra.mxu0 0
        %1285 = vmatprep.subr.bf16.mxu0 0
        %1286 = vmatpush1.bf16.xpose.msra.mxu0 0
        %1287 = vmatprep.subr.bf16.mxu0 0
        %1288 = vmatpush1.bf16.xpose.msra.mxu0 0
        %1289 = vmatprep.subr.bf16.mxu0 0
        %1290 = vmatpush1.bf16.xpose.msra.mxu0 0
        %1291 = vmatprep.subr.bf16.mxu0 0
        %1292 = vmatpush1.bf16.xpose.msra.mxu0 %v1275
        %1293 = vmatprep.subr.bf16.mxu0 0
        %1294 = vmatpush2.bf16.xpose.msra.mxu0 0
        %1295 = vmatprep.subr.bf16.mxu0 0
        %1296 = vmatpush2.bf16.xpose.msra.mxu0 0
        %1297 = vmatprep.subr.bf16.mxu0 0
        %1298 = vmatpush2.bf16.xpose.msra.mxu0 0
        %1299 = vmatprep.subr.bf16.mxu0 0
        %1300 = vmatpush2.bf16.xpose.msra.mxu0 0
        %1301 = vmatprep.subr.bf16.mxu0 0
        %1302 = vmatpush2.bf16.xpose.msra.mxu0 0
        %1303 = vmatprep.subr.bf16.mxu0 0
        %1304 = vmatpush2.bf16.xpose.msra.mxu0 0
        %1305 = vmatprep.subr.bf16.mxu0 0
        %1306 = vmatpush2.bf16.xpose.msra.mxu0 0
        %1307 = vmatprep.subr.bf16.mxu0 0
        %1308 = vmatpush2.bf16.xpose.msra.mxu0 0
        %1309 = vmatprep.mubr.bf16.mxu0 0
        %1310 = vmatmul.mubr.bf16.gmra.mxu0 %v1272
        %v1311 = vpop.f32.mrf.mxu0
        %v1312 = vadd.f32 0.0, %v1311
        %v1313 = vpop.f32.mrf.mxu0
        %v1314 = vpop.f32.mrf.mxu0
        %v1315 = vpop.f32.mrf.mxu0
        %1316 = vdwg.mxu0
        %v1317 = vsel %vm842, %v1262, -1e+09
        %v1318 = vsel %vm843, %v1312, -1e+09
        %v1319 = vsel %vm742, %v1317, -inf
        %1320 = vmax.xlane.f32.xlu0 %v1319
        %v1321 = vpop.xlane.xlu0 %1320
        %v1322 = vsel %vm742, %v1318, -inf
        %1323 = vmax.xlane.f32.xlu0 %v1322
        %v1324 = vpop.xlane.xlu0 %1323
        %v1325 = vsub.f32 %v1317, %v1321
        %v1326 = vsub.f32 %v1318, %v1324
        %v1327 = vmul.f32 %v1325, 1.442695
        %v1328 = vpow.pop %v1327
        %v1329 = vmul.f32 %v1326, 1.442695
        %v1330 = vpow.pop %v1329
        %v1331 = vsel %vm742, %v1328, 0.0
        %1332 = vadd.xlane.f32.xlu0 %v1331
        %v1333 = vpop.xlane.xlu0 %1332
        %v1334 = vsel %vm742, %v1330, 0.0
        %1335 = vadd.xlane.f32.xlu0 %v1334
        %v1336 = vpop.xlane.xlu0 %1335
        %v1337 = vrcp.pop %v1333
        %v1338 = vrcp.pop %v1336
        %v1339 = vmul.f32 %v1328, %v1337
        %v1340 = vmul.f32 %v1330, %v1338
        %v1341 = vpack.c.bf16 %v1339, %v1339
        %v1342 = vpack.c.bf16 %v1340, %v1340
        %1343 = vrot.lane.b32.xlu0 %v737, 48
        %v1344 = vpop.permute.xlu0 %1343
        %v1346 = vsel %vm742, %v1341, 0
        %v1349 = vsel %vm875, %v1344, 0
        %1351 = vmatprep.subr.bf16.mxu0 0
        %1352 = vmatpush1.bf16.msra.mxu0 0
        %1353 = vmatprep.subr.bf16.mxu0 0
        %1354 = vmatpush1.bf16.msra.mxu0 0
        %1355 = vmatprep.subr.bf16.mxu0 0
        %1356 = vmatpush1.bf16.msra.mxu0 0
        %1357 = vmatprep.subr.bf16.mxu0 0
        %1358 = vmatpush1.bf16.msra.mxu0 0
        %1359 = vmatprep.subr.bf16.mxu0 0
        %1360 = vmatpush1.bf16.msra.mxu0 0
        %1361 = vmatprep.subr.bf16.mxu0 0
        %1362 = vmatpush1.bf16.msra.mxu0 0
        %1363 = vmatprep.subr.bf16.mxu0 0
        %1364 = vmatpush1.bf16.msra.mxu0 0
        %1365 = vmatprep.subr.bf16.mxu0 0
        %1366 = vmatpush1.bf16.msra.mxu0 %v1349
        %1367 = vmatprep.subr.bf16.mxu0 0
        %1368 = vmatpush2.bf16.msra.mxu0 0
        %1369 = vmatprep.subr.bf16.mxu0 0
        %1370 = vmatpush2.bf16.msra.mxu0 0
        %1371 = vmatprep.subr.bf16.mxu0 0
        %1372 = vmatpush2.bf16.msra.mxu0 0
        %1373 = vmatprep.subr.bf16.mxu0 0
        %1374 = vmatpush2.bf16.msra.mxu0 0
        %1375 = vmatprep.subr.bf16.mxu0 0
        %1376 = vmatpush2.bf16.msra.mxu0 0
        %1377 = vmatprep.subr.bf16.mxu0 0
        %1378 = vmatpush2.bf16.msra.mxu0 0
        %1379 = vmatprep.subr.bf16.mxu0 0
        %1380 = vmatpush2.bf16.msra.mxu0 0
        %1381 = vmatprep.subr.bf16.mxu0 0
        %1382 = vmatpush2.bf16.msra.mxu0 0
        %1383 = vmatprep.mubr.bf16.mxu0 0
        %1384 = vmatmul.mubr.bf16.gmra.mxu0 %v1346
        %v1385 = vpop.f32.mrf.mxu0
        %v1386 = vadd.f32 0.0, %v1385
        %v1387 = vpop.f32.mrf.mxu0
        %v1388 = vpop.f32.mrf.mxu0
        %v1389 = vpop.f32.mrf.mxu0
        %1390 = vdwg.mxu0
        %1391 = vrot.lane.b32.xlu0 %v738, 48
        %v1392 = vpop.permute.xlu0 %1391
        %v1394 = vsel %vm742, %v1342, 0
        %v1397 = vsel %vm875, %v1392, 0
        %1399 = vmatprep.subr.bf16.mxu0 0
        %1400 = vmatpush1.bf16.msra.mxu0 0
        %1401 = vmatprep.subr.bf16.mxu0 0
        %1402 = vmatpush1.bf16.msra.mxu0 0
        %1403 = vmatprep.subr.bf16.mxu0 0
        %1404 = vmatpush1.bf16.msra.mxu0 0
        %1405 = vmatprep.subr.bf16.mxu0 0
        %1406 = vmatpush1.bf16.msra.mxu0 0
        %1407 = vmatprep.subr.bf16.mxu0 0
        %1408 = vmatpush1.bf16.msra.mxu0 0
        %1409 = vmatprep.subr.bf16.mxu0 0
        %1410 = vmatpush1.bf16.msra.mxu0 0
        %1411 = vmatprep.subr.bf16.mxu0 0
        %1412 = vmatpush1.bf16.msra.mxu0 0
        %1413 = vmatprep.subr.bf16.mxu0 0
        %1414 = vmatpush1.bf16.msra.mxu0 %v1397
        %1415 = vmatprep.subr.bf16.mxu0 0
        %1416 = vmatpush2.bf16.msra.mxu0 0
        %1417 = vmatprep.subr.bf16.mxu0 0
        %1418 = vmatpush2.bf16.msra.mxu0 0
        %1419 = vmatprep.subr.bf16.mxu0 0
        %1420 = vmatpush2.bf16.msra.mxu0 0
        %1421 = vmatprep.subr.bf16.mxu0 0
        %1422 = vmatpush2.bf16.msra.mxu0 0
        %1423 = vmatprep.subr.bf16.mxu0 0
        %1424 = vmatpush2.bf16.msra.mxu0 0
        %1425 = vmatprep.subr.bf16.mxu0 0
        %1426 = vmatpush2.bf16.msra.mxu0 0
        %1427 = vmatprep.subr.bf16.mxu0 0
        %1428 = vmatpush2.bf16.msra.mxu0 0
        %1429 = vmatprep.subr.bf16.mxu0 0
        %1430 = vmatpush2.bf16.msra.mxu0 0
        %1431 = vmatprep.mubr.bf16.mxu0 0
        %1432 = vmatmul.mubr.bf16.gmra.mxu0 %v1394
        %v1433 = vpop.f32.mrf.mxu0
        %v1434 = vadd.f32 0.0, %v1433
        %v1435 = vpop.f32.mrf.mxu0
        %v1436 = vpop.f32.mrf.mxu0
        %v1437 = vpop.f32.mrf.mxu0
        %1438 = vdwg.mxu0
        %v1439 = vpack.c.bf16 %v1434, %v1386
        %v1441 = vunpack.c.l.b16 %v1439
        %v1442 = vunpack.c.h.b16 %v1439
        %v1443 = vpack.c.b16 %v1441, %v1441
        %v1444 = vpack.c.b16 %v1442, %v1442
        %1445 = vrot.lane.b32.xlu0 %v1443, 16
        %v1446 = vpop.permute.xlu0 %1445
        %1447 = vrot.lane.b32.xlu0 %v1444, 16
        %v1448 = vpop.permute.xlu0 %1447
        %vm1451 = vcmask 191616
        %1452 = vst.msk [vmem:[#allocation4] sm:$0xf] %vm1451, %v1446
        %1453 = vst.msk [vmem:[#allocation4 + $0x4] sm:$0xf] %vm1451, %v1448
        %1454 = vrot.lane.b32.xlu0 %v735, 104
        %v1455 = vpop.permute.xlu0 %1454
        %1456 = vrot.lane.b32.xlu0 %v737, 72
        %v1457 = vpop.permute.xlu0 %1456
        %v1459 = vsel %vm742, %v1455, 0
        %v1462 = vsel %vm742, %v1457, 0
        %1464 = vmatprep.subr.bf16.mxu0 0
        %1465 = vmatpush1.bf16.xpose.msra.mxu0 0
        %1466 = vmatprep.subr.bf16.mxu0 0
        %1467 = vmatpush1.bf16.xpose.msra.mxu0 0
        %1468 = vmatprep.subr.bf16.mxu0 0
        %1469 = vmatpush1.bf16.xpose.msra.mxu0 0
        %1470 = vmatprep.subr.bf16.mxu0 0
        %1471 = vmatpush1.bf16.xpose.msra.mxu0 0
        %1472 = vmatprep.subr.bf16.mxu0 0
        %1473 = vmatpush1.bf16.xpose.msra.mxu0 0
        %1474 = vmatprep.subr.bf16.mxu0 0
        %1475 = vmatpush1.bf16.xpose.msra.mxu0 0
        %1476 = vmatprep.subr.bf16.mxu0 0
        %1477 = vmatpush1.bf16.xpose.msra.mxu0 0
        %1478 = vmatprep.subr.bf16.mxu0 0
        %1479 = vmatpush1.bf16.xpose.msra.mxu0 %v1462
        %1480 = vmatprep.subr.bf16.mxu0 0
        %1481 = vmatpush2.bf16.xpose.msra.mxu0 0
        %1482 = vmatprep.subr.bf16.mxu0 0
        %1483 = vmatpush2.bf16.xpose.msra.mxu0 0
        %1484 = vmatprep.subr.bf16.mxu0 0
        %1485 = vmatpush2.bf16.xpose.msra.mxu0 0
        %1486 = vmatprep.subr.bf16.mxu0 0
        %1487 = vmatpush2.bf16.xpose.msra.mxu0 0
        %1488 = vmatprep.subr.bf16.mxu0 0
        %1489 = vmatpush2.bf16.xpose.msra.mxu0 0
        %1490 = vmatprep.subr.bf16.mxu0 0
        %1491 = vmatpush2.bf16.xpose.msra.mxu0 0
        %1492 = vmatprep.subr.bf16.mxu0 0
        %1493 = vmatpush2.bf16.xpose.msra.mxu0 0
        %1494 = vmatprep.subr.bf16.mxu0 0
        %1495 = vmatpush2.bf16.xpose.msra.mxu0 0
        %1496 = vmatprep.mubr.bf16.mxu0 0
        %1497 = vmatmul.mubr.bf16.gmra.mxu0 %v1459
        %v1498 = vpop.f32.mrf.mxu0
        %v1499 = vadd.f32 0.0, %v1498
        %v1500 = vpop.f32.mrf.mxu0
        %v1501 = vpop.f32.mrf.mxu0
        %v1502 = vpop.f32.mrf.mxu0
        %1503 = vdwg.mxu0
        %1504 = vrot.lane.b32.xlu0 %v736, 104
        %v1505 = vpop.permute.xlu0 %1504
        %1506 = vrot.lane.b32.xlu0 %v738, 72
        %v1507 = vpop.permute.xlu0 %1506
        %v1509 = vsel %vm742, %v1505, 0
        %v1512 = vsel %vm742, %v1507, 0
        %1514 = vmatprep.subr.bf16.mxu0 0
        %1515 = vmatpush1.bf16.xpose.msra.mxu0 0
        %1516 = vmatprep.subr.bf16.mxu0 0
        %1517 = vmatpush1.bf16.xpose.msra.mxu0 0
        %1518 = vmatprep.subr.bf16.mxu0 0
        %1519 = vmatpush1.bf16.xpose.msra.mxu0 0
        %1520 = vmatprep.subr.bf16.mxu0 0
        %1521 = vmatpush1.bf16.xpose.msra.mxu0 0
        %1522 = vmatprep.subr.bf16.mxu0 0
        %1523 = vmatpush1.bf16.xpose.msra.mxu0 0
        %1524 = vmatprep.subr.bf16.mxu0 0
        %1525 = vmatpush1.bf16.xpose.msra.mxu0 0
        %1526 = vmatprep.subr.bf16.mxu0 0
        %1527 = vmatpush1.bf16.xpose.msra.mxu0 0
        %1528 = vmatprep.subr.bf16.mxu0 0
        %1529 = vmatpush1.bf16.xpose.msra.mxu0 %v1512
        %1530 = vmatprep.subr.bf16.mxu0 0
        %1531 = vmatpush2.bf16.xpose.msra.mxu0 0
        %1532 = vmatprep.subr.bf16.mxu0 0
        %1533 = vmatpush2.bf16.xpose.msra.mxu0 0
        %1534 = vmatprep.subr.bf16.mxu0 0
        %1535 = vmatpush2.bf16.xpose.msra.mxu0 0
        %1536 = vmatprep.subr.bf16.mxu0 0
        %1537 = vmatpush2.bf16.xpose.msra.mxu0 0
        %1538 = vmatprep.subr.bf16.mxu0 0
        %1539 = vmatpush2.bf16.xpose.msra.mxu0 0
        %1540 = vmatprep.subr.bf16.mxu0 0
        %1541 = vmatpush2.bf16.xpose.msra.mxu0 0
        %1542 = vmatprep.subr.bf16.mxu0 0
        %1543 = vmatpush2.bf16.xpose.msra.mxu0 0
        %1544 = vmatprep.subr.bf16.mxu0 0
        %1545 = vmatpush2.bf16.xpose.msra.mxu0 0
        %1546 = vmatprep.mubr.bf16.mxu0 0
        %1547 = vmatmul.mubr.bf16.gmra.mxu0 %v1509
        %v1548 = vpop.f32.mrf.mxu0
        %v1549 = vadd.f32 0.0, %v1548
        %v1550 = vpop.f32.mrf.mxu0
        %v1551 = vpop.f32.mrf.mxu0
        %v1552 = vpop.f32.mrf.mxu0
        %1553 = vdwg.mxu0
        %v1554 = vsel %vm842, %v1499, -1e+09
        %v1555 = vsel %vm843, %v1549, -1e+09
        %v1556 = vsel %vm742, %v1554, -inf
        %1557 = vmax.xlane.f32.xlu0 %v1556
        %v1558 = vpop.xlane.xlu0 %1557
        %v1559 = vsel %vm742, %v1555, -inf
        %1560 = vmax.xlane.f32.xlu0 %v1559
        %v1561 = vpop.xlane.xlu0 %1560
        %v1562 = vsub.f32 %v1554, %v1558
        %v1563 = vsub.f32 %v1555, %v1561
        %v1564 = vmul.f32 %v1562, 1.442695
        %v1565 = vpow.pop %v1564
        %v1566 = vmul.f32 %v1563, 1.442695
        %v1567 = vpow.pop %v1566
        %v1568 = vsel %vm742, %v1565, 0.0
        %1569 = vadd.xlane.f32.xlu0 %v1568
        %v1570 = vpop.xlane.xlu0 %1569
        %v1571 = vsel %vm742, %v1567, 0.0
        %1572 = vadd.xlane.f32.xlu0 %v1571
        %v1573 = vpop.xlane.xlu0 %1572
        %v1574 = vrcp.pop %v1570
        %v1575 = vrcp.pop %v1573
        %v1576 = vmul.f32 %v1565, %v1574
        %v1577 = vmul.f32 %v1567, %v1575
        %v1578 = vpack.c.bf16 %v1576, %v1576
        %v1579 = vpack.c.bf16 %v1577, %v1577
        %1580 = vrot.lane.b32.xlu0 %v737, 40
        %v1581 = vpop.permute.xlu0 %1580
        %v1583 = vsel %vm742, %v1578, 0
        %v1586 = vsel %vm875, %v1581, 0
        %1588 = vmatprep.subr.bf16.mxu0 0
        %1589 = vmatpush1.bf16.msra.mxu0 0
        %1590 = vmatprep.subr.bf16.mxu0 0
        %1591 = vmatpush1.bf16.msra.mxu0 0
        %1592 = vmatprep.subr.bf16.mxu0 0
        %1593 = vmatpush1.bf16.msra.mxu0 0
        %1594 = vmatprep.subr.bf16.mxu0 0
        %1595 = vmatpush1.bf16.msra.mxu0 0
        %1596 = vmatprep.subr.bf16.mxu0 0
        %1597 = vmatpush1.bf16.msra.mxu0 0
        %1598 = vmatprep.subr.bf16.mxu0 0
        %1599 = vmatpush1.bf16.msra.mxu0 0
        %1600 = vmatprep.subr.bf16.mxu0 0
        %1601 = vmatpush1.bf16.msra.mxu0 0
        %1602 = vmatprep.subr.bf16.mxu0 0
        %1603 = vmatpush1.bf16.msra.mxu0 %v1586
        %1604 = vmatprep.subr.bf16.mxu0 0
        %1605 = vmatpush2.bf16.msra.mxu0 0
        %1606 = vmatprep.subr.bf16.mxu0 0
        %1607 = vmatpush2.bf16.msra.mxu0 0
        %1608 = vmatprep.subr.bf16.mxu0 0
        %1609 = vmatpush2.bf16.msra.mxu0 0
        %1610 = vmatprep.subr.bf16.mxu0 0
        %1611 = vmatpush2.bf16.msra.mxu0 0
        %1612 = vmatprep.subr.bf16.mxu0 0
        %1613 = vmatpush2.bf16.msra.mxu0 0
        %1614 = vmatprep.subr.bf16.mxu0 0
        %1615 = vmatpush2.bf16.msra.mxu0 0
        %1616 = vmatprep.subr.bf16.mxu0 0
        %1617 = vmatpush2.bf16.msra.mxu0 0
        %1618 = vmatprep.subr.bf16.mxu0 0
        %1619 = vmatpush2.bf16.msra.mxu0 0
        %1620 = vmatprep.mubr.bf16.mxu0 0
        %1621 = vmatmul.mubr.bf16.gmra.mxu0 %v1583
        %v1622 = vpop.f32.mrf.mxu0
        %v1623 = vadd.f32 0.0, %v1622
        %v1624 = vpop.f32.mrf.mxu0
        %v1625 = vpop.f32.mrf.mxu0
        %v1626 = vpop.f32.mrf.mxu0
        %1627 = vdwg.mxu0
        %1628 = vrot.lane.b32.xlu0 %v738, 40
        %v1629 = vpop.permute.xlu0 %1628
        %v1631 = vsel %vm742, %v1579, 0
        %v1634 = vsel %vm875, %v1629, 0
        %1636 = vmatprep.subr.bf16.mxu0 0
        %1637 = vmatpush1.bf16.msra.mxu0 0
        %1638 = vmatprep.subr.bf16.mxu0 0
        %1639 = vmatpush1.bf16.msra.mxu0 0
        %1640 = vmatprep.subr.bf16.mxu0 0
        %1641 = vmatpush1.bf16.msra.mxu0 0
        %1642 = vmatprep.subr.bf16.mxu0 0
        %1643 = vmatpush1.bf16.msra.mxu0 0
        %1644 = vmatprep.subr.bf16.mxu0 0
        %1645 = vmatpush1.bf16.msra.mxu0 0
        %1646 = vmatprep.subr.bf16.mxu0 0
        %1647 = vmatpush1.bf16.msra.mxu0 0
        %1648 = vmatprep.subr.bf16.mxu0 0
        %1649 = vmatpush1.bf16.msra.mxu0 0
        %1650 = vmatprep.subr.bf16.mxu0 0
        %1651 = vmatpush1.bf16.msra.mxu0 %v1634
        %1652 = vmatprep.subr.bf16.mxu0 0
        %1653 = vmatpush2.bf16.msra.mxu0 0
        %1654 = vmatprep.subr.bf16.mxu0 0
        %1655 = vmatpush2.bf16.msra.mxu0 0
        %1656 = vmatprep.subr.bf16.mxu0 0
        %1657 = vmatpush2.bf16.msra.mxu0 0
        %1658 = vmatprep.subr.bf16.mxu0 0
        %1659 = vmatpush2.bf16.msra.mxu0 0
        %1660 = vmatprep.subr.bf16.mxu0 0
        %1661 = vmatpush2.bf16.msra.mxu0 0
        %1662 = vmatprep.subr.bf16.mxu0 0
        %1663 = vmatpush2.bf16.msra.mxu0 0
        %1664 = vmatprep.subr.bf16.mxu0 0
        %1665 = vmatpush2.bf16.msra.mxu0 0
        %1666 = vmatprep.subr.bf16.mxu0 0
        %1667 = vmatpush2.bf16.msra.mxu0 0
        %1668 = vmatprep.mubr.bf16.mxu0 0
        %1669 = vmatmul.mubr.bf16.gmra.mxu0 %v1631
        %v1670 = vpop.f32.mrf.mxu0
        %v1671 = vadd.f32 0.0, %v1670
        %v1672 = vpop.f32.mrf.mxu0
        %v1673 = vpop.f32.mrf.mxu0
        %v1674 = vpop.f32.mrf.mxu0
        %1675 = vdwg.mxu0
        %v1676 = vpack.c.bf16 %v1671, %v1623
        %v1678 = vunpack.c.l.b16 %v1676
        %v1679 = vunpack.c.h.b16 %v1676
        %v1680 = vpack.c.b16 %v1678, %v1678
        %v1681 = vpack.c.b16 %v1679, %v1679
        %1682 = vrot.lane.b32.xlu0 %v1680, 24
        %v1683 = vpop.permute.xlu0 %1682
        %1684 = vrot.lane.b32.xlu0 %v1681, 24
        %v1685 = vpop.permute.xlu0 %1684
        %vm1688 = vcmask 257216
        %1689 = vst.msk [vmem:[#allocation4] sm:$0xf] %vm1688, %v1683
        %1690 = vst.msk [vmem:[#allocation4 + $0x4] sm:$0xf] %vm1688, %v1685
        %v1691 = vld [vmem:[#allocation2] sm:$0xff]
        %v1692 = vld [vmem:[#allocation2 + $0x8] sm:$0xff]
        %v1693 = vld [vmem:[#allocation4] sm:$0xf]
        %v1694 = vld [vmem:[#allocation4 + $0x4] sm:$0xf]
        %v1695 = vld [vmem:[#allocation8] sm:$0xf]
        %v1696 = vld [vmem:[#allocation8 + $0x4] sm:$0xf]
        %v1697 = vld [vmem:[#allocation8 + $0x8] sm:$0xf]
        %v1698 = vld [vmem:[#allocation8 + $0xc] sm:$0xf]
        %v1701 = vunpack.c.l.b16 %v1693
        %v1702 = vunpack.c.l.b16 %v1694
        %v1703 = vpack.c.b16 %v1702, %v1701
        %v1708 = vunpack.c.l.b16 %v1695
        %v1709 = vunpack.c.l.b16 %v1696
        %v1710 = vunpack.c.l.b16 %v1697
        %v1711 = vunpack.c.l.b16 %v1698
        %v1712 = vpack.c.b16 %v1709, %v1708
        %v1713 = vpack.c.b16 %v1711, %v1710
        %v1717 = vsel %vm684, %v1703, 0
        %1719 = vmatprep.subr.bf16.mxu0 0
        %1720 = vmatpush1.bf16.msra.mxu0 0
        %1721 = vmatprep.subr.bf16.mxu0 0
        %1722 = vmatpush1.bf16.msra.mxu0 0
        %1723 = vmatprep.subr.bf16.mxu0 0
        %1724 = vmatpush1.bf16.msra.mxu0 0
        %1725 = vmatprep.subr.bf16.mxu0 0
        %1726 = vmatpush1.bf16.msra.mxu0 0
        %1727 = vmatprep.subr.bf16.mxu0 0
        %1728 = vmatpush1.bf16.msra.mxu0 0
        %1729 = vmatprep.subr.bf16.mxu0 0
        %1730 = vmatpush1.bf16.msra.mxu0 0
        %1731 = vmatprep.subr.bf16.mxu0 0
        %1732 = vmatpush1.bf16.msra.mxu0 %v1713
        %1733 = vmatprep.subr.bf16.mxu0 0
        %1734 = vmatpush1.bf16.msra.mxu0 %v1712
        %1735 = vmatprep.subr.bf16.mxu0 0
        %1736 = vmatpush2.bf16.msra.mxu0 0
        %1737 = vmatprep.subr.bf16.mxu0 0
        %1738 = vmatpush2.bf16.msra.mxu0 0
        %1739 = vmatprep.subr.bf16.mxu0 0
        %1740 = vmatpush2.bf16.msra.mxu0 0
        %1741 = vmatprep.subr.bf16.mxu0 0
        %1742 = vmatpush2.bf16.msra.mxu0 0
        %1743 = vmatprep.subr.bf16.mxu0 0
        %1744 = vmatpush2.bf16.msra.mxu0 0
        %1745 = vmatprep.subr.bf16.mxu0 0
        %1746 = vmatpush2.bf16.msra.mxu0 0
        %1747 = vmatprep.subr.bf16.mxu0 0
        %1748 = vmatpush2.bf16.msra.mxu0 0
        %1749 = vmatprep.subr.bf16.mxu0 0
        %1750 = vmatpush2.bf16.msra.mxu0 0
        %1751 = vmatprep.mubr.bf16.mxu0 0
        %1752 = vmatmul.mubr.bf16.gmra.mxu0 %v1717
        %v1753 = vpop.f32.mrf.mxu0
        %v1754 = vadd.f32 0.0, %v1753
        %v1755 = vpop.f32.mrf.mxu0
        %v1756 = vpop.f32.mrf.mxu0
        %v1757 = vadd.f32 0.0, %v1756
        %v1758 = vpop.f32.mrf.mxu0
        %1759 = vdwg.mxu0
        %v1760 = vadd.f32 %v1691, %v1754
        %v1761 = vadd.f32 %v1692, %v1757
        %1762 = vst.msk [vmem:[#allocation2] sm:$0xff] %vm684, %v1760
        %1763 = vst.msk [vmem:[#allocation2 + $0x8] sm:$0xff] %vm684, %v1761
        // Predicated region
        $region105: #{tpu_custom_call.1} parent=75 // pred_check
          %p1764 = pneg %p634
        $region106: #{tpu_custom_call.1} parent=75 // pred_check_branch
          %1766 = sbr.rel (%p1764) target = $region108
        $region107: #{tpu_custom_call.1} parent=75 // pred_region
          %v1767 = vld [vmem:[%s619] sm:$0xff]
          %v1768 = vld [vmem:[%s619 + $0x8] sm:$0xff]
          %v1769 = vld [vmem:[#allocation2] sm:$0xff]
          %v1770 = vld [vmem:[#allocation2 + $0x8] sm:$0xff]
          %v1771 = vld [vmem:[%s5] sm:$0x1]
          %v1773 = vlaneseq
          %v1774 = vshrl.u32 %v1773, 7
          %v1775 = vsub.s32 0, %v1774
          %v1776 = vrot.slane %v1771, %v1775
          %v1778 = vadd.f32 %v1769, %v1776
          %v1779 = vadd.f32 %v1770, %v1776
          %v1780 = vadd.f32 %v1778, %v1767
          %v1781 = vadd.f32 %v1779, %v1768
          %v1782 = vld [vmem:[#allocation10] sm:$0x1]
          %v1783 = vld [vmem:[#allocation11] sm:$0x1]
          %v1784 = vsel %vm684, %v1780, 0.0
          %1785 = vadd.xlane.f32.xlu0 %v1784
          %v1786 = vpop.xlane.xlu0 %1785
          %v1787 = vsel %vm684, %v1781, 0.0
          %1788 = vadd.xlane.f32.xlu0 %v1787
          %v1789 = vpop.xlane.xlu0 %1788
          %v1790 = vrcp.pop 32.0
          %v1791 = vmul.f32 %v1786, %v1790
          %v1792 = vmul.f32 %v1789, %v1790
          %v1793 = vsub.f32 %v1780, %v1791
          %v1794 = vsub.f32 %v1781, %v1792
          %v1795 = vmul.f32 %v1793, %v1793
          %v1796 = vmul.f32 %v1794, %v1794
          %v1797 = vsel %vm684, %v1795, 0.0
          %1798 = vadd.xlane.f32.xlu0 %v1797
          %v1799 = vpop.xlane.xlu0 %1798
          %v1800 = vsel %vm684, %v1796, 0.0
          %1801 = vadd.xlane.f32.xlu0 %v1800
          %v1802 = vpop.xlane.xlu0 %1801
          %v1803 = vmul.f32 %v1799, %v1790
          %v1804 = vmul.f32 %v1802, %v1790
          %v1805 = vadd.f32 %v1803, 1e-05
          %v1806 = vadd.f32 %v1804, 1e-05
          %v1807 = vrsqrt.pop %v1805
          %v1808 = vrsqrt.pop %v1806
          %v1809 = vmul.f32 %v1793, %v1807
          %v1810 = vmul.f32 %v1794, %v1808
          %v1812 = vlaneseq
          %v1813 = vshrl.u32 %v1812, 7
          %v1814 = vsub.s32 0, %v1813
          %v1815 = vrot.slane %v1782, %v1814
          %v1817 = vmul.f32 %v1809, %v1815
          %v1818 = vmul.f32 %v1810, %v1815
          %v1820 = vlaneseq
          %v1821 = vshrl.u32 %v1820, 7
          %v1822 = vsub.s32 0, %v1821
          %v1823 = vrot.slane %v1783, %v1822
          %v1825 = vadd.f32 %v1817, %v1823
          %v1826 = vadd.f32 %v1818, %v1823
          %v1827 = vpack.c.bf16 %v1826, %v1825
          %v1828 = vld [vmem:[#allocation13] sm:$0xf]
          %v1829 = vld [vmem:[#allocation13 + $0x4] sm:$0xf]
          %v1830 = vld [vmem:[#allocation13 + $0x8] sm:$0xf]
          %v1831 = vld [vmem:[#allocation13 + $0xc] sm:$0xf]
          %v1832 = vld [vmem:[#allocation14] sm:$0x1]
          %v1834 = vlaneseq
          %v1835 = vshrl.u32 %v1834, 7
          %v1836 = vsub.s32 0, %v1835
          %v1837 = vrot.slane %v1832, %v1836
          %v1843 = vunpack.c.l.b16 %v1828
          %v1844 = vunpack.c.l.b16 %v1829
          %v1845 = vunpack.c.l.b16 %v1830
          %v1846 = vunpack.c.l.b16 %v1831
          %v1847 = vpack.c.b16 %v1844, %v1843
          %v1848 = vpack.c.b16 %v1846, %v1845
          %v1852 = vsel %vm684, %v1827, 0
          %1854 = vmatprep.subr.bf16.mxu0 0
          %1855 = vmatpush1.bf16.msra.mxu0 0
          %1856 = vmatprep.subr.bf16.mxu0 0
          %1857 = vmatpush1.bf16.msra.mxu0 0
          %1858 = vmatprep.subr.bf16.mxu0 0
          %1859 = vmatpush1.bf16.msra.mxu0 0
          %1860 = vmatprep.subr.bf16.mxu0 0
          %1861 = vmatpush1.bf16.msra.mxu0 0
          %1862 = vmatprep.subr.bf16.mxu0 0
          %1863 = vmatpush1.bf16.msra.mxu0 0
          %1864 = vmatprep.subr.bf16.mxu0 0
          %1865 = vmatpush1.bf16.msra.mxu0 0
          %1866 = vmatprep.subr.bf16.mxu0 0
          %1867 = vmatpush1.bf16.msra.mxu0 %v1848
          %1868 = vmatprep.subr.bf16.mxu0 0
          %1869 = vmatpush1.bf16.msra.mxu0 %v1847
          %1870 = vmatprep.subr.bf16.mxu0 0
          %1871 = vmatpush2.bf16.msra.mxu0 0
          %1872 = vmatprep.subr.bf16.mxu0 0
          %1873 = vmatpush2.bf16.msra.mxu0 0
          %1874 = vmatprep.subr.bf16.mxu0 0
          %1875 = vmatpush2.bf16.msra.mxu0 0
          %1876 = vmatprep.subr.bf16.mxu0 0
          %1877 = vmatpush2.bf16.msra.mxu0 0
          %1878 = vmatprep.subr.bf16.mxu0 0
          %1879 = vmatpush2.bf16.msra.mxu0 0
          %1880 = vmatprep.subr.bf16.mxu0 0
          %1881 = vmatpush2.bf16.msra.mxu0 0
          %1882 = vmatprep.subr.bf16.mxu0 0
          %1883 = vmatpush2.bf16.msra.mxu0 0
          %1884 = vmatprep.subr.bf16.mxu0 0
          %1885 = vmatpush2.bf16.msra.mxu0 0
          %1886 = vmatprep.mubr.bf16.mxu0 0
          %1887 = vmatmul.mubr.bf16.gmra.mxu0 %v1852
          %v1888 = vpop.f32.mrf.mxu0
          %v1889 = vadd.f32 %v1837, %v1888
          %v1890 = vpop.f32.mrf.mxu0
          %v1891 = vpop.f32.mrf.mxu0
          %v1892 = vadd.f32 %v1837, %v1891
          %v1893 = vpop.f32.mrf.mxu0
          %1894 = vdwg.mxu0
          %v1895 = vmax.f32 %v1889, 0.0
          %v1896 = vmax.f32 %v1892, 0.0
          %v1897 = vpack.c.bf16 %v1896, %v1895
          %v1898 = vld [vmem:[%s10] sm:$0xf]
          %v1899 = vld [vmem:[%s10 + $0x4] sm:$0xf]
          %v1900 = vld [vmem:[%s10 + $0x8] sm:$0xf]
          %v1901 = vld [vmem:[%s10 + $0xc] sm:$0xf]
          %v1902 = vld [vmem:[%s10 + $0x10] sm:$0xf]
          %v1903 = vld [vmem:[%s10 + $0x14] sm:$0xf]
          %v1904 = vld [vmem:[%s10 + $0x18] sm:$0xf]
          %v1905 = vld [vmem:[%s10 + $0x1c] sm:$0xf]
          %v1906 = vld [vmem:[%s11] sm:$0x1]
          %v1908 = vlaneseq
          %v1909 = vshrl.u32 %v1908, 7
          %v1910 = vsub.s32 0, %v1909
          %v1911 = vrot.slane %v1906, %v1910
          %v1921 = vunpack.c.l.b16 %v1898
          %v1922 = vunpack.c.l.b16 %v1899
          %v1923 = vunpack.c.l.b16 %v1900
          %v1924 = vunpack.c.l.b16 %v1901
          %v1925 = vunpack.c.l.b16 %v1902
          %v1926 = vunpack.c.l.b16 %v1903
          %v1927 = vunpack.c.l.b16 %v1904
          %v1928 = vunpack.c.l.b16 %v1905
          %v1929 = vpack.c.b16 %v1922, %v1921
          %v1930 = vpack.c.b16 %v1924, %v1923
          %v1931 = vpack.c.b16 %v1926, %v1925
          %v1932 = vpack.c.b16 %v1928, %v1927
          %vm1937 = vcmask 523264
          %v1939 = vsel %vm1937, %v1897, 0
          %1941 = vmatprep.subr.bf16.mxu0 0
          %1942 = vmatpush1.bf16.msra.mxu0 0
          %1943 = vmatprep.subr.bf16.mxu0 0
          %1944 = vmatpush1.bf16.msra.mxu0 0
          %1945 = vmatprep.subr.bf16.mxu0 0
          %1946 = vmatpush1.bf16.msra.mxu0 0
          %1947 = vmatprep.subr.bf16.mxu0 0
          %1948 = vmatpush1.bf16.msra.mxu0 0
          %1949 = vmatprep.subr.bf16.mxu0 0
          %1950 = vmatpush1.bf16.msra.mxu0 %v1932
          %1951 = vmatprep.subr.bf16.mxu0 0
          %1952 = vmatpush1.bf16.msra.mxu0 %v1931
          %1953 = vmatprep.subr.bf16.mxu0 0
          %1954 = vmatpush1.bf16.msra.mxu0 %v1930
          %1955 = vmatprep.subr.bf16.mxu0 0
          %1956 = vmatpush1.bf16.msra.mxu0 %v1929
          %1957 = vmatprep.subr.bf16.mxu0 0
          %1958 = vmatpush2.bf16.msra.mxu0 0
          %1959 = vmatprep.subr.bf16.mxu0 0
          %1960 = vmatpush2.bf16.msra.mxu0 0
          %1961 = vmatprep.subr.bf16.mxu0 0
          %1962 = vmatpush2.bf16.msra.mxu0 0
          %1963 = vmatprep.subr.bf16.mxu0 0
          %1964 = vmatpush2.bf16.msra.mxu0 0
          %1965 = vmatprep.subr.bf16.mxu0 0
          %1966 = vmatpush2.bf16.msra.mxu0 0
          %1967 = vmatprep.subr.bf16.mxu0 0
          %1968 = vmatpush2.bf16.msra.mxu0 0
          %1969 = vmatprep.subr.bf16.mxu0 0
          %1970 = vmatpush2.bf16.msra.mxu0 0
          %1971 = vmatprep.subr.bf16.mxu0 0
          %1972 = vmatpush2.bf16.msra.mxu0 0
          %1973 = vmatprep.mubr.bf16.mxu0 0
          %1974 = vmatmul.mubr.bf16.gmra.mxu0 %v1939
          %v1975 = vpop.f32.mrf.mxu0
          %v1976 = vadd.f32 %v1911, %v1975
          %v1977 = vpop.f32.mrf.mxu0
          %v1978 = vpop.f32.mrf.mxu0
          %v1979 = vadd.f32 %v1911, %v1978
          %v1980 = vpop.f32.mrf.mxu0
          %1981 = vdwg.mxu0
          %v1982 = vadd.f32 %v1976, %v1825
          %v1983 = vadd.f32 %v1979, %v1826
          %v1984 = vld [vmem:[%s12] sm:$0x1]
          %v1985 = vld [vmem:[%s13] sm:$0x1]
          %v1986 = vsel %vm684, %v1982, 0.0
          %1987 = vadd.xlane.f32.xlu0 %v1986
          %v1988 = vpop.xlane.xlu0 %1987
          %v1989 = vsel %vm684, %v1983, 0.0
          %1990 = vadd.xlane.f32.xlu0 %v1989
          %v1991 = vpop.xlane.xlu0 %1990
          %v1992 = vmul.f32 %v1988, %v1790
          %v1993 = vmul.f32 %v1991, %v1790
          %v1994 = vsub.f32 %v1982, %v1992
          %v1995 = vsub.f32 %v1983, %v1993
          %v1996 = vmul.f32 %v1994, %v1994
          %v1997 = vmul.f32 %v1995, %v1995
          %v1998 = vsel %vm684, %v1996, 0.0
          %1999 = vadd.xlane.f32.xlu0 %v1998
          %v2000 = vpop.xlane.xlu0 %1999
          %v2001 = vsel %vm684, %v1997, 0.0
          %2002 = vadd.xlane.f32.xlu0 %v2001
          %v2003 = vpop.xlane.xlu0 %2002
          %v2004 = vmul.f32 %v2000, %v1790
          %v2005 = vmul.f32 %v2003, %v1790
          %v2006 = vadd.f32 %v2004, 1e-05
          %v2007 = vadd.f32 %v2005, 1e-05
          %v2008 = vrsqrt.pop %v2006
          %v2009 = vrsqrt.pop %v2007
          %v2010 = vmul.f32 %v1994, %v2008
          %v2011 = vmul.f32 %v1995, %v2009
          %v2013 = vlaneseq
          %v2014 = vshrl.u32 %v2013, 7
          %v2015 = vsub.s32 0, %v2014
          %v2016 = vrot.slane %v1984, %v2015
          %v2018 = vmul.f32 %v2010, %v2016
          %v2019 = vmul.f32 %v2011, %v2016
          %v2021 = vlaneseq
          %v2022 = vshrl.u32 %v2021, 7
          %v2023 = vsub.s32 0, %v2022
          %v2024 = vrot.slane %v1985, %v2023
          %v2026 = vadd.f32 %v2018, %v2024
          %v2027 = vadd.f32 %v2019, %v2024
          %2028 = vst.msk [vmem:[%s614] sm:$0xff] %vm684, %v2026
          %2029 = vst.msk [vmem:[%s614 + $0x8] sm:$0xff] %vm684, %v2027
        $region108: #{tpu_custom_call.1} parent=75 // pred_fallthru
          _
        %s2030 = sand.u32 %s373, 1
        %s2031 = scalar_lea.sflag [#allocation7], %s2030
        %s2032 = sand.u32 %s373, 1
        %s2033 = smul.addr %s2032, 16
        %s2034 = scalar_lea.vmem [#allocation16], %s2033
        // Predicated region
        $region109: #{tpu_custom_call.1} parent=75 // pred_check
          %p2035 = pneg %p383
        $region110: #{tpu_custom_call.1} parent=75 // pred_check_branch
          %2037 = sbr.rel (%p2035) target = $region112
        $region111: #{tpu_custom_call.1} parent=75 // pred_region
          %s2038 = smul.u32 2, %s38
          %s2040 = ssub.s32 256, 256
          %2041 = vsyncadd %s2031, %s2040
          %s2042 = smul.addr %s2038, 128
          %s2043 = scalar_lea.hbm %s14, %s2042
          %s2044 = sshll.u32 %s2034, 4
          %s2045 = int_to_ptr.vmem [resolvable:$true] %s2044
          %2050 = dma.vmem_to_hbm [thread:$0]  %s2045, 256, %s2043, %s2031, 128, 128, 8
        $region112: #{tpu_custom_call.1} parent=75 // pred_fallthru
          _
      $region76: #{tpu_custom_call.1} parent=5 // pred_fallthru
        _
      %p2051 = scmp.le.s32.totalorder 2, %s29
      // Predicated region
      $region113: #{tpu_custom_call.1} parent=5 // pred_check
        %p2052 = pneg %p2051
      $region114: #{tpu_custom_call.1} parent=5 // pred_check_branch
        %2054 = sbr.rel (%p2052) target = $region116
      $region115: #{tpu_custom_call.1} parent=5 // pred_region
        %s2055 = ssub.s32 %s29, 2
        // Predicated region
        $region117: #{tpu_custom_call.1} parent=115 // pred_check
          %p2056 = pneg %p389
        $region118: #{tpu_custom_call.1} parent=115 // pred_check_branch
          %2058 = sbr.rel (%p2056) target = $region120
        $region119: #{tpu_custom_call.1} parent=115 // pred_region
          %s2059 = sand.u32 %s374, 1
          %s2060 = scalar_lea.sflag [#allocation7], %s2059
          %s2061 = sand.u32 %s374, 1
          %s2062 = smul.addr %s2061, 16
          %s2063 = scalar_lea.vmem [#allocation16], %s2062
          %2064 = dma.done %s2060, 256
        $region120: #{tpu_custom_call.1} parent=115 // pred_fallthru
          _
      $region116: #{tpu_custom_call.1} parent=5 // pred_fallthru
        _
    $region6: #{tpu_custom_call.1} parent=1 // loop_footer
      %s33 = sadd.s32 1, %s29
    $region7: #{tpu_custom_call.1} parent=1 // loop_footer_branch
      %28 = sbr.rel target = $region3
    $region8: #{tpu_custom_call.1} parent=1 // loop_exit
      _
    %2065 = vsyncpa [#allocation6], 1
    %s2066 = scalar_lea.sflag [#allocation6], 1
    %2067 = vsyncpa %s2066, 1
    %2068 = vsyncpa [#allocation9], 1
    %2069 = vsyncpa [#allocation12], 1
    %2070 = vsyncpa [#allocation15], 1
    %2071 = vsyncpa [#allocation7], 1
    %s2072 = scalar_lea.sflag [#allocation7], 1
    %2073 = vsyncpa %s2072, 1

</llo_original>
